<compile_context>
chip_gen: v5e
topology: v5e:2x2
jax: 0.10.0
libtpu: 0.0.40
codegen_flags: <defaults>
</compile_context>

<pallas_src>
import functools

import jax
import jax.numpy as jnp
from jax.experimental import pallas as pl
from jax.experimental.pallas import tpu as pltpu


# ----------------------------- in-kernel building blocks -----------------------------

def _softmax_rows(s):
    s = s - jnp.max(s, axis=-1, keepdims=True)
    e = jnp.exp(s)
    return e * pl.reciprocal(jnp.sum(e, axis=-1, keepdims=True), approx=True)


def _mha(q, k, v, heads, dim_head, causal):
    """All-heads attention on 2-D operands, no transposes.

    q: (Nq, heads*dim_head), k/v: (Nk, heads*dim_head) -> (Nq, heads*dim_head).
    Static Python loop over heads (lane slices); k contraction via dot_general so
    no explicit transpose is materialized."""
    scale = dim_head ** (-0.5)
    neg = -jnp.finfo(jnp.float32).max
    outs = []
    for h in range(heads):
        lo, hi = h * dim_head, (h + 1) * dim_head
        qh = q[:, lo:hi] * scale
        kh = k[:, lo:hi]
        vh = v[:, lo:hi]
        sim = jax.lax.dot_general(qh, kh, (((1,), (1,)), ((), ())),
                                  preferred_element_type=jnp.float32)   # (Nq, Nk)
        if causal:
            i = jax.lax.broadcasted_iota(jnp.int32, sim.shape, 0)
            j = jax.lax.broadcasted_iota(jnp.int32, sim.shape, 1)
            sim = jnp.where(j > i, neg, sim)
        attn = _softmax_rows(sim)
        outs.append(jnp.dot(attn, vh, preferred_element_type=jnp.float32))
    return jnp.concatenate(outs, axis=-1)


def _t5_ln(x, w, eps):
    # T5 layernorm: no mean subtraction, no bias.
    var = jnp.mean(x * x, axis=-1, keepdims=True)
    return w * (x * jax.lax.rsqrt(var + eps))


# ----------------------------- fused whole-model kernel -----------------------------

def _t5_kernel(src_ref, tgt_ref, embed_ref,
               enc_wqkv_ref, enc_wo_ref, enc_wi_ref, enc_wfo_ref, enc_ln_ref,
               dec_wqkv_ref, dec_wo_ref, dec_cwq_ref, dec_cwkv_ref, dec_cwo_ref,
               dec_wi_ref, dec_wfo_ref, dec_ln_ref, lm_ref,
               logits_ref, *,
               enc_heads, enc_dim_head, dec_heads, dec_dim_head,
               n_enc, n_dec, eps):
    table = embed_ref[...]                                   # (V, D), resident in VMEM
    vocab = table.shape[0]
    inner_e = enc_heads * enc_dim_head
    inner_d = dec_heads * dec_dim_head

    def embed(tok_col):
        # single-shot gather as a one-hot MXU matmul (exact: rows are 0/1 selectors)
        n = tok_col.shape[0]
        onehot = jnp.where(
            tok_col == jax.lax.broadcasted_iota(jnp.int32, (n, vocab), 1), 1.0, 0.0)
        return jnp.dot(onehot, table, preferred_element_type=jnp.float32)

    # ---------------- encoder (per-batch slice, kept in vregs) ----------------
    x = embed(src_ref[...])                                  # (Ns, D)
    for l in range(n_enc):
        qkv = jnp.dot(x, enc_wqkv_ref[l], preferred_element_type=jnp.float32)
        a = _mha(qkv[:, :inner_e], qkv[:, inner_e:2 * inner_e], qkv[:, 2 * inner_e:],
                 enc_heads, enc_dim_head, causal=False)
        x = jnp.dot(a, enc_wo_ref[l], preferred_element_type=jnp.float32) + x
        h = jnp.maximum(jnp.dot(x, enc_wi_ref[l], preferred_element_type=jnp.float32), 0.0)
        x = jnp.dot(h, enc_wfo_ref[l], preferred_element_type=jnp.float32) + x
    ctx = _t5_ln(x, enc_ln_ref[...], eps)                    # encoder output / context

    # ---------------- decoder ----------------
    y = embed(tgt_ref[...])                                  # (Nt, D)
    for l in range(n_dec):
        # causal self-attention (fused QKV)
        qkv = jnp.dot(y, dec_wqkv_ref[l], preferred_element_type=jnp.float32)
        a = _mha(qkv[:, :inner_d], qkv[:, inner_d:2 * inner_d], qkv[:, 2 * inner_d:],
                 dec_heads, dec_dim_head, causal=True)
        y = jnp.dot(a, dec_wo_ref[l], preferred_element_type=jnp.float32) + y

        # cross-attention (fused K|V from context)
        cq = jnp.dot(y, dec_cwq_ref[l], preferred_element_type=jnp.float32)
        ckv = jnp.dot(ctx, dec_cwkv_ref[l], preferred_element_type=jnp.float32)
        ca = _mha(cq, ckv[:, :inner_d], ckv[:, inner_d:],
                  dec_heads, dec_dim_head, causal=False)
        y = jnp.dot(ca, dec_cwo_ref[l], preferred_element_type=jnp.float32) + y

        # feed-forward (ReLU + residual fused); dropout p=0 / eval -> identity
        h = jnp.maximum(jnp.dot(y, dec_wi_ref[l], preferred_element_type=jnp.float32), 0.0)
        y = jnp.dot(h, dec_wfo_ref[l], preferred_element_type=jnp.float32) + y
    y = _t5_ln(y, dec_ln_ref[...], eps)

    logits_ref[...] = jnp.dot(y, lm_ref[...], preferred_element_type=jnp.float32)


# ----------------------------- wrapper -----------------------------

def t5_forward(src, tgt, params, cfg):
    B, Ns = src.shape
    _, Nt = tgt.shape
    V = cfg["vocab_size"]

    # tokens as column vectors so the one-hot iota compare is lane-wise in-kernel
    src_col = src.reshape(B * Ns, 1).astype(jnp.int32)
    tgt_col = tgt.reshape(B * Nt, 1).astype(jnp.int32)

    enc = params["encoder"]
    dec = params["decoder"]
    weights = [params["embed"],
               enc["wqkv"], enc["wo"], enc["wi"], enc["wfo"], enc["ln_w"],
               dec["wqkv"], dec["wo"], dec["cwq"], dec["cwkv"], dec["cwo"],
               dec["wi"], dec["wfo"], dec["ln_w"], params["lm_head"]]

    def resident(arr):
        zeros = (0,) * arr.ndim
        return pl.BlockSpec(arr.shape, lambda b: zeros)       # same block every step

    kernel = functools.partial(
        _t5_kernel,
        enc_heads=cfg["enc_heads"], enc_dim_head=cfg["enc_dim_head"],
        dec_heads=cfg["dec_heads"], dec_dim_head=cfg["dec_dim_head"],
        n_enc=cfg["num_encoder_layers"], n_dec=cfg["num_decoder_layers"],
        eps=1e-6)

    logits = pl.pallas_call(
        kernel,
        out_shape=jax.ShapeDtypeStruct((B * Nt, V), jnp.float32),
        grid=(B,),
        in_specs=[pl.BlockSpec((Ns, 1), lambda b: (b, 0)),
                  pl.BlockSpec((Nt, 1), lambda b: (b, 0))]
                 + [resident(w) for w in weights],
        out_specs=pl.BlockSpec((Nt, V), lambda b: (b, 0)),
        compiler_params=pltpu.CompilerParams(
            dimension_semantics=("parallel",)),                # batch across TCs on v7x
    )(src_col, tgt_col, *weights)
    return logits.reshape(B, Nt, V)


# ----------------------------- deterministic init -----------------------------

def init_params(key, cfg):
    D = cfg["dim"]
    V = cfg["vocab_size"]
    Le = cfg["num_encoder_layers"]
    Ld = cfg["num_decoder_layers"]
    inner_e = cfg["enc_heads"] * cfg["enc_dim_head"]
    inner_d = cfg["dec_heads"] * cfg["dec_dim_head"]
    dff_e = int(D * cfg["enc_mlp_mult"])
    dff_d = int(D * cfg["dec_mlp_mult"])

    keys = iter(jax.random.split(key, 64))

    def lin(*shape):
        din = shape[-2]
        return jax.random.normal(next(keys), shape, jnp.float32) / jnp.sqrt(din)

    # tie_token_emb=True: encoder embedding weight <- decoder embedding weight
    embed = jax.random.normal(next(keys), (V, D), jnp.float32) * 0.02

    encoder = {
        "wqkv": lin(Le, D, 3 * inner_e),     # fused Wq|Wk|Wv
        "wo": lin(Le, inner_e, D),
        "wi": lin(Le, D, dff_e),
        "wfo": lin(Le, dff_e, D),
        "ln_w": jnp.ones((1, D), jnp.float32),
    }
    decoder = {
        "wqkv": lin(Ld, D, 3 * inner_d),     # fused self-attn Wq|Wk|Wv
        "wo": lin(Ld, inner_d, D),
        "cwq": lin(Ld, D, inner_d),
        "cwkv": lin(Ld, D, 2 * inner_d),     # fused cross-attn Wk|Wv
        "cwo": lin(Ld, inner_d, D),
        "wi": lin(Ld, D, dff_d),
        "wfo": lin(Ld, dff_d, D),
        "ln_w": jnp.ones((1, D), jnp.float32),
    }
    return {"embed": embed, "encoder": encoder, "decoder": decoder,
            "lm_head": lin(D, V)}


# ----------------------------- main -----------------------------

if __name__ == "__main__":
    cfg = dict(
        dim=32,
        enc_n_positions=64,      # unused after weight tying (reference semantics)
        num_encoder_layers=2,
        enc_heads=2,
        enc_dim_head=16,
        enc_mlp_mult=4,
        vocab_size=64,
        num_decoder_layers=2,
        dec_heads=2,
        dec_dim_head=16,
        dec_mlp_mult=4,
    )
    key = jax.random.PRNGKey(0)
    kp, ks, kt = jax.random.split(key, 3)
    params = init_params(kp, cfg)

    B, Lsrc, Ltgt = 2, 8, 8
    src = jax.random.randint(ks, (B, Lsrc), 0, cfg["vocab_size"], dtype=jnp.int32)
    tgt = jax.random.randint(kt, (B, Ltgt), 0, cfg["vocab_size"], dtype=jnp.int32)

    # NOTE: in the reference, `self.shared(src)` is computed and immediately discarded;
    # it has no effect on the output, so it is skipped here.
    fwd = jax.jit(functools.partial(t5_forward, cfg=cfg))
    logits = fwd(src, tgt, params)
    jax.block_until_ready(logits)
    assert logits.shape == (B, Ltgt, cfg["vocab_size"])
    assert logits.dtype == jnp.float32
    print("KERNEL_OK")
</pallas_src>

<mosaic_0001>
module attributes {stable_mosaic.version = 11 : i64} {
  func.func @_t5_kernel(%arg0: i32, %arg1: memref<8x1xi32, #tpu.memory_space<vmem>>, %arg2: memref<8x1xi32, #tpu.memory_space<vmem>>, %arg3: memref<64x32xf32, #tpu.memory_space<vmem>>, %arg4: memref<2x32x96xf32, #tpu.memory_space<vmem>>, %arg5: memref<2x32x32xf32, #tpu.memory_space<vmem>>, %arg6: memref<2x32x128xf32, #tpu.memory_space<vmem>>, %arg7: memref<2x128x32xf32, #tpu.memory_space<vmem>>, %arg8: memref<1x32xf32, #tpu.memory_space<vmem>>, %arg9: memref<2x32x96xf32, #tpu.memory_space<vmem>>, %arg10: memref<2x32x32xf32, #tpu.memory_space<vmem>>, %arg11: memref<2x32x32xf32, #tpu.memory_space<vmem>>, %arg12: memref<2x32x64xf32, #tpu.memory_space<vmem>>, %arg13: memref<2x32x32xf32, #tpu.memory_space<vmem>>, %arg14: memref<2x32x128xf32, #tpu.memory_space<vmem>>, %arg15: memref<2x128x32xf32, #tpu.memory_space<vmem>>, %arg16: memref<1x32xf32, #tpu.memory_space<vmem>>, %arg17: memref<32x64xf32, #tpu.memory_space<vmem>>, %arg18: memref<8x64xf32, #tpu.memory_space<vmem>>) attributes {dimension_semantics = [#tpu.dimension_semantics<parallel>], iteration_bounds = array<i64: 2>, scalar_prefetch = 0 : i64, scratch_operands = 0 : i64, tpu.core_type = #tpu.core_type<tc>, window_params = [{transform_indices = @transform_0, window_bounds = array<i64: 8, 1>}, {transform_indices = @transform_1, window_bounds = array<i64: 8, 1>}, {pipeline_mode = #tpu.pipeline_mode<synchronous>, transform_indices = @transform_2, window_bounds = array<i64: 64, 32>}, {pipeline_mode = #tpu.pipeline_mode<synchronous>, transform_indices = @transform_3, window_bounds = array<i64: 2, 32, 96>}, {pipeline_mode = #tpu.pipeline_mode<synchronous>, transform_indices = @transform_4, window_bounds = array<i64: 2, 32, 32>}, {pipeline_mode = #tpu.pipeline_mode<synchronous>, transform_indices = @transform_5, window_bounds = array<i64: 2, 32, 128>}, {pipeline_mode = #tpu.pipeline_mode<synchronous>, transform_indices = @transform_6, window_bounds = array<i64: 2, 128, 32>}, {pipeline_mode = #tpu.pipeline_mode<synchronous>, transform_indices = @transform_7, window_bounds = array<i64: 1, 32>}, {pipeline_mode = #tpu.pipeline_mode<synchronous>, transform_indices = @transform_8, window_bounds = array<i64: 2, 32, 96>}, {pipeline_mode = #tpu.pipeline_mode<synchronous>, transform_indices = @transform_9, window_bounds = array<i64: 2, 32, 32>}, {pipeline_mode = #tpu.pipeline_mode<synchronous>, transform_indices = @transform_10, window_bounds = array<i64: 2, 32, 32>}, {pipeline_mode = #tpu.pipeline_mode<synchronous>, transform_indices = @transform_11, window_bounds = array<i64: 2, 32, 64>}, {pipeline_mode = #tpu.pipeline_mode<synchronous>, transform_indices = @transform_12, window_bounds = array<i64: 2, 32, 32>}, {pipeline_mode = #tpu.pipeline_mode<synchronous>, transform_indices = @transform_13, window_bounds = array<i64: 2, 32, 128>}, {pipeline_mode = #tpu.pipeline_mode<synchronous>, transform_indices = @transform_14, window_bounds = array<i64: 2, 128, 32>}, {pipeline_mode = #tpu.pipeline_mode<synchronous>, transform_indices = @transform_15, window_bounds = array<i64: 1, 32>}, {pipeline_mode = #tpu.pipeline_mode<synchronous>, transform_indices = @transform_16, window_bounds = array<i64: 32, 64>}, {transform_indices = @transform_17, window_bounds = array<i64: 8, 64>}]} {
    %c0 = arith.constant 0 : index
    %c0_0 = arith.constant 0 : index
    %0 = vector.load %arg3[%c0, %c0_0] : memref<64x32xf32, #tpu.memory_space<vmem>>, vector<64x32xf32>
    %c0_1 = arith.constant 0 : index
    %c0_2 = arith.constant 0 : index
    %1 = vector.load %arg1[%c0_1, %c0_2] : memref<8x1xi32, #tpu.memory_space<vmem>>, vector<8x1xi32>
    %2 = tpu.iota {dimensions = array<i32: 1>} : vector<8x64xi32>
    %3 = vector.broadcast %1 : vector<8x1xi32> to vector<8x64xi32>
    %4 = arith.cmpi eq, %3, %2 : vector<8x64xi32>
    %cst = arith.constant 1.000000e+00 : f32
    %cst_3 = arith.constant 0.000000e+00 : f32
    %5 = vector.broadcast %cst : f32 to vector<8x64xf32>
    %6 = vector.broadcast %cst_3 : f32 to vector<8x64xf32>
    %7 = arith.select %4, %5, %6 : vector<8x64xi1>, vector<8x64xf32>
    %cst_4 = arith.constant dense<0.000000e+00> : vector<8x32xf32>
    %8 = tpu.matmul %7, %0, %cst_4 {dimension_numbers = #tpu.dot_dimension_numbers<[1], [0], [0], [1], [0, 0, 1, 1], [], []>} : vector<8x64xf32>, vector<64x32xf32>, vector<8x32xf32> -> vector<8x32xf32>
    %c0_5 = arith.constant 0 : index
    %c0_6 = arith.constant 0 : index
    %c0_7 = arith.constant 0 : index
    %9 = vector.load %arg4[%c0_5, %c0_6, %c0_7] : memref<2x32x96xf32, #tpu.memory_space<vmem>>, vector<1x32x96xf32>
    %10 = vector.shape_cast %9 : vector<1x32x96xf32> to vector<32x96xf32>
    %cst_8 = arith.constant dense<0.000000e+00> : vector<8x96xf32>
    %11 = tpu.matmul %8, %10, %cst_8 {dimension_numbers = #tpu.dot_dimension_numbers<[1], [0], [0], [1], [0, 0, 1, 1], [], []>} : vector<8x32xf32>, vector<32x96xf32>, vector<8x96xf32> -> vector<8x96xf32>
    %12 = vector.extract_strided_slice %11 {offsets = [0, 0], sizes = [8, 32], strides = [1, 1]} : vector<8x96xf32> to vector<8x32xf32>
    %13 = vector.extract_strided_slice %11 {offsets = [0, 32], sizes = [8, 32], strides = [1, 1]} : vector<8x96xf32> to vector<8x32xf32>
    %14 = vector.extract_strided_slice %11 {offsets = [0, 64], sizes = [8, 32], strides = [1, 1]} : vector<8x96xf32> to vector<8x32xf32>
    %15 = vector.extract_strided_slice %12 {offsets = [0, 0], sizes = [8, 16], strides = [1, 1]} : vector<8x32xf32> to vector<8x16xf32>
    %cst_9 = arith.constant 2.500000e-01 : f32
    %16 = vector.broadcast %cst_9 : f32 to vector<8x16xf32>
    %17 = arith.mulf %15, %16 : vector<8x16xf32>
    %18 = vector.extract_strided_slice %13 {offsets = [0, 0], sizes = [8, 16], strides = [1, 1]} : vector<8x32xf32> to vector<8x16xf32>
    %19 = vector.extract_strided_slice %14 {offsets = [0, 0], sizes = [8, 16], strides = [1, 1]} : vector<8x32xf32> to vector<8x16xf32>
    %cst_10 = arith.constant dense<0.000000e+00> : vector<8x8xf32>
    %20 = tpu.matmul %17, %18, %cst_10 {dimension_numbers = #tpu.dot_dimension_numbers<[1], [1], [0], [0], [0, 0, 1, 0], [], []>} : vector<8x16xf32>, vector<8x16xf32>, vector<8x8xf32> -> vector<8x8xf32>
    %cst_11 = arith.constant dense<0xFF800000> : vector<8xf32>
    %21 = vector.multi_reduction <maximumf>, %20, %cst_11 [1] : vector<8x8xf32> to vector<8xf32>
    %22 = vector.shape_cast %21 : vector<8xf32> to vector<8x1xf32>
    %23 = vector.broadcast %22 : vector<8x1xf32> to vector<8x8xf32>
    %24 = arith.subf %20, %23 : vector<8x8xf32>
    %25 = math.exp %24 : vector<8x8xf32>
    %cst_12 = arith.constant dense<0.000000e+00> : vector<8xf32>
    %26 = vector.multi_reduction <add>, %25, %cst_12 [1] : vector<8x8xf32> to vector<8xf32>
    %27 = vector.shape_cast %26 : vector<8xf32> to vector<8x1xf32>
    %28 = tpu.reciprocal %27 {approx = true} : vector<8x1xf32> -> vector<8x1xf32>
    %29 = vector.broadcast %28 : vector<8x1xf32> to vector<8x8xf32>
    %30 = arith.mulf %25, %29 : vector<8x8xf32>
    %cst_13 = arith.constant dense<0.000000e+00> : vector<8x16xf32>
    %31 = tpu.matmul %30, %19, %cst_13 {dimension_numbers = #tpu.dot_dimension_numbers<[1], [0], [0], [1], [0, 0, 1, 1], [], []>} : vector<8x8xf32>, vector<8x16xf32>, vector<8x16xf32> -> vector<8x16xf32>
    %32 = vector.extract_strided_slice %12 {offsets = [0, 16], sizes = [8, 16], strides = [1, 1]} : vector<8x32xf32> to vector<8x16xf32>
    %cst_14 = arith.constant 2.500000e-01 : f32
    %33 = vector.broadcast %cst_14 : f32 to vector<8x16xf32>
    %34 = arith.mulf %32, %33 : vector<8x16xf32>
    %35 = vector.extract_strided_slice %13 {offsets = [0, 16], sizes = [8, 16], strides = [1, 1]} : vector<8x32xf32> to vector<8x16xf32>
    %36 = vector.extract_strided_slice %14 {offsets = [0, 16], sizes = [8, 16], strides = [1, 1]} : vector<8x32xf32> to vector<8x16xf32>
    %cst_15 = arith.constant dense<0.000000e+00> : vector<8x8xf32>
    %37 = tpu.matmul %34, %35, %cst_15 {dimension_numbers = #tpu.dot_dimension_numbers<[1], [1], [0], [0], [0, 0, 1, 0], [], []>} : vector<8x16xf32>, vector<8x16xf32>, vector<8x8xf32> -> vector<8x8xf32>
    %cst_16 = arith.constant dense<0xFF800000> : vector<8xf32>
    %38 = vector.multi_reduction <maximumf>, %37, %cst_16 [1] : vector<8x8xf32> to vector<8xf32>
    %39 = vector.shape_cast %38 : vector<8xf32> to vector<8x1xf32>
    %40 = vector.broadcast %39 : vector<8x1xf32> to vector<8x8xf32>
    %41 = arith.subf %37, %40 : vector<8x8xf32>
    %42 = math.exp %41 : vector<8x8xf32>
    %cst_17 = arith.constant dense<0.000000e+00> : vector<8xf32>
    %43 = vector.multi_reduction <add>, %42, %cst_17 [1] : vector<8x8xf32> to vector<8xf32>
    %44 = vector.shape_cast %43 : vector<8xf32> to vector<8x1xf32>
    %45 = tpu.reciprocal %44 {approx = true} : vector<8x1xf32> -> vector<8x1xf32>
    %46 = vector.broadcast %45 : vector<8x1xf32> to vector<8x8xf32>
    %47 = arith.mulf %42, %46 : vector<8x8xf32>
    %cst_18 = arith.constant dense<0.000000e+00> : vector<8x16xf32>
    %48 = tpu.matmul %47, %36, %cst_18 {dimension_numbers = #tpu.dot_dimension_numbers<[1], [0], [0], [1], [0, 0, 1, 1], [], []>} : vector<8x8xf32>, vector<8x16xf32>, vector<8x16xf32> -> vector<8x16xf32>
    %49 = tpu.concatenate %31, %48 in 1 : vector<8x16xf32>, vector<8x16xf32> -> vector<8x32xf32>
    %c0_19 = arith.constant 0 : index
    %c0_20 = arith.constant 0 : index
    %c0_21 = arith.constant 0 : index
    %50 = vector.load %arg5[%c0_19, %c0_20, %c0_21] : memref<2x32x32xf32, #tpu.memory_space<vmem>>, vector<1x32x32xf32>
    %51 = vector.shape_cast %50 : vector<1x32x32xf32> to vector<32x32xf32>
    %cst_22 = arith.constant dense<0.000000e+00> : vector<8x32xf32>
    %52 = tpu.matmul %49, %51, %cst_22 {dimension_numbers = #tpu.dot_dimension_numbers<[1], [0], [0], [1], [0, 0, 1, 1], [], []>} : vector<8x32xf32>, vector<32x32xf32>, vector<8x32xf32> -> vector<8x32xf32>
    %53 = arith.addf %52, %8 : vector<8x32xf32>
    %c0_23 = arith.constant 0 : index
    %c0_24 = arith.constant 0 : index
    %c0_25 = arith.constant 0 : index
    %54 = vector.load %arg6[%c0_23, %c0_24, %c0_25] : memref<2x32x128xf32, #tpu.memory_space<vmem>>, vector<1x32x128xf32>
    %55 = vector.shape_cast %54 : vector<1x32x128xf32> to vector<32x128xf32>
    %cst_26 = arith.constant dense<0.000000e+00> : vector<8x128xf32>
    %56 = tpu.matmul %53, %55, %cst_26 {dimension_numbers = #tpu.dot_dimension_numbers<[1], [0], [0], [1], [0, 0, 1, 1], [], []>} : vector<8x32xf32>, vector<32x128xf32>, vector<8x128xf32> -> vector<8x128xf32>
    %cst_27 = arith.constant 0.000000e+00 : f32
    %57 = vector.broadcast %cst_27 : f32 to vector<8x128xf32>
    %58 = arith.maximumf %56, %57 : vector<8x128xf32>
    %c0_28 = arith.constant 0 : index
    %c0_29 = arith.constant 0 : index
    %c0_30 = arith.constant 0 : index
    %59 = vector.load %arg7[%c0_28, %c0_29, %c0_30] : memref<2x128x32xf32, #tpu.memory_space<vmem>>, vector<1x128x32xf32>
    %60 = vector.shape_cast %59 : vector<1x128x32xf32> to vector<128x32xf32>
    %cst_31 = arith.constant dense<0.000000e+00> : vector<8x32xf32>
    %61 = tpu.matmul %58, %60, %cst_31 {dimension_numbers = #tpu.dot_dimension_numbers<[1], [0], [0], [1], [0, 0, 1, 1], [], []>} : vector<8x128xf32>, vector<128x32xf32>, vector<8x32xf32> -> vector<8x32xf32>
    %62 = arith.addf %61, %53 : vector<8x32xf32>
    %c1 = arith.constant 1 : index
    %c0_32 = arith.constant 0 : index
    %c0_33 = arith.constant 0 : index
    %63 = vector.load %arg4[%c1, %c0_32, %c0_33] : memref<2x32x96xf32, #tpu.memory_space<vmem>>, vector<1x32x96xf32>
    %64 = vector.shape_cast %63 : vector<1x32x96xf32> to vector<32x96xf32>
    %cst_34 = arith.constant dense<0.000000e+00> : vector<8x96xf32>
    %65 = tpu.matmul %62, %64, %cst_34 {dimension_numbers = #tpu.dot_dimension_numbers<[1], [0], [0], [1], [0, 0, 1, 1], [], []>} : vector<8x32xf32>, vector<32x96xf32>, vector<8x96xf32> -> vector<8x96xf32>
    %66 = vector.extract_strided_slice %65 {offsets = [0, 0], sizes = [8, 32], strides = [1, 1]} : vector<8x96xf32> to vector<8x32xf32>
    %67 = vector.extract_strided_slice %65 {offsets = [0, 32], sizes = [8, 32], strides = [1, 1]} : vector<8x96xf32> to vector<8x32xf32>
    %68 = vector.extract_strided_slice %65 {offsets = [0, 64], sizes = [8, 32], strides = [1, 1]} : vector<8x96xf32> to vector<8x32xf32>
    %69 = vector.extract_strided_slice %66 {offsets = [0, 0], sizes = [8, 16], strides = [1, 1]} : vector<8x32xf32> to vector<8x16xf32>
    %cst_35 = arith.constant 2.500000e-01 : f32
    %70 = vector.broadcast %cst_35 : f32 to vector<8x16xf32>
    %71 = arith.mulf %69, %70 : vector<8x16xf32>
    %72 = vector.extract_strided_slice %67 {offsets = [0, 0], sizes = [8, 16], strides = [1, 1]} : vector<8x32xf32> to vector<8x16xf32>
    %73 = vector.extract_strided_slice %68 {offsets = [0, 0], sizes = [8, 16], strides = [1, 1]} : vector<8x32xf32> to vector<8x16xf32>
    %cst_36 = arith.constant dense<0.000000e+00> : vector<8x8xf32>
    %74 = tpu.matmul %71, %72, %cst_36 {dimension_numbers = #tpu.dot_dimension_numbers<[1], [1], [0], [0], [0, 0, 1, 0], [], []>} : vector<8x16xf32>, vector<8x16xf32>, vector<8x8xf32> -> vector<8x8xf32>
    %cst_37 = arith.constant dense<0xFF800000> : vector<8xf32>
    %75 = vector.multi_reduction <maximumf>, %74, %cst_37 [1] : vector<8x8xf32> to vector<8xf32>
    %76 = vector.shape_cast %75 : vector<8xf32> to vector<8x1xf32>
    %77 = vector.broadcast %76 : vector<8x1xf32> to vector<8x8xf32>
    %78 = arith.subf %74, %77 : vector<8x8xf32>
    %79 = math.exp %78 : vector<8x8xf32>
    %cst_38 = arith.constant dense<0.000000e+00> : vector<8xf32>
    %80 = vector.multi_reduction <add>, %79, %cst_38 [1] : vector<8x8xf32> to vector<8xf32>
    %81 = vector.shape_cast %80 : vector<8xf32> to vector<8x1xf32>
    %82 = tpu.reciprocal %81 {approx = true} : vector<8x1xf32> -> vector<8x1xf32>
    %83 = vector.broadcast %82 : vector<8x1xf32> to vector<8x8xf32>
    %84 = arith.mulf %79, %83 : vector<8x8xf32>
    %cst_39 = arith.constant dense<0.000000e+00> : vector<8x16xf32>
    %85 = tpu.matmul %84, %73, %cst_39 {dimension_numbers = #tpu.dot_dimension_numbers<[1], [0], [0], [1], [0, 0, 1, 1], [], []>} : vector<8x8xf32>, vector<8x16xf32>, vector<8x16xf32> -> vector<8x16xf32>
    %86 = vector.extract_strided_slice %66 {offsets = [0, 16], sizes = [8, 16], strides = [1, 1]} : vector<8x32xf32> to vector<8x16xf32>
    %cst_40 = arith.constant 2.500000e-01 : f32
    %87 = vector.broadcast %cst_40 : f32 to vector<8x16xf32>
    %88 = arith.mulf %86, %87 : vector<8x16xf32>
    %89 = vector.extract_strided_slice %67 {offsets = [0, 16], sizes = [8, 16], strides = [1, 1]} : vector<8x32xf32> to vector<8x16xf32>
    %90 = vector.extract_strided_slice %68 {offsets = [0, 16], sizes = [8, 16], strides = [1, 1]} : vector<8x32xf32> to vector<8x16xf32>
    %cst_41 = arith.constant dense<0.000000e+00> : vector<8x8xf32>
    %91 = tpu.matmul %88, %89, %cst_41 {dimension_numbers = #tpu.dot_dimension_numbers<[1], [1], [0], [0], [0, 0, 1, 0], [], []>} : vector<8x16xf32>, vector<8x16xf32>, vector<8x8xf32> -> vector<8x8xf32>
    %cst_42 = arith.constant dense<0xFF800000> : vector<8xf32>
    %92 = vector.multi_reduction <maximumf>, %91, %cst_42 [1] : vector<8x8xf32> to vector<8xf32>
    %93 = vector.shape_cast %92 : vector<8xf32> to vector<8x1xf32>
    %94 = vector.broadcast %93 : vector<8x1xf32> to vector<8x8xf32>
    %95 = arith.subf %91, %94 : vector<8x8xf32>
    %96 = math.exp %95 : vector<8x8xf32>
    %cst_43 = arith.constant dense<0.000000e+00> : vector<8xf32>
    %97 = vector.multi_reduction <add>, %96, %cst_43 [1] : vector<8x8xf32> to vector<8xf32>
    %98 = vector.shape_cast %97 : vector<8xf32> to vector<8x1xf32>
    %99 = tpu.reciprocal %98 {approx = true} : vector<8x1xf32> -> vector<8x1xf32>
    %100 = vector.broadcast %99 : vector<8x1xf32> to vector<8x8xf32>
    %101 = arith.mulf %96, %100 : vector<8x8xf32>
    %cst_44 = arith.constant dense<0.000000e+00> : vector<8x16xf32>
    %102 = tpu.matmul %101, %90, %cst_44 {dimension_numbers = #tpu.dot_dimension_numbers<[1], [0], [0], [1], [0, 0, 1, 1], [], []>} : vector<8x8xf32>, vector<8x16xf32>, vector<8x16xf32> -> vector<8x16xf32>
    %103 = tpu.concatenate %85, %102 in 1 : vector<8x16xf32>, vector<8x16xf32> -> vector<8x32xf32>
    %c1_45 = arith.constant 1 : index
    %c0_46 = arith.constant 0 : index
    %c0_47 = arith.constant 0 : index
    %104 = vector.load %arg5[%c1_45, %c0_46, %c0_47] : memref<2x32x32xf32, #tpu.memory_space<vmem>>, vector<1x32x32xf32>
    %105 = vector.shape_cast %104 : vector<1x32x32xf32> to vector<32x32xf32>
    %cst_48 = arith.constant dense<0.000000e+00> : vector<8x32xf32>
    %106 = tpu.matmul %103, %105, %cst_48 {dimension_numbers = #tpu.dot_dimension_numbers<[1], [0], [0], [1], [0, 0, 1, 1], [], []>} : vector<8x32xf32>, vector<32x32xf32>, vector<8x32xf32> -> vector<8x32xf32>
    %107 = arith.addf %106, %62 : vector<8x32xf32>
    %c1_49 = arith.constant 1 : index
    %c0_50 = arith.constant 0 : index
    %c0_51 = arith.constant 0 : index
    %108 = vector.load %arg6[%c1_49, %c0_50, %c0_51] : memref<2x32x128xf32, #tpu.memory_space<vmem>>, vector<1x32x128xf32>
    %109 = vector.shape_cast %108 : vector<1x32x128xf32> to vector<32x128xf32>
    %cst_52 = arith.constant dense<0.000000e+00> : vector<8x128xf32>
    %110 = tpu.matmul %107, %109, %cst_52 {dimension_numbers = #tpu.dot_dimension_numbers<[1], [0], [0], [1], [0, 0, 1, 1], [], []>} : vector<8x32xf32>, vector<32x128xf32>, vector<8x128xf32> -> vector<8x128xf32>
    %cst_53 = arith.constant 0.000000e+00 : f32
    %111 = vector.broadcast %cst_53 : f32 to vector<8x128xf32>
    %112 = arith.maximumf %110, %111 : vector<8x128xf32>
    %c1_54 = arith.constant 1 : index
    %c0_55 = arith.constant 0 : index
    %c0_56 = arith.constant 0 : index
    %113 = vector.load %arg7[%c1_54, %c0_55, %c0_56] : memref<2x128x32xf32, #tpu.memory_space<vmem>>, vector<1x128x32xf32>
    %114 = vector.shape_cast %113 : vector<1x128x32xf32> to vector<128x32xf32>
    %cst_57 = arith.constant dense<0.000000e+00> : vector<8x32xf32>
    %115 = tpu.matmul %112, %114, %cst_57 {dimension_numbers = #tpu.dot_dimension_numbers<[1], [0], [0], [1], [0, 0, 1, 1], [], []>} : vector<8x128xf32>, vector<128x32xf32>, vector<8x32xf32> -> vector<8x32xf32>
    %116 = arith.addf %115, %107 : vector<8x32xf32>
    %c0_58 = arith.constant 0 : index
    %c0_59 = arith.constant 0 : index
    %117 = vector.load %arg8[%c0_58, %c0_59] : memref<1x32xf32, #tpu.memory_space<vmem>>, vector<1x32xf32>
    %118 = arith.mulf %116, %116 : vector<8x32xf32>
    %cst_60 = arith.constant dense<0.000000e+00> : vector<8xf32>
    %119 = vector.multi_reduction <add>, %118, %cst_60 [1] : vector<8x32xf32> to vector<8xf32>
    %120 = vector.shape_cast %119 : vector<8xf32> to vector<8x1xf32>
    %cst_61 = arith.constant 3.200000e+01 : f32
    %121 = vector.broadcast %cst_61 : f32 to vector<8x1xf32>
    %122 = arith.divf %120, %121 : vector<8x1xf32>
    %cst_62 = arith.constant 9.99999997E-7 : f32
    %123 = vector.broadcast %cst_62 : f32 to vector<8x1xf32>
    %124 = arith.addf %122, %123 : vector<8x1xf32>
    %125 = math.rsqrt %124 : vector<8x1xf32>
    %126 = vector.broadcast %125 : vector<8x1xf32> to vector<8x32xf32>
    %127 = arith.mulf %116, %126 : vector<8x32xf32>
    %128 = vector.broadcast %117 : vector<1x32xf32> to vector<8x32xf32>
    %129 = arith.mulf %128, %127 : vector<8x32xf32>
    %c0_63 = arith.constant 0 : index
    %c0_64 = arith.constant 0 : index
    %130 = vector.load %arg2[%c0_63, %c0_64] : memref<8x1xi32, #tpu.memory_space<vmem>>, vector<8x1xi32>
    %131 = tpu.iota {dimensions = array<i32: 1>} : vector<8x64xi32>
    %132 = vector.broadcast %130 : vector<8x1xi32> to vector<8x64xi32>
    %133 = arith.cmpi eq, %132, %131 : vector<8x64xi32>
    %cst_65 = arith.constant 1.000000e+00 : f32
    %cst_66 = arith.constant 0.000000e+00 : f32
    %134 = vector.broadcast %cst_65 : f32 to vector<8x64xf32>
    %135 = vector.broadcast %cst_66 : f32 to vector<8x64xf32>
    %136 = arith.select %133, %134, %135 : vector<8x64xi1>, vector<8x64xf32>
    %cst_67 = arith.constant dense<0.000000e+00> : vector<8x32xf32>
    %137 = tpu.matmul %136, %0, %cst_67 {dimension_numbers = #tpu.dot_dimension_numbers<[1], [0], [0], [1], [0, 0, 1, 1], [], []>} : vector<8x64xf32>, vector<64x32xf32>, vector<8x32xf32> -> vector<8x32xf32>
    %c0_68 = arith.constant 0 : index
    %c0_69 = arith.constant 0 : index
    %c0_70 = arith.constant 0 : index
    %138 = vector.load %arg9[%c0_68, %c0_69, %c0_70] : memref<2x32x96xf32, #tpu.memory_space<vmem>>, vector<1x32x96xf32>
    %139 = vector.shape_cast %138 : vector<1x32x96xf32> to vector<32x96xf32>
    %cst_71 = arith.constant dense<0.000000e+00> : vector<8x96xf32>
    %140 = tpu.matmul %137, %139, %cst_71 {dimension_numbers = #tpu.dot_dimension_numbers<[1], [0], [0], [1], [0, 0, 1, 1], [], []>} : vector<8x32xf32>, vector<32x96xf32>, vector<8x96xf32> -> vector<8x96xf32>
    %141 = vector.extract_strided_slice %140 {offsets = [0, 0], sizes = [8, 32], strides = [1, 1]} : vector<8x96xf32> to vector<8x32xf32>
    %142 = vector.extract_strided_slice %140 {offsets = [0, 32], sizes = [8, 32], strides = [1, 1]} : vector<8x96xf32> to vector<8x32xf32>
    %143 = vector.extract_strided_slice %140 {offsets = [0, 64], sizes = [8, 32], strides = [1, 1]} : vector<8x96xf32> to vector<8x32xf32>
    %144 = vector.extract_strided_slice %141 {offsets = [0, 0], sizes = [8, 16], strides = [1, 1]} : vector<8x32xf32> to vector<8x16xf32>
    %cst_72 = arith.constant 2.500000e-01 : f32
    %145 = vector.broadcast %cst_72 : f32 to vector<8x16xf32>
    %146 = arith.mulf %144, %145 : vector<8x16xf32>
    %147 = vector.extract_strided_slice %142 {offsets = [0, 0], sizes = [8, 16], strides = [1, 1]} : vector<8x32xf32> to vector<8x16xf32>
    %148 = vector.extract_strided_slice %143 {offsets = [0, 0], sizes = [8, 16], strides = [1, 1]} : vector<8x32xf32> to vector<8x16xf32>
    %cst_73 = arith.constant dense<0.000000e+00> : vector<8x8xf32>
    %149 = tpu.matmul %146, %147, %cst_73 {dimension_numbers = #tpu.dot_dimension_numbers<[1], [1], [0], [0], [0, 0, 1, 0], [], []>} : vector<8x16xf32>, vector<8x16xf32>, vector<8x8xf32> -> vector<8x8xf32>
    %150 = tpu.iota {dimensions = array<i32: 0>} : vector<8x8xi32>
    %151 = tpu.iota {dimensions = array<i32: 1>} : vector<8x8xi32>
    %152 = arith.cmpi sgt, %151, %150 : vector<8x8xi32>
    %cst_74 = arith.constant -3.40282347E+38 : f32
    %153 = vector.broadcast %cst_74 : f32 to vector<8x8xf32>
    %154 = arith.select %152, %153, %149 : vector<8x8xi1>, vector<8x8xf32>
    %cst_75 = arith.constant dense<0xFF800000> : vector<8xf32>
    %155 = vector.multi_reduction <maximumf>, %154, %cst_75 [1] : vector<8x8xf32> to vector<8xf32>
    %156 = vector.shape_cast %155 : vector<8xf32> to vector<8x1xf32>
    %157 = vector.broadcast %156 : vector<8x1xf32> to vector<8x8xf32>
    %158 = arith.subf %154, %157 : vector<8x8xf32>
    %159 = math.exp %158 : vector<8x8xf32>
    %cst_76 = arith.constant dense<0.000000e+00> : vector<8xf32>
    %160 = vector.multi_reduction <add>, %159, %cst_76 [1] : vector<8x8xf32> to vector<8xf32>
    %161 = vector.shape_cast %160 : vector<8xf32> to vector<8x1xf32>
    %162 = tpu.reciprocal %161 {approx = true} : vector<8x1xf32> -> vector<8x1xf32>
    %163 = vector.broadcast %162 : vector<8x1xf32> to vector<8x8xf32>
    %164 = arith.mulf %159, %163 : vector<8x8xf32>
    %cst_77 = arith.constant dense<0.000000e+00> : vector<8x16xf32>
    %165 = tpu.matmul %164, %148, %cst_77 {dimension_numbers = #tpu.dot_dimension_numbers<[1], [0], [0], [1], [0, 0, 1, 1], [], []>} : vector<8x8xf32>, vector<8x16xf32>, vector<8x16xf32> -> vector<8x16xf32>
    %166 = vector.extract_strided_slice %141 {offsets = [0, 16], sizes = [8, 16], strides = [1, 1]} : vector<8x32xf32> to vector<8x16xf32>
    %cst_78 = arith.constant 2.500000e-01 : f32
    %167 = vector.broadcast %cst_78 : f32 to vector<8x16xf32>
    %168 = arith.mulf %166, %167 : vector<8x16xf32>
    %169 = vector.extract_strided_slice %142 {offsets = [0, 16], sizes = [8, 16], strides = [1, 1]} : vector<8x32xf32> to vector<8x16xf32>
    %170 = vector.extract_strided_slice %143 {offsets = [0, 16], sizes = [8, 16], strides = [1, 1]} : vector<8x32xf32> to vector<8x16xf32>
    %cst_79 = arith.constant dense<0.000000e+00> : vector<8x8xf32>
    %171 = tpu.matmul %168, %169, %cst_79 {dimension_numbers = #tpu.dot_dimension_numbers<[1], [1], [0], [0], [0, 0, 1, 0], [], []>} : vector<8x16xf32>, vector<8x16xf32>, vector<8x8xf32> -> vector<8x8xf32>
    %172 = tpu.iota {dimensions = array<i32: 0>} : vector<8x8xi32>
    %173 = tpu.iota {dimensions = array<i32: 1>} : vector<8x8xi32>
    %174 = arith.cmpi sgt, %173, %172 : vector<8x8xi32>
    %cst_80 = arith.constant -3.40282347E+38 : f32
    %175 = vector.broadcast %cst_80 : f32 to vector<8x8xf32>
    %176 = arith.select %174, %175, %171 : vector<8x8xi1>, vector<8x8xf32>
    %cst_81 = arith.constant dense<0xFF800000> : vector<8xf32>
    %177 = vector.multi_reduction <maximumf>, %176, %cst_81 [1] : vector<8x8xf32> to vector<8xf32>
    %178 = vector.shape_cast %177 : vector<8xf32> to vector<8x1xf32>
    %179 = vector.broadcast %178 : vector<8x1xf32> to vector<8x8xf32>
    %180 = arith.subf %176, %179 : vector<8x8xf32>
    %181 = math.exp %180 : vector<8x8xf32>
    %cst_82 = arith.constant dense<0.000000e+00> : vector<8xf32>
    %182 = vector.multi_reduction <add>, %181, %cst_82 [1] : vector<8x8xf32> to vector<8xf32>
    %183 = vector.shape_cast %182 : vector<8xf32> to vector<8x1xf32>
    %184 = tpu.reciprocal %183 {approx = true} : vector<8x1xf32> -> vector<8x1xf32>
    %185 = vector.broadcast %184 : vector<8x1xf32> to vector<8x8xf32>
    %186 = arith.mulf %181, %185 : vector<8x8xf32>
    %cst_83 = arith.constant dense<0.000000e+00> : vector<8x16xf32>
    %187 = tpu.matmul %186, %170, %cst_83 {dimension_numbers = #tpu.dot_dimension_numbers<[1], [0], [0], [1], [0, 0, 1, 1], [], []>} : vector<8x8xf32>, vector<8x16xf32>, vector<8x16xf32> -> vector<8x16xf32>
    %188 = tpu.concatenate %165, %187 in 1 : vector<8x16xf32>, vector<8x16xf32> -> vector<8x32xf32>
    %c0_84 = arith.constant 0 : index
    %c0_85 = arith.constant 0 : index
    %c0_86 = arith.constant 0 : index
    %189 = vector.load %arg10[%c0_84, %c0_85, %c0_86] : memref<2x32x32xf32, #tpu.memory_space<vmem>>, vector<1x32x32xf32>
    %190 = vector.shape_cast %189 : vector<1x32x32xf32> to vector<32x32xf32>
    %cst_87 = arith.constant dense<0.000000e+00> : vector<8x32xf32>
    %191 = tpu.matmul %188, %190, %cst_87 {dimension_numbers = #tpu.dot_dimension_numbers<[1], [0], [0], [1], [0, 0, 1, 1], [], []>} : vector<8x32xf32>, vector<32x32xf32>, vector<8x32xf32> -> vector<8x32xf32>
    %192 = arith.addf %191, %137 : vector<8x32xf32>
    %c0_88 = arith.constant 0 : index
    %c0_89 = arith.constant 0 : index
    %c0_90 = arith.constant 0 : index
    %193 = vector.load %arg11[%c0_88, %c0_89, %c0_90] : memref<2x32x32xf32, #tpu.memory_space<vmem>>, vector<1x32x32xf32>
    %194 = vector.shape_cast %193 : vector<1x32x32xf32> to vector<32x32xf32>
    %cst_91 = arith.constant dense<0.000000e+00> : vector<8x32xf32>
    %195 = tpu.matmul %192, %194, %cst_91 {dimension_numbers = #tpu.dot_dimension_numbers<[1], [0], [0], [1], [0, 0, 1, 1], [], []>} : vector<8x32xf32>, vector<32x32xf32>, vector<8x32xf32> -> vector<8x32xf32>
    %c0_92 = arith.constant 0 : index
    %c0_93 = arith.constant 0 : index
    %c0_94 = arith.constant 0 : index
    %196 = vector.load %arg12[%c0_92, %c0_93, %c0_94] : memref<2x32x64xf32, #tpu.memory_space<vmem>>, vector<1x32x64xf32>
    %197 = vector.shape_cast %196 : vector<1x32x64xf32> to vector<32x64xf32>
    %cst_95 = arith.constant dense<0.000000e+00> : vector<8x64xf32>
    %198 = tpu.matmul %129, %197, %cst_95 {dimension_numbers = #tpu.dot_dimension_numbers<[1], [0], [0], [1], [0, 0, 1, 1], [], []>} : vector<8x32xf32>, vector<32x64xf32>, vector<8x64xf32> -> vector<8x64xf32>
    %199 = vector.extract_strided_slice %198 {offsets = [0, 0], sizes = [8, 32], strides = [1, 1]} : vector<8x64xf32> to vector<8x32xf32>
    %200 = vector.extract_strided_slice %198 {offsets = [0, 32], sizes = [8, 32], strides = [1, 1]} : vector<8x64xf32> to vector<8x32xf32>
    %201 = vector.extract_strided_slice %195 {offsets = [0, 0], sizes = [8, 16], strides = [1, 1]} : vector<8x32xf32> to vector<8x16xf32>
    %cst_96 = arith.constant 2.500000e-01 : f32
    %202 = vector.broadcast %cst_96 : f32 to vector<8x16xf32>
    %203 = arith.mulf %201, %202 : vector<8x16xf32>
    %204 = vector.extract_strided_slice %199 {offsets = [0, 0], sizes = [8, 16], strides = [1, 1]} : vector<8x32xf32> to vector<8x16xf32>
    %205 = vector.extract_strided_slice %200 {offsets = [0, 0], sizes = [8, 16], strides = [1, 1]} : vector<8x32xf32> to vector<8x16xf32>
    %cst_97 = arith.constant dense<0.000000e+00> : vector<8x8xf32>
    %206 = tpu.matmul %203, %204, %cst_97 {dimension_numbers = #tpu.dot_dimension_numbers<[1], [1], [0], [0], [0, 0, 1, 0], [], []>} : vector<8x16xf32>, vector<8x16xf32>, vector<8x8xf32> -> vector<8x8xf32>
    %cst_98 = arith.constant dense<0xFF800000> : vector<8xf32>
    %207 = vector.multi_reduction <maximumf>, %206, %cst_98 [1] : vector<8x8xf32> to vector<8xf32>
    %208 = vector.shape_cast %207 : vector<8xf32> to vector<8x1xf32>
    %209 = vector.broadcast %208 : vector<8x1xf32> to vector<8x8xf32>
    %210 = arith.subf %206, %209 : vector<8x8xf32>
    %211 = math.exp %210 : vector<8x8xf32>
    %cst_99 = arith.constant dense<0.000000e+00> : vector<8xf32>
    %212 = vector.multi_reduction <add>, %211, %cst_99 [1] : vector<8x8xf32> to vector<8xf32>
    %213 = vector.shape_cast %212 : vector<8xf32> to vector<8x1xf32>
    %214 = tpu.reciprocal %213 {approx = true} : vector<8x1xf32> -> vector<8x1xf32>
    %215 = vector.broadcast %214 : vector<8x1xf32> to vector<8x8xf32>
    %216 = arith.mulf %211, %215 : vector<8x8xf32>
    %cst_100 = arith.constant dense<0.000000e+00> : vector<8x16xf32>
    %217 = tpu.matmul %216, %205, %cst_100 {dimension_numbers = #tpu.dot_dimension_numbers<[1], [0], [0], [1], [0, 0, 1, 1], [], []>} : vector<8x8xf32>, vector<8x16xf32>, vector<8x16xf32> -> vector<8x16xf32>
    %218 = vector.extract_strided_slice %195 {offsets = [0, 16], sizes = [8, 16], strides = [1, 1]} : vector<8x32xf32> to vector<8x16xf32>
    %cst_101 = arith.constant 2.500000e-01 : f32
    %219 = vector.broadcast %cst_101 : f32 to vector<8x16xf32>
    %220 = arith.mulf %218, %219 : vector<8x16xf32>
    %221 = vector.extract_strided_slice %199 {offsets = [0, 16], sizes = [8, 16], strides = [1, 1]} : vector<8x32xf32> to vector<8x16xf32>
    %222 = vector.extract_strided_slice %200 {offsets = [0, 16], sizes = [8, 16], strides = [1, 1]} : vector<8x32xf32> to vector<8x16xf32>
    %cst_102 = arith.constant dense<0.000000e+00> : vector<8x8xf32>
    %223 = tpu.matmul %220, %221, %cst_102 {dimension_numbers = #tpu.dot_dimension_numbers<[1], [1], [0], [0], [0, 0, 1, 0], [], []>} : vector<8x16xf32>, vector<8x16xf32>, vector<8x8xf32> -> vector<8x8xf32>
    %cst_103 = arith.constant dense<0xFF800000> : vector<8xf32>
    %224 = vector.multi_reduction <maximumf>, %223, %cst_103 [1] : vector<8x8xf32> to vector<8xf32>
    %225 = vector.shape_cast %224 : vector<8xf32> to vector<8x1xf32>
    %226 = vector.broadcast %225 : vector<8x1xf32> to vector<8x8xf32>
    %227 = arith.subf %223, %226 : vector<8x8xf32>
    %228 = math.exp %227 : vector<8x8xf32>
    %cst_104 = arith.constant dense<0.000000e+00> : vector<8xf32>
    %229 = vector.multi_reduction <add>, %228, %cst_104 [1] : vector<8x8xf32> to vector<8xf32>
    %230 = vector.shape_cast %229 : vector<8xf32> to vector<8x1xf32>
    %231 = tpu.reciprocal %230 {approx = true} : vector<8x1xf32> -> vector<8x1xf32>
    %232 = vector.broadcast %231 : vector<8x1xf32> to vector<8x8xf32>
    %233 = arith.mulf %228, %232 : vector<8x8xf32>
    %cst_105 = arith.constant dense<0.000000e+00> : vector<8x16xf32>
    %234 = tpu.matmul %233, %222, %cst_105 {dimension_numbers = #tpu.dot_dimension_numbers<[1], [0], [0], [1], [0, 0, 1, 1], [], []>} : vector<8x8xf32>, vector<8x16xf32>, vector<8x16xf32> -> vector<8x16xf32>
    %235 = tpu.concatenate %217, %234 in 1 : vector<8x16xf32>, vector<8x16xf32> -> vector<8x32xf32>
    %c0_106 = arith.constant 0 : index
    %c0_107 = arith.constant 0 : index
    %c0_108 = arith.constant 0 : index
    %236 = vector.load %arg13[%c0_106, %c0_107, %c0_108] : memref<2x32x32xf32, #tpu.memory_space<vmem>>, vector<1x32x32xf32>
    %237 = vector.shape_cast %236 : vector<1x32x32xf32> to vector<32x32xf32>
    %cst_109 = arith.constant dense<0.000000e+00> : vector<8x32xf32>
    %238 = tpu.matmul %235, %237, %cst_109 {dimension_numbers = #tpu.dot_dimension_numbers<[1], [0], [0], [1], [0, 0, 1, 1], [], []>} : vector<8x32xf32>, vector<32x32xf32>, vector<8x32xf32> -> vector<8x32xf32>
    %239 = arith.addf %238, %192 : vector<8x32xf32>
    %c0_110 = arith.constant 0 : index
    %c0_111 = arith.constant 0 : index
    %c0_112 = arith.constant 0 : index
    %240 = vector.load %arg14[%c0_110, %c0_111, %c0_112] : memref<2x32x128xf32, #tpu.memory_space<vmem>>, vector<1x32x128xf32>
    %241 = vector.shape_cast %240 : vector<1x32x128xf32> to vector<32x128xf32>
    %cst_113 = arith.constant dense<0.000000e+00> : vector<8x128xf32>
    %242 = tpu.matmul %239, %241, %cst_113 {dimension_numbers = #tpu.dot_dimension_numbers<[1], [0], [0], [1], [0, 0, 1, 1], [], []>} : vector<8x32xf32>, vector<32x128xf32>, vector<8x128xf32> -> vector<8x128xf32>
    %cst_114 = arith.constant 0.000000e+00 : f32
    %243 = vector.broadcast %cst_114 : f32 to vector<8x128xf32>
    %244 = arith.maximumf %242, %243 : vector<8x128xf32>
    %c0_115 = arith.constant 0 : index
    %c0_116 = arith.constant 0 : index
    %c0_117 = arith.constant 0 : index
    %245 = vector.load %arg15[%c0_115, %c0_116, %c0_117] : memref<2x128x32xf32, #tpu.memory_space<vmem>>, vector<1x128x32xf32>
    %246 = vector.shape_cast %245 : vector<1x128x32xf32> to vector<128x32xf32>
    %cst_118 = arith.constant dense<0.000000e+00> : vector<8x32xf32>
    %247 = tpu.matmul %244, %246, %cst_118 {dimension_numbers = #tpu.dot_dimension_numbers<[1], [0], [0], [1], [0, 0, 1, 1], [], []>} : vector<8x128xf32>, vector<128x32xf32>, vector<8x32xf32> -> vector<8x32xf32>
    %248 = arith.addf %247, %239 : vector<8x32xf32>
    %c1_119 = arith.constant 1 : index
    %c0_120 = arith.constant 0 : index
    %c0_121 = arith.constant 0 : index
    %249 = vector.load %arg9[%c1_119, %c0_120, %c0_121] : memref<2x32x96xf32, #tpu.memory_space<vmem>>, vector<1x32x96xf32>
    %250 = vector.shape_cast %249 : vector<1x32x96xf32> to vector<32x96xf32>
    %cst_122 = arith.constant dense<0.000000e+00> : vector<8x96xf32>
    %251 = tpu.matmul %248, %250, %cst_122 {dimension_numbers = #tpu.dot_dimension_numbers<[1], [0], [0], [1], [0, 0, 1, 1], [], []>} : vector<8x32xf32>, vector<32x96xf32>, vector<8x96xf32> -> vector<8x96xf32>
    %252 = vector.extract_strided_slice %251 {offsets = [0, 0], sizes = [8, 32], strides = [1, 1]} : vector<8x96xf32> to vector<8x32xf32>
    %253 = vector.extract_strided_slice %251 {offsets = [0, 32], sizes = [8, 32], strides = [1, 1]} : vector<8x96xf32> to vector<8x32xf32>
    %254 = vector.extract_strided_slice %251 {offsets = [0, 64], sizes = [8, 32], strides = [1, 1]} : vector<8x96xf32> to vector<8x32xf32>
    %255 = vector.extract_strided_slice %252 {offsets = [0, 0], sizes = [8, 16], strides = [1, 1]} : vector<8x32xf32> to vector<8x16xf32>
    %cst_123 = arith.constant 2.500000e-01 : f32
    %256 = vector.broadcast %cst_123 : f32 to vector<8x16xf32>
    %257 = arith.mulf %255, %256 : vector<8x16xf32>
    %258 = vector.extract_strided_slice %253 {offsets = [0, 0], sizes = [8, 16], strides = [1, 1]} : vector<8x32xf32> to vector<8x16xf32>
    %259 = vector.extract_strided_slice %254 {offsets = [0, 0], sizes = [8, 16], strides = [1, 1]} : vector<8x32xf32> to vector<8x16xf32>
    %cst_124 = arith.constant dense<0.000000e+00> : vector<8x8xf32>
    %260 = tpu.matmul %257, %258, %cst_124 {dimension_numbers = #tpu.dot_dimension_numbers<[1], [1], [0], [0], [0, 0, 1, 0], [], []>} : vector<8x16xf32>, vector<8x16xf32>, vector<8x8xf32> -> vector<8x8xf32>
    %261 = tpu.iota {dimensions = array<i32: 0>} : vector<8x8xi32>
    %262 = tpu.iota {dimensions = array<i32: 1>} : vector<8x8xi32>
    %263 = arith.cmpi sgt, %262, %261 : vector<8x8xi32>
    %cst_125 = arith.constant -3.40282347E+38 : f32
    %264 = vector.broadcast %cst_125 : f32 to vector<8x8xf32>
    %265 = arith.select %263, %264, %260 : vector<8x8xi1>, vector<8x8xf32>
    %cst_126 = arith.constant dense<0xFF800000> : vector<8xf32>
    %266 = vector.multi_reduction <maximumf>, %265, %cst_126 [1] : vector<8x8xf32> to vector<8xf32>
    %267 = vector.shape_cast %266 : vector<8xf32> to vector<8x1xf32>
    %268 = vector.broadcast %267 : vector<8x1xf32> to vector<8x8xf32>
    %269 = arith.subf %265, %268 : vector<8x8xf32>
    %270 = math.exp %269 : vector<8x8xf32>
    %cst_127 = arith.constant dense<0.000000e+00> : vector<8xf32>
    %271 = vector.multi_reduction <add>, %270, %cst_127 [1] : vector<8x8xf32> to vector<8xf32>
    %272 = vector.shape_cast %271 : vector<8xf32> to vector<8x1xf32>
    %273 = tpu.reciprocal %272 {approx = true} : vector<8x1xf32> -> vector<8x1xf32>
    %274 = vector.broadcast %273 : vector<8x1xf32> to vector<8x8xf32>
    %275 = arith.mulf %270, %274 : vector<8x8xf32>
    %cst_128 = arith.constant dense<0.000000e+00> : vector<8x16xf32>
    %276 = tpu.matmul %275, %259, %cst_128 {dimension_numbers = #tpu.dot_dimension_numbers<[1], [0], [0], [1], [0, 0, 1, 1], [], []>} : vector<8x8xf32>, vector<8x16xf32>, vector<8x16xf32> -> vector<8x16xf32>
    %277 = vector.extract_strided_slice %252 {offsets = [0, 16], sizes = [8, 16], strides = [1, 1]} : vector<8x32xf32> to vector<8x16xf32>
    %cst_129 = arith.constant 2.500000e-01 : f32
    %278 = vector.broadcast %cst_129 : f32 to vector<8x16xf32>
    %279 = arith.mulf %277, %278 : vector<8x16xf32>
    %280 = vector.extract_strided_slice %253 {offsets = [0, 16], sizes = [8, 16], strides = [1, 1]} : vector<8x32xf32> to vector<8x16xf32>
    %281 = vector.extract_strided_slice %254 {offsets = [0, 16], sizes = [8, 16], strides = [1, 1]} : vector<8x32xf32> to vector<8x16xf32>
    %cst_130 = arith.constant dense<0.000000e+00> : vector<8x8xf32>
    %282 = tpu.matmul %279, %280, %cst_130 {dimension_numbers = #tpu.dot_dimension_numbers<[1], [1], [0], [0], [0, 0, 1, 0], [], []>} : vector<8x16xf32>, vector<8x16xf32>, vector<8x8xf32> -> vector<8x8xf32>
    %283 = tpu.iota {dimensions = array<i32: 0>} : vector<8x8xi32>
    %284 = tpu.iota {dimensions = array<i32: 1>} : vector<8x8xi32>
    %285 = arith.cmpi sgt, %284, %283 : vector<8x8xi32>
    %cst_131 = arith.constant -3.40282347E+38 : f32
    %286 = vector.broadcast %cst_131 : f32 to vector<8x8xf32>
    %287 = arith.select %285, %286, %282 : vector<8x8xi1>, vector<8x8xf32>
    %cst_132 = arith.constant dense<0xFF800000> : vector<8xf32>
    %288 = vector.multi_reduction <maximumf>, %287, %cst_132 [1] : vector<8x8xf32> to vector<8xf32>
    %289 = vector.shape_cast %288 : vector<8xf32> to vector<8x1xf32>
    %290 = vector.broadcast %289 : vector<8x1xf32> to vector<8x8xf32>
    %291 = arith.subf %287, %290 : vector<8x8xf32>
    %292 = math.exp %291 : vector<8x8xf32>
    %cst_133 = arith.constant dense<0.000000e+00> : vector<8xf32>
    %293 = vector.multi_reduction <add>, %292, %cst_133 [1] : vector<8x8xf32> to vector<8xf32>
    %294 = vector.shape_cast %293 : vector<8xf32> to vector<8x1xf32>
    %295 = tpu.reciprocal %294 {approx = true} : vector<8x1xf32> -> vector<8x1xf32>
    %296 = vector.broadcast %295 : vector<8x1xf32> to vector<8x8xf32>
    %297 = arith.mulf %292, %296 : vector<8x8xf32>
    %cst_134 = arith.constant dense<0.000000e+00> : vector<8x16xf32>
    %298 = tpu.matmul %297, %281, %cst_134 {dimension_numbers = #tpu.dot_dimension_numbers<[1], [0], [0], [1], [0, 0, 1, 1], [], []>} : vector<8x8xf32>, vector<8x16xf32>, vector<8x16xf32> -> vector<8x16xf32>
    %299 = tpu.concatenate %276, %298 in 1 : vector<8x16xf32>, vector<8x16xf32> -> vector<8x32xf32>
    %c1_135 = arith.constant 1 : index
    %c0_136 = arith.constant 0 : index
    %c0_137 = arith.constant 0 : index
    %300 = vector.load %arg10[%c1_135, %c0_136, %c0_137] : memref<2x32x32xf32, #tpu.memory_space<vmem>>, vector<1x32x32xf32>
    %301 = vector.shape_cast %300 : vector<1x32x32xf32> to vector<32x32xf32>
    %cst_138 = arith.constant dense<0.000000e+00> : vector<8x32xf32>
    %302 = tpu.matmul %299, %301, %cst_138 {dimension_numbers = #tpu.dot_dimension_numbers<[1], [0], [0], [1], [0, 0, 1, 1], [], []>} : vector<8x32xf32>, vector<32x32xf32>, vector<8x32xf32> -> vector<8x32xf32>
    %303 = arith.addf %302, %248 : vector<8x32xf32>
    %c1_139 = arith.constant 1 : index
    %c0_140 = arith.constant 0 : index
    %c0_141 = arith.constant 0 : index
    %304 = vector.load %arg11[%c1_139, %c0_140, %c0_141] : memref<2x32x32xf32, #tpu.memory_space<vmem>>, vector<1x32x32xf32>
    %305 = vector.shape_cast %304 : vector<1x32x32xf32> to vector<32x32xf32>
    %cst_142 = arith.constant dense<0.000000e+00> : vector<8x32xf32>
    %306 = tpu.matmul %303, %305, %cst_142 {dimension_numbers = #tpu.dot_dimension_numbers<[1], [0], [0], [1], [0, 0, 1, 1], [], []>} : vector<8x32xf32>, vector<32x32xf32>, vector<8x32xf32> -> vector<8x32xf32>
    %c1_143 = arith.constant 1 : index
    %c0_144 = arith.constant 0 : index
    %c0_145 = arith.constant 0 : index
    %307 = vector.load %arg12[%c1_143, %c0_144, %c0_145] : memref<2x32x64xf32, #tpu.memory_space<vmem>>, vector<1x32x64xf32>
    %308 = vector.shape_cast %307 : vector<1x32x64xf32> to vector<32x64xf32>
    %cst_146 = arith.constant dense<0.000000e+00> : vector<8x64xf32>
    %309 = tpu.matmul %129, %308, %cst_146 {dimension_numbers = #tpu.dot_dimension_numbers<[1], [0], [0], [1], [0, 0, 1, 1], [], []>} : vector<8x32xf32>, vector<32x64xf32>, vector<8x64xf32> -> vector<8x64xf32>
    %310 = vector.extract_strided_slice %309 {offsets = [0, 0], sizes = [8, 32], strides = [1, 1]} : vector<8x64xf32> to vector<8x32xf32>
    %311 = vector.extract_strided_slice %309 {offsets = [0, 32], sizes = [8, 32], strides = [1, 1]} : vector<8x64xf32> to vector<8x32xf32>
    %312 = vector.extract_strided_slice %306 {offsets = [0, 0], sizes = [8, 16], strides = [1, 1]} : vector<8x32xf32> to vector<8x16xf32>
    %cst_147 = arith.constant 2.500000e-01 : f32
    %313 = vector.broadcast %cst_147 : f32 to vector<8x16xf32>
    %314 = arith.mulf %312, %313 : vector<8x16xf32>
    %315 = vector.extract_strided_slice %310 {offsets = [0, 0], sizes = [8, 16], strides = [1, 1]} : vector<8x32xf32> to vector<8x16xf32>
    %316 = vector.extract_strided_slice %311 {offsets = [0, 0], sizes = [8, 16], strides = [1, 1]} : vector<8x32xf32> to vector<8x16xf32>
    %cst_148 = arith.constant dense<0.000000e+00> : vector<8x8xf32>
    %317 = tpu.matmul %314, %315, %cst_148 {dimension_numbers = #tpu.dot_dimension_numbers<[1], [1], [0], [0], [0, 0, 1, 0], [], []>} : vector<8x16xf32>, vector<8x16xf32>, vector<8x8xf32> -> vector<8x8xf32>
    %cst_149 = arith.constant dense<0xFF800000> : vector<8xf32>
    %318 = vector.multi_reduction <maximumf>, %317, %cst_149 [1] : vector<8x8xf32> to vector<8xf32>
    %319 = vector.shape_cast %318 : vector<8xf32> to vector<8x1xf32>
    %320 = vector.broadcast %319 : vector<8x1xf32> to vector<8x8xf32>
    %321 = arith.subf %317, %320 : vector<8x8xf32>
    %322 = math.exp %321 : vector<8x8xf32>
    %cst_150 = arith.constant dense<0.000000e+00> : vector<8xf32>
    %323 = vector.multi_reduction <add>, %322, %cst_150 [1] : vector<8x8xf32> to vector<8xf32>
    %324 = vector.shape_cast %323 : vector<8xf32> to vector<8x1xf32>
    %325 = tpu.reciprocal %324 {approx = true} : vector<8x1xf32> -> vector<8x1xf32>
    %326 = vector.broadcast %325 : vector<8x1xf32> to vector<8x8xf32>
    %327 = arith.mulf %322, %326 : vector<8x8xf32>
    %cst_151 = arith.constant dense<0.000000e+00> : vector<8x16xf32>
    %328 = tpu.matmul %327, %316, %cst_151 {dimension_numbers = #tpu.dot_dimension_numbers<[1], [0], [0], [1], [0, 0, 1, 1], [], []>} : vector<8x8xf32>, vector<8x16xf32>, vector<8x16xf32> -> vector<8x16xf32>
    %329 = vector.extract_strided_slice %306 {offsets = [0, 16], sizes = [8, 16], strides = [1, 1]} : vector<8x32xf32> to vector<8x16xf32>
    %cst_152 = arith.constant 2.500000e-01 : f32
    %330 = vector.broadcast %cst_152 : f32 to vector<8x16xf32>
    %331 = arith.mulf %329, %330 : vector<8x16xf32>
    %332 = vector.extract_strided_slice %310 {offsets = [0, 16], sizes = [8, 16], strides = [1, 1]} : vector<8x32xf32> to vector<8x16xf32>
    %333 = vector.extract_strided_slice %311 {offsets = [0, 16], sizes = [8, 16], strides = [1, 1]} : vector<8x32xf32> to vector<8x16xf32>
    %cst_153 = arith.constant dense<0.000000e+00> : vector<8x8xf32>
    %334 = tpu.matmul %331, %332, %cst_153 {dimension_numbers = #tpu.dot_dimension_numbers<[1], [1], [0], [0], [0, 0, 1, 0], [], []>} : vector<8x16xf32>, vector<8x16xf32>, vector<8x8xf32> -> vector<8x8xf32>
    %cst_154 = arith.constant dense<0xFF800000> : vector<8xf32>
    %335 = vector.multi_reduction <maximumf>, %334, %cst_154 [1] : vector<8x8xf32> to vector<8xf32>
    %336 = vector.shape_cast %335 : vector<8xf32> to vector<8x1xf32>
    %337 = vector.broadcast %336 : vector<8x1xf32> to vector<8x8xf32>
    %338 = arith.subf %334, %337 : vector<8x8xf32>
    %339 = math.exp %338 : vector<8x8xf32>
    %cst_155 = arith.constant dense<0.000000e+00> : vector<8xf32>
    %340 = vector.multi_reduction <add>, %339, %cst_155 [1] : vector<8x8xf32> to vector<8xf32>
    %341 = vector.shape_cast %340 : vector<8xf32> to vector<8x1xf32>
    %342 = tpu.reciprocal %341 {approx = true} : vector<8x1xf32> -> vector<8x1xf32>
    %343 = vector.broadcast %342 : vector<8x1xf32> to vector<8x8xf32>
    %344 = arith.mulf %339, %343 : vector<8x8xf32>
    %cst_156 = arith.constant dense<0.000000e+00> : vector<8x16xf32>
    %345 = tpu.matmul %344, %333, %cst_156 {dimension_numbers = #tpu.dot_dimension_numbers<[1], [0], [0], [1], [0, 0, 1, 1], [], []>} : vector<8x8xf32>, vector<8x16xf32>, vector<8x16xf32> -> vector<8x16xf32>
    %346 = tpu.concatenate %328, %345 in 1 : vector<8x16xf32>, vector<8x16xf32> -> vector<8x32xf32>
    %c1_157 = arith.constant 1 : index
    %c0_158 = arith.constant 0 : index
    %c0_159 = arith.constant 0 : index
    %347 = vector.load %arg13[%c1_157, %c0_158, %c0_159] : memref<2x32x32xf32, #tpu.memory_space<vmem>>, vector<1x32x32xf32>
    %348 = vector.shape_cast %347 : vector<1x32x32xf32> to vector<32x32xf32>
    %cst_160 = arith.constant dense<0.000000e+00> : vector<8x32xf32>
    %349 = tpu.matmul %346, %348, %cst_160 {dimension_numbers = #tpu.dot_dimension_numbers<[1], [0], [0], [1], [0, 0, 1, 1], [], []>} : vector<8x32xf32>, vector<32x32xf32>, vector<8x32xf32> -> vector<8x32xf32>
    %350 = arith.addf %349, %303 : vector<8x32xf32>
    %c1_161 = arith.constant 1 : index
    %c0_162 = arith.constant 0 : index
    %c0_163 = arith.constant 0 : index
    %351 = vector.load %arg14[%c1_161, %c0_162, %c0_163] : memref<2x32x128xf32, #tpu.memory_space<vmem>>, vector<1x32x128xf32>
    %352 = vector.shape_cast %351 : vector<1x32x128xf32> to vector<32x128xf32>
    %cst_164 = arith.constant dense<0.000000e+00> : vector<8x128xf32>
    %353 = tpu.matmul %350, %352, %cst_164 {dimension_numbers = #tpu.dot_dimension_numbers<[1], [0], [0], [1], [0, 0, 1, 1], [], []>} : vector<8x32xf32>, vector<32x128xf32>, vector<8x128xf32> -> vector<8x128xf32>
    %cst_165 = arith.constant 0.000000e+00 : f32
    %354 = vector.broadcast %cst_165 : f32 to vector<8x128xf32>
    %355 = arith.maximumf %353, %354 : vector<8x128xf32>
    %c1_166 = arith.constant 1 : index
    %c0_167 = arith.constant 0 : index
    %c0_168 = arith.constant 0 : index
    %356 = vector.load %arg15[%c1_166, %c0_167, %c0_168] : memref<2x128x32xf32, #tpu.memory_space<vmem>>, vector<1x128x32xf32>
    %357 = vector.shape_cast %356 : vector<1x128x32xf32> to vector<128x32xf32>
    %cst_169 = arith.constant dense<0.000000e+00> : vector<8x32xf32>
    %358 = tpu.matmul %355, %357, %cst_169 {dimension_numbers = #tpu.dot_dimension_numbers<[1], [0], [0], [1], [0, 0, 1, 1], [], []>} : vector<8x128xf32>, vector<128x32xf32>, vector<8x32xf32> -> vector<8x32xf32>
    %359 = arith.addf %358, %350 : vector<8x32xf32>
    %c0_170 = arith.constant 0 : index
    %c0_171 = arith.constant 0 : index
    %360 = vector.load %arg16[%c0_170, %c0_171] : memref<1x32xf32, #tpu.memory_space<vmem>>, vector<1x32xf32>
    %361 = arith.mulf %359, %359 : vector<8x32xf32>
    %cst_172 = arith.constant dense<0.000000e+00> : vector<8xf32>
    %362 = vector.multi_reduction <add>, %361, %cst_172 [1] : vector<8x32xf32> to vector<8xf32>
    %363 = vector.shape_cast %362 : vector<8xf32> to vector<8x1xf32>
    %cst_173 = arith.constant 3.200000e+01 : f32
    %364 = vector.broadcast %cst_173 : f32 to vector<8x1xf32>
    %365 = arith.divf %363, %364 : vector<8x1xf32>
    %cst_174 = arith.constant 9.99999997E-7 : f32
    %366 = vector.broadcast %cst_174 : f32 to vector<8x1xf32>
    %367 = arith.addf %365, %366 : vector<8x1xf32>
    %368 = math.rsqrt %367 : vector<8x1xf32>
    %369 = vector.broadcast %368 : vector<8x1xf32> to vector<8x32xf32>
    %370 = arith.mulf %359, %369 : vector<8x32xf32>
    %371 = vector.broadcast %360 : vector<1x32xf32> to vector<8x32xf32>
    %372 = arith.mulf %371, %370 : vector<8x32xf32>
    %c0_175 = arith.constant 0 : index
    %c0_176 = arith.constant 0 : index
    %373 = vector.load %arg17[%c0_175, %c0_176] : memref<32x64xf32, #tpu.memory_space<vmem>>, vector<32x64xf32>
    %cst_177 = arith.constant dense<0.000000e+00> : vector<8x64xf32>
    %374 = tpu.matmul %372, %373, %cst_177 {dimension_numbers = #tpu.dot_dimension_numbers<[1], [0], [0], [1], [0, 0, 1, 1], [], []>} : vector<8x32xf32>, vector<32x64xf32>, vector<8x64xf32> -> vector<8x64xf32>
    %c0_178 = arith.constant 0 : index
    %c0_179 = arith.constant 0 : index
    %375 = vector.load %arg18[%c0_178, %c0_179] : memref<8x64xf32, #tpu.memory_space<vmem>>, vector<8x64xf32>
    tpu.vector_store %arg18[%c0_178, %c0_179], %374 {strides = array<i32>} : memref<8x64xf32, #tpu.memory_space<vmem>>, vector<8x64xf32>,
    return
  }
  func.func @transform_0(%arg0: i32) -> (i32, i32) {
    %c0_i32 = arith.constant 0 : i32
    %c0_i32_0 = arith.constant 0 : i32
    return %arg0, %c0_i32 : i32, i32
  }
  func.func @transform_1(%arg0: i32) -> (i32, i32) {
    %c0_i32 = arith.constant 0 : i32
    %c0_i32_0 = arith.constant 0 : i32
    return %arg0, %c0_i32 : i32, i32
  }
  func.func @transform_2(%arg0: i32) -> (i32, i32) {
    %c0_i32 = arith.constant 0 : i32
    %c0_i32_0 = arith.constant 0 : i32
    %c0_i32_1 = arith.constant 0 : i32
    return %c0_i32, %c0_i32_0 : i32, i32
  }
  func.func @transform_3(%arg0: i32) -> (i32, i32, i32) {
    %c0_i32 = arith.constant 0 : i32
    %c0_i32_0 = arith.constant 0 : i32
    %c0_i32_1 = arith.constant 0 : i32
    %c0_i32_2 = arith.constant 0 : i32
    return %c0_i32, %c0_i32_0, %c0_i32_1 : i32, i32, i32
  }
  func.func @transform_4(%arg0: i32) -> (i32, i32, i32) {
    %c0_i32 = arith.constant 0 : i32
    %c0_i32_0 = arith.constant 0 : i32
    %c0_i32_1 = arith.constant 0 : i32
    %c0_i32_2 = arith.constant 0 : i32
    return %c0_i32, %c0_i32_0, %c0_i32_1 : i32, i32, i32
  }
  func.func @transform_5(%arg0: i32) -> (i32, i32, i32) {
    %c0_i32 = arith.constant 0 : i32
    %c0_i32_0 = arith.constant 0 : i32
    %c0_i32_1 = arith.constant 0 : i32
    %c0_i32_2 = arith.constant 0 : i32
    return %c0_i32, %c0_i32_0, %c0_i32_1 : i32, i32, i32
  }
  func.func @transform_6(%arg0: i32) -> (i32, i32, i32) {
    %c0_i32 = arith.constant 0 : i32
    %c0_i32_0 = arith.constant 0 : i32
    %c0_i32_1 = arith.constant 0 : i32
    %c0_i32_2 = arith.constant 0 : i32
    return %c0_i32, %c0_i32_0, %c0_i32_1 : i32, i32, i32
  }
  func.func @transform_7(%arg0: i32) -> (i32, i32) {
    %c0_i32 = arith.constant 0 : i32
    %c0_i32_0 = arith.constant 0 : i32
    %c0_i32_1 = arith.constant 0 : i32
    return %c0_i32, %c0_i32_0 : i32, i32
  }
  func.func @transform_8(%arg0: i32) -> (i32, i32, i32) {
    %c0_i32 = arith.constant 0 : i32
    %c0_i32_0 = arith.constant 0 : i32
    %c0_i32_1 = arith.constant 0 : i32
    %c0_i32_2 = arith.constant 0 : i32
    return %c0_i32, %c0_i32_0, %c0_i32_1 : i32, i32, i32
  }
  func.func @transform_9(%arg0: i32) -> (i32, i32, i32) {
    %c0_i32 = arith.constant 0 : i32
    %c0_i32_0 = arith.constant 0 : i32
    %c0_i32_1 = arith.constant 0 : i32
    %c0_i32_2 = arith.constant 0 : i32
    return %c0_i32, %c0_i32_0, %c0_i32_1 : i32, i32, i32
  }
  func.func @transform_10(%arg0: i32) -> (i32, i32, i32) {
    %c0_i32 = arith.constant 0 : i32
    %c0_i32_0 = arith.constant 0 : i32
    %c0_i32_1 = arith.constant 0 : i32
    %c0_i32_2 = arith.constant 0 : i32
    return %c0_i32, %c0_i32_0, %c0_i32_1 : i32, i32, i32
  }
  func.func @transform_11(%arg0: i32) -> (i32, i32, i32) {
    %c0_i32 = arith.constant 0 : i32
    %c0_i32_0 = arith.constant 0 : i32
    %c0_i32_1 = arith.constant 0 : i32
    %c0_i32_2 = arith.constant 0 : i32
    return %c0_i32, %c0_i32_0, %c0_i32_1 : i32, i32, i32
  }
  func.func @transform_12(%arg0: i32) -> (i32, i32, i32) {
    %c0_i32 = arith.constant 0 : i32
    %c0_i32_0 = arith.constant 0 : i32
    %c0_i32_1 = arith.constant 0 : i32
    %c0_i32_2 = arith.constant 0 : i32
    return %c0_i32, %c0_i32_0, %c0_i32_1 : i32, i32, i32
  }
  func.func @transform_13(%arg0: i32) -> (i32, i32, i32) {
    %c0_i32 = arith.constant 0 : i32
    %c0_i32_0 = arith.constant 0 : i32
    %c0_i32_1 = arith.constant 0 : i32
    %c0_i32_2 = arith.constant 0 : i32
    return %c0_i32, %c0_i32_0, %c0_i32_1 : i32, i32, i32
  }
  func.func @transform_14(%arg0: i32) -> (i32, i32, i32) {
    %c0_i32 = arith.constant 0 : i32
    %c0_i32_0 = arith.constant 0 : i32
    %c0_i32_1 = arith.constant 0 : i32
    %c0_i32_2 = arith.constant 0 : i32
    return %c0_i32, %c0_i32_0, %c0_i32_1 : i32, i32, i32
  }
  func.func @transform_15(%arg0: i32) -> (i32, i32) {
    %c0_i32 = arith.constant 0 : i32
    %c0_i32_0 = arith.constant 0 : i32
    %c0_i32_1 = arith.constant 0 : i32
    return %c0_i32, %c0_i32_0 : i32, i32
  }
  func.func @transform_16(%arg0: i32) -> (i32, i32) {
    %c0_i32 = arith.constant 0 : i32
    %c0_i32_0 = arith.constant 0 : i32
    %c0_i32_1 = arith.constant 0 : i32
    return %c0_i32, %c0_i32_0 : i32, i32
  }
  func.func @transform_17(%arg0: i32) -> (i32, i32) {
    %c0_i32 = arith.constant 0 : i32
    %c0_i32_0 = arith.constant 0 : i32
    return %arg0, %c0_i32 : i32, i32
  }
}

</mosaic_0001>

<llo_original>
// kernel: t5_forward.1
$region0: #{t5_forward.1}
  #allocation0 [shape = 'u32[]', space=smem, size = 0x4, offset = 0x4, fixed_abs, tag = 'smem constant byte address 0x4 - core index']
  #allocation1 [shape = 'u32[72,128]{1,0:T(1,128)}', space=vmem, size = 0x9000, scoped, tag = 'internal scratch']
  %s0 = inlined_call_operand.vmem [shape: s32[16,1], index: 0, kind: input, shape index: {}]
  %s1 = inlined_call_operand.vmem [shape: s32[16,1], index: 1, kind: input, shape index: {}]
  %s2 = inlined_call_operand.vmem [shape: f32[64,32], index: 2, kind: input, shape index: {}]
  %s3 = inlined_call_operand.vmem [shape: f32[2,32,96], index: 3, kind: input, shape index: {}]
  %s4 = inlined_call_operand.vmem [shape: f32[2,32,32], index: 4, kind: input, shape index: {}]
  %s5 = inlined_call_operand.vmem [shape: f32[2,32,128], index: 5, kind: input, shape index: {}]
  %s6 = inlined_call_operand.vmem [shape: f32[2,128,32], index: 6, kind: input, shape index: {}]
  %s7 = inlined_call_operand.vmem [shape: f32[1,32], index: 7, kind: input, shape index: {}]
  %s8 = inlined_call_operand.vmem [shape: f32[2,32,96], index: 8, kind: input, shape index: {}]
  %s9 = inlined_call_operand.vmem [shape: f32[2,32,32], index: 9, kind: input, shape index: {}]
  %s10 = inlined_call_operand.vmem [shape: f32[2,32,32], index: 10, kind: input, shape index: {}]
  %s11 = inlined_call_operand.vmem [shape: f32[2,32,64], index: 11, kind: input, shape index: {}]
  %s12 = inlined_call_operand.vmem [shape: f32[2,32,32], index: 12, kind: input, shape index: {}]
  %s13 = inlined_call_operand.vmem [shape: f32[2,32,128], index: 13, kind: input, shape index: {}]
  %s14 = inlined_call_operand.vmem [shape: f32[2,128,32], index: 14, kind: input, shape index: {}]
  %s15 = inlined_call_operand.vmem [shape: f32[1,32], index: 15, kind: input, shape index: {}]
  %s16 = inlined_call_operand.vmem [shape: f32[32,64], index: 16, kind: input, shape index: {}]
  %s17 = inlined_call_operand.hbm [shape: f32[16,64], index: 17, kind: output, shape index: {}]
  %s18 = sld [smem:[#allocation0]]
  $region101: #{t5_forward.1} parent=0
    _
  %s20 = ssub.s32 1, %s18
  %s21 = scalar_select 0, %s20, %s18
  $region1: #{t5_forward.1} parent=0
    #allocation2 [shape = 'u8[8192]{0}', space=vmem, size = 0x2000, scoped, tag = 'output window, operand 0']
    #allocation3 [shape = 's32[2]{0}', space=sflag, size = 0x8, scoped, tag = 'scoped memory for t5_forward.1']
    %22 = vsyncpa [#allocation3], 0
    %s23 = scalar_lea.sflag [#allocation3], 1
    %24 = vsyncpa %s23, 0
    loop: start=0, step=1, limit=4
    $region2: #{t5_forward.1} parent=1 // loop_pre_header
      _
    $region3: #{t5_forward.1} parent=1 // loop_header
      %s26 = sphi 0, %s30
      %p27 = scmp.ge.s32.totalorder %s26, 4
      %s36 = sphi 0, %s38
      %s39 = sphi 0, %s36
      %s40 = sphi 0, %s39
      %s56 = sphi 0, %s40
      %s62 = sphi 0, %s64
      %s65 = sphi 0, %s62
      %s66 = sphi 0, %s65
      %s82 = sphi 0, %s66
      %s86 = sphi 0, %s86
      %s88 = sphi 0, %s86
      %s89 = sphi 0, %s88
      %s103 = sphi 0, %s89
      %s107 = sphi 0, %s107
      %s109 = sphi 0, %s107
      %s110 = sphi 0, %s109
      %s124 = sphi 0, %s110
      %s128 = sphi 0, %s128
      %s130 = sphi 0, %s128
      %s131 = sphi 0, %s130
      %s145 = sphi 0, %s131
      %s149 = sphi 0, %s149
      %s151 = sphi 0, %s149
      %s152 = sphi 0, %s151
      %s166 = sphi 0, %s152
      %s170 = sphi 0, %s170
      %s172 = sphi 0, %s170
      %s173 = sphi 0, %s172
      %s187 = sphi 0, %s173
      %s191 = sphi 0, %s191
      %s193 = sphi 0, %s191
      %s194 = sphi 0, %s193
      %s208 = sphi 0, %s194
      %s212 = sphi 0, %s212
      %s214 = sphi 0, %s212
      %s215 = sphi 0, %s214
      %s229 = sphi 0, %s215
      %s233 = sphi 0, %s233
      %s235 = sphi 0, %s233
      %s236 = sphi 0, %s235
      %s250 = sphi 0, %s236
      %s254 = sphi 0, %s254
      %s256 = sphi 0, %s254
      %s257 = sphi 0, %s256
      %s271 = sphi 0, %s257
      %s275 = sphi 0, %s275
      %s277 = sphi 0, %s275
      %s278 = sphi 0, %s277
      %s292 = sphi 0, %s278
      %s296 = sphi 0, %s296
      %s298 = sphi 0, %s296
      %s299 = sphi 0, %s298
      %s313 = sphi 0, %s299
      %s317 = sphi 0, %s317
      %s319 = sphi 0, %s317
      %s320 = sphi 0, %s319
      %s334 = sphi 0, %s320
      %s338 = sphi 0, %s338
      %s340 = sphi 0, %s338
      %s341 = sphi 0, %s340
      %s355 = sphi 0, %s341
      %s359 = sphi 0, %s359
      %s361 = sphi 0, %s359
      %s362 = sphi 0, %s361
      %s376 = sphi 0, %s362
      %s380 = sphi 0, %s380
      %s382 = sphi 0, %s380
      %s383 = sphi 0, %s382
      %s397 = sphi 0, %s383
      %s403 = sphi 0, %s405
      %s406 = sphi 0, %s403
      %s407 = sphi 0, %s406
      %s423 = sphi 0, %s407
    $region4: #{t5_forward.1} parent=1 // loop_header_branch
      %29 = sbr.rel (%p27) target = $region8
    $region5: #{t5_forward.1} parent=1 // loop_body
      %s31 = ssub.s32 %s26, 1
      %s32 = ssub.s32 %s26, 2
      %s33 = sadd.s32 %s26, 1
      %s34 = ssub.s32 %s26, %s33
      %p35 = scmp.eq.s32.totalorder %s34, 0
      %s37 = sadd.s32 %s36, 1
      %s38 = scalar_select %p35, %s36, %s37
      %p41 = pneg %p35
      %p42 = scmp.eq.s32.totalorder %s26, 1
      %p43 = por %p41, %p42
      %p44 = scmp.ne.s32.totalorder %s36, %s39
      %p45 = scmp.eq.s32.totalorder %s26, 0
      %p46 = por %p44, %p45
      %p47 = scmp.ne.s32.totalorder %s36, %s39
      %p48 = scmp.eq.s32.totalorder %s31, 1
      %p49 = por %p47, %p48
      %p50 = scmp.ne.s32.totalorder %s39, %s40
      %p51 = scmp.eq.s32.totalorder %s31, 0
      %p52 = por %p50, %p51
      %p53 = scmp.ne.s32.totalorder %s39, %s40
      %p54 = scmp.eq.s32.totalorder %s32, 1
      %p55 = por %p53, %p54
      %p57 = scmp.ne.s32.totalorder %s40, %s56
      %p58 = scmp.eq.s32.totalorder %s32, 0
      %p59 = por %p57, %p58
      %s60 = ssub.s32 %s26, %s33
      %p61 = scmp.eq.s32.totalorder %s60, 0
      %s63 = sadd.s32 %s62, 1
      %s64 = scalar_select %p61, %s62, %s63
      %p67 = pneg %p61
      %p68 = scmp.eq.s32.totalorder %s26, 1
      %p69 = por %p67, %p68
      %p70 = scmp.ne.s32.totalorder %s62, %s65
      %p71 = scmp.eq.s32.totalorder %s26, 0
      %p72 = por %p70, %p71
      %p73 = scmp.ne.s32.totalorder %s62, %s65
      %p74 = scmp.eq.s32.totalorder %s31, 1
      %p75 = por %p73, %p74
      %p76 = scmp.ne.s32.totalorder %s65, %s66
      %p77 = scmp.eq.s32.totalorder %s31, 0
      %p78 = por %p76, %p77
      %p79 = scmp.ne.s32.totalorder %s65, %s66
      %p80 = scmp.eq.s32.totalorder %s32, 1
      %p81 = por %p79, %p80
      %p83 = scmp.ne.s32.totalorder %s66, %s82
      %p84 = scmp.eq.s32.totalorder %s32, 0
      %p85 = por %p83, %p84
      %s87 = sadd.s32 %s86, 1
      %p90 = scmp.eq.s32.totalorder %s26, 1
      %p91 = scmp.ne.s32.totalorder %s86, %s88
      %p92 = scmp.eq.s32.totalorder %s26, 0
      %p93 = por %p91, %p92
      %p94 = scmp.ne.s32.totalorder %s86, %s88
      %p95 = scmp.eq.s32.totalorder %s31, 1
      %p96 = por %p94, %p95
      %p97 = scmp.ne.s32.totalorder %s88, %s89
      %p98 = scmp.eq.s32.totalorder %s31, 0
      %p99 = por %p97, %p98
      %p100 = scmp.ne.s32.totalorder %s88, %s89
      %p101 = scmp.eq.s32.totalorder %s32, 1
      %p102 = por %p100, %p101
      %p104 = scmp.ne.s32.totalorder %s89, %s103
      %p105 = scmp.eq.s32.totalorder %s32, 0
      %p106 = por %p104, %p105
      %s108 = sadd.s32 %s107, 1
      %p111 = scmp.eq.s32.totalorder %s26, 1
      %p112 = scmp.ne.s32.totalorder %s107, %s109
      %p113 = scmp.eq.s32.totalorder %s26, 0
      %p114 = por %p112, %p113
      %p115 = scmp.ne.s32.totalorder %s107, %s109
      %p116 = scmp.eq.s32.totalorder %s31, 1
      %p117 = por %p115, %p116
      %p118 = scmp.ne.s32.totalorder %s109, %s110
      %p119 = scmp.eq.s32.totalorder %s31, 0
      %p120 = por %p118, %p119
      %p121 = scmp.ne.s32.totalorder %s109, %s110
      %p122 = scmp.eq.s32.totalorder %s32, 1
      %p123 = por %p121, %p122
      %p125 = scmp.ne.s32.totalorder %s110, %s124
      %p126 = scmp.eq.s32.totalorder %s32, 0
      %p127 = por %p125, %p126
      %s129 = sadd.s32 %s128, 1
      %p132 = scmp.eq.s32.totalorder %s26, 1
      %p133 = scmp.ne.s32.totalorder %s128, %s130
      %p134 = scmp.eq.s32.totalorder %s26, 0
      %p135 = por %p133, %p134
      %p136 = scmp.ne.s32.totalorder %s128, %s130
      %p137 = scmp.eq.s32.totalorder %s31, 1
      %p138 = por %p136, %p137
      %p139 = scmp.ne.s32.totalorder %s130, %s131
      %p140 = scmp.eq.s32.totalorder %s31, 0
      %p141 = por %p139, %p140
      %p142 = scmp.ne.s32.totalorder %s130, %s131
      %p143 = scmp.eq.s32.totalorder %s32, 1
      %p144 = por %p142, %p143
      %p146 = scmp.ne.s32.totalorder %s131, %s145
      %p147 = scmp.eq.s32.totalorder %s32, 0
      %p148 = por %p146, %p147
      %s150 = sadd.s32 %s149, 1
      %p153 = scmp.eq.s32.totalorder %s26, 1
      %p154 = scmp.ne.s32.totalorder %s149, %s151
      %p155 = scmp.eq.s32.totalorder %s26, 0
      %p156 = por %p154, %p155
      %p157 = scmp.ne.s32.totalorder %s149, %s151
      %p158 = scmp.eq.s32.totalorder %s31, 1
      %p159 = por %p157, %p158
      %p160 = scmp.ne.s32.totalorder %s151, %s152
      %p161 = scmp.eq.s32.totalorder %s31, 0
      %p162 = por %p160, %p161
      %p163 = scmp.ne.s32.totalorder %s151, %s152
      %p164 = scmp.eq.s32.totalorder %s32, 1
      %p165 = por %p163, %p164
      %p167 = scmp.ne.s32.totalorder %s152, %s166
      %p168 = scmp.eq.s32.totalorder %s32, 0
      %p169 = por %p167, %p168
      %s171 = sadd.s32 %s170, 1
      %p174 = scmp.eq.s32.totalorder %s26, 1
      %p175 = scmp.ne.s32.totalorder %s170, %s172
      %p176 = scmp.eq.s32.totalorder %s26, 0
      %p177 = por %p175, %p176
      %p178 = scmp.ne.s32.totalorder %s170, %s172
      %p179 = scmp.eq.s32.totalorder %s31, 1
      %p180 = por %p178, %p179
      %p181 = scmp.ne.s32.totalorder %s172, %s173
      %p182 = scmp.eq.s32.totalorder %s31, 0
      %p183 = por %p181, %p182
      %p184 = scmp.ne.s32.totalorder %s172, %s173
      %p185 = scmp.eq.s32.totalorder %s32, 1
      %p186 = por %p184, %p185
      %p188 = scmp.ne.s32.totalorder %s173, %s187
      %p189 = scmp.eq.s32.totalorder %s32, 0
      %p190 = por %p188, %p189
      %s192 = sadd.s32 %s191, 1
      %p195 = scmp.eq.s32.totalorder %s26, 1
      %p196 = scmp.ne.s32.totalorder %s191, %s193
      %p197 = scmp.eq.s32.totalorder %s26, 0
      %p198 = por %p196, %p197
      %p199 = scmp.ne.s32.totalorder %s191, %s193
      %p200 = scmp.eq.s32.totalorder %s31, 1
      %p201 = por %p199, %p200
      %p202 = scmp.ne.s32.totalorder %s193, %s194
      %p203 = scmp.eq.s32.totalorder %s31, 0
      %p204 = por %p202, %p203
      %p205 = scmp.ne.s32.totalorder %s193, %s194
      %p206 = scmp.eq.s32.totalorder %s32, 1
      %p207 = por %p205, %p206
      %p209 = scmp.ne.s32.totalorder %s194, %s208
      %p210 = scmp.eq.s32.totalorder %s32, 0
      %p211 = por %p209, %p210
      %s213 = sadd.s32 %s212, 1
      %p216 = scmp.eq.s32.totalorder %s26, 1
      %p217 = scmp.ne.s32.totalorder %s212, %s214
      %p218 = scmp.eq.s32.totalorder %s26, 0
      %p219 = por %p217, %p218
      %p220 = scmp.ne.s32.totalorder %s212, %s214
      %p221 = scmp.eq.s32.totalorder %s31, 1
      %p222 = por %p220, %p221
      %p223 = scmp.ne.s32.totalorder %s214, %s215
      %p224 = scmp.eq.s32.totalorder %s31, 0
      %p225 = por %p223, %p224
      %p226 = scmp.ne.s32.totalorder %s214, %s215
      %p227 = scmp.eq.s32.totalorder %s32, 1
      %p228 = por %p226, %p227
      %p230 = scmp.ne.s32.totalorder %s215, %s229
      %p231 = scmp.eq.s32.totalorder %s32, 0
      %p232 = por %p230, %p231
      %s234 = sadd.s32 %s233, 1
      %p237 = scmp.eq.s32.totalorder %s26, 1
      %p238 = scmp.ne.s32.totalorder %s233, %s235
      %p239 = scmp.eq.s32.totalorder %s26, 0
      %p240 = por %p238, %p239
      %p241 = scmp.ne.s32.totalorder %s233, %s235
      %p242 = scmp.eq.s32.totalorder %s31, 1
      %p243 = por %p241, %p242
      %p244 = scmp.ne.s32.totalorder %s235, %s236
      %p245 = scmp.eq.s32.totalorder %s31, 0
      %p246 = por %p244, %p245
      %p247 = scmp.ne.s32.totalorder %s235, %s236
      %p248 = scmp.eq.s32.totalorder %s32, 1
      %p249 = por %p247, %p248
      %p251 = scmp.ne.s32.totalorder %s236, %s250
      %p252 = scmp.eq.s32.totalorder %s32, 0
      %p253 = por %p251, %p252
      %s255 = sadd.s32 %s254, 1
      %p258 = scmp.eq.s32.totalorder %s26, 1
      %p259 = scmp.ne.s32.totalorder %s254, %s256
      %p260 = scmp.eq.s32.totalorder %s26, 0
      %p261 = por %p259, %p260
      %p262 = scmp.ne.s32.totalorder %s254, %s256
      %p263 = scmp.eq.s32.totalorder %s31, 1
      %p264 = por %p262, %p263
      %p265 = scmp.ne.s32.totalorder %s256, %s257
      %p266 = scmp.eq.s32.totalorder %s31, 0
      %p267 = por %p265, %p266
      %p268 = scmp.ne.s32.totalorder %s256, %s257
      %p269 = scmp.eq.s32.totalorder %s32, 1
      %p270 = por %p268, %p269
      %p272 = scmp.ne.s32.totalorder %s257, %s271
      %p273 = scmp.eq.s32.totalorder %s32, 0
      %p274 = por %p272, %p273
      %s276 = sadd.s32 %s275, 1
      %p279 = scmp.eq.s32.totalorder %s26, 1
      %p280 = scmp.ne.s32.totalorder %s275, %s277
      %p281 = scmp.eq.s32.totalorder %s26, 0
      %p282 = por %p280, %p281
      %p283 = scmp.ne.s32.totalorder %s275, %s277
      %p284 = scmp.eq.s32.totalorder %s31, 1
      %p285 = por %p283, %p284
      %p286 = scmp.ne.s32.totalorder %s277, %s278
      %p287 = scmp.eq.s32.totalorder %s31, 0
      %p288 = por %p286, %p287
      %p289 = scmp.ne.s32.totalorder %s277, %s278
      %p290 = scmp.eq.s32.totalorder %s32, 1
      %p291 = por %p289, %p290
      %p293 = scmp.ne.s32.totalorder %s278, %s292
      %p294 = scmp.eq.s32.totalorder %s32, 0
      %p295 = por %p293, %p294
      %s297 = sadd.s32 %s296, 1
      %p300 = scmp.eq.s32.totalorder %s26, 1
      %p301 = scmp.ne.s32.totalorder %s296, %s298
      %p302 = scmp.eq.s32.totalorder %s26, 0
      %p303 = por %p301, %p302
      %p304 = scmp.ne.s32.totalorder %s296, %s298
      %p305 = scmp.eq.s32.totalorder %s31, 1
      %p306 = por %p304, %p305
      %p307 = scmp.ne.s32.totalorder %s298, %s299
      %p308 = scmp.eq.s32.totalorder %s31, 0
      %p309 = por %p307, %p308
      %p310 = scmp.ne.s32.totalorder %s298, %s299
      %p311 = scmp.eq.s32.totalorder %s32, 1
      %p312 = por %p310, %p311
      %p314 = scmp.ne.s32.totalorder %s299, %s313
      %p315 = scmp.eq.s32.totalorder %s32, 0
      %p316 = por %p314, %p315
      %s318 = sadd.s32 %s317, 1
      %p321 = scmp.eq.s32.totalorder %s26, 1
      %p322 = scmp.ne.s32.totalorder %s317, %s319
      %p323 = scmp.eq.s32.totalorder %s26, 0
      %p324 = por %p322, %p323
      %p325 = scmp.ne.s32.totalorder %s317, %s319
      %p326 = scmp.eq.s32.totalorder %s31, 1
      %p327 = por %p325, %p326
      %p328 = scmp.ne.s32.totalorder %s319, %s320
      %p329 = scmp.eq.s32.totalorder %s31, 0
      %p330 = por %p328, %p329
      %p331 = scmp.ne.s32.totalorder %s319, %s320
      %p332 = scmp.eq.s32.totalorder %s32, 1
      %p333 = por %p331, %p332
      %p335 = scmp.ne.s32.totalorder %s320, %s334
      %p336 = scmp.eq.s32.totalorder %s32, 0
      %p337 = por %p335, %p336
      %s339 = sadd.s32 %s338, 1
      %p342 = scmp.eq.s32.totalorder %s26, 1
      %p343 = scmp.ne.s32.totalorder %s338, %s340
      %p344 = scmp.eq.s32.totalorder %s26, 0
      %p345 = por %p343, %p344
      %p346 = scmp.ne.s32.totalorder %s338, %s340
      %p347 = scmp.eq.s32.totalorder %s31, 1
      %p348 = por %p346, %p347
      %p349 = scmp.ne.s32.totalorder %s340, %s341
      %p350 = scmp.eq.s32.totalorder %s31, 0
      %p351 = por %p349, %p350
      %p352 = scmp.ne.s32.totalorder %s340, %s341
      %p353 = scmp.eq.s32.totalorder %s32, 1
      %p354 = por %p352, %p353
      %p356 = scmp.ne.s32.totalorder %s341, %s355
      %p357 = scmp.eq.s32.totalorder %s32, 0
      %p358 = por %p356, %p357
      %s360 = sadd.s32 %s359, 1
      %p363 = scmp.eq.s32.totalorder %s26, 1
      %p364 = scmp.ne.s32.totalorder %s359, %s361
      %p365 = scmp.eq.s32.totalorder %s26, 0
      %p366 = por %p364, %p365
      %p367 = scmp.ne.s32.totalorder %s359, %s361
      %p368 = scmp.eq.s32.totalorder %s31, 1
      %p369 = por %p367, %p368
      %p370 = scmp.ne.s32.totalorder %s361, %s362
      %p371 = scmp.eq.s32.totalorder %s31, 0
      %p372 = por %p370, %p371
      %p373 = scmp.ne.s32.totalorder %s361, %s362
      %p374 = scmp.eq.s32.totalorder %s32, 1
      %p375 = por %p373, %p374
      %p377 = scmp.ne.s32.totalorder %s362, %s376
      %p378 = scmp.eq.s32.totalorder %s32, 0
      %p379 = por %p377, %p378
      %s381 = sadd.s32 %s380, 1
      %p384 = scmp.eq.s32.totalorder %s26, 1
      %p385 = scmp.ne.s32.totalorder %s380, %s382
      %p386 = scmp.eq.s32.totalorder %s26, 0
      %p387 = por %p385, %p386
      %p388 = scmp.ne.s32.totalorder %s380, %s382
      %p389 = scmp.eq.s32.totalorder %s31, 1
      %p390 = por %p388, %p389
      %p391 = scmp.ne.s32.totalorder %s382, %s383
      %p392 = scmp.eq.s32.totalorder %s31, 0
      %p393 = por %p391, %p392
      %p394 = scmp.ne.s32.totalorder %s382, %s383
      %p395 = scmp.eq.s32.totalorder %s32, 1
      %p396 = por %p394, %p395
      %p398 = scmp.ne.s32.totalorder %s383, %s397
      %p399 = scmp.eq.s32.totalorder %s32, 0
      %p400 = por %p398, %p399
      %s401 = ssub.s32 %s26, %s33
      %p402 = scmp.eq.s32.totalorder %s401, 0
      %s404 = sadd.s32 %s403, 1
      %s405 = scalar_select %p402, %s403, %s404
      %p408 = pneg %p402
      %p409 = scmp.eq.s32.totalorder %s26, 1
      %p410 = por %p408, %p409
      %p411 = scmp.ne.s32.totalorder %s403, %s406
      %p412 = scmp.eq.s32.totalorder %s26, 0
      %p413 = por %p411, %p412
      %p414 = scmp.ne.s32.totalorder %s403, %s406
      %p415 = scmp.eq.s32.totalorder %s31, 1
      %p416 = por %p414, %p415
      %p417 = scmp.ne.s32.totalorder %s406, %s407
      %p418 = scmp.eq.s32.totalorder %s31, 0
      %p419 = por %p417, %p418
      %p420 = scmp.ne.s32.totalorder %s406, %s407
      %p421 = scmp.eq.s32.totalorder %s32, 1
      %p422 = por %p420, %p421
      %p424 = scmp.ne.s32.totalorder %s407, %s423
      %p425 = scmp.eq.s32.totalorder %s32, 0
      %p426 = por %p424, %p425
      %p427 = scmp.le.s32.totalorder 1, %s26
      %p428 = scmp.lt.s32.totalorder %s26, 3
      %p429 = pnand %p427, %p428
      %p430 = pneg %p429
      // Predicated region
      $region9: #{t5_forward.1} parent=5 // pred_check
        _
      $region10: #{t5_forward.1} parent=5 // pred_check_branch
        %432 = sbr.rel (%p429) target = $region12
      $region11: #{t5_forward.1} parent=5 // pred_region
        %s433 = ssub.s32 %s26, 1
        // Predicated region
        $region13: #{t5_forward.1} parent=11 // pred_check
          %p434 = pneg %p99
        $region14: #{t5_forward.1} parent=11 // pred_check_branch
          %436 = sbr.rel (%p434) target = $region16
        $region15: #{t5_forward.1} parent=11 // pred_region
          _
        $region16: #{t5_forward.1} parent=11 // pred_fallthru
          _
        // Predicated region
        $region17: #{t5_forward.1} parent=11 // pred_check
          %p437 = pneg %p120
        $region18: #{t5_forward.1} parent=11 // pred_check_branch
          %439 = sbr.rel (%p437) target = $region20
        $region19: #{t5_forward.1} parent=11 // pred_region
          _
        $region20: #{t5_forward.1} parent=11 // pred_fallthru
          _
        // Predicated region
        $region21: #{t5_forward.1} parent=11 // pred_check
          %p440 = pneg %p141
        $region22: #{t5_forward.1} parent=11 // pred_check_branch
          %442 = sbr.rel (%p440) target = $region24
        $region23: #{t5_forward.1} parent=11 // pred_region
          _
        $region24: #{t5_forward.1} parent=11 // pred_fallthru
          _
        // Predicated region
        $region25: #{t5_forward.1} parent=11 // pred_check
          %p443 = pneg %p162
        $region26: #{t5_forward.1} parent=11 // pred_check_branch
          %445 = sbr.rel (%p443) target = $region28
        $region27: #{t5_forward.1} parent=11 // pred_region
          _
        $region28: #{t5_forward.1} parent=11 // pred_fallthru
          _
        // Predicated region
        $region29: #{t5_forward.1} parent=11 // pred_check
          %p446 = pneg %p183
        $region30: #{t5_forward.1} parent=11 // pred_check_branch
          %448 = sbr.rel (%p446) target = $region32
        $region31: #{t5_forward.1} parent=11 // pred_region
          _
        $region32: #{t5_forward.1} parent=11 // pred_fallthru
          _
        // Predicated region
        $region33: #{t5_forward.1} parent=11 // pred_check
          %p449 = pneg %p204
        $region34: #{t5_forward.1} parent=11 // pred_check_branch
          %451 = sbr.rel (%p449) target = $region36
        $region35: #{t5_forward.1} parent=11 // pred_region
          _
        $region36: #{t5_forward.1} parent=11 // pred_fallthru
          _
        // Predicated region
        $region37: #{t5_forward.1} parent=11 // pred_check
          %p452 = pneg %p225
        $region38: #{t5_forward.1} parent=11 // pred_check_branch
          %454 = sbr.rel (%p452) target = $region40
        $region39: #{t5_forward.1} parent=11 // pred_region
          _
        $region40: #{t5_forward.1} parent=11 // pred_fallthru
          _
        // Predicated region
        $region41: #{t5_forward.1} parent=11 // pred_check
          %p455 = pneg %p246
        $region42: #{t5_forward.1} parent=11 // pred_check_branch
          %457 = sbr.rel (%p455) target = $region44
        $region43: #{t5_forward.1} parent=11 // pred_region
          _
        $region44: #{t5_forward.1} parent=11 // pred_fallthru
          _
        // Predicated region
        $region45: #{t5_forward.1} parent=11 // pred_check
          %p458 = pneg %p267
        $region46: #{t5_forward.1} parent=11 // pred_check_branch
          %460 = sbr.rel (%p458) target = $region48
        $region47: #{t5_forward.1} parent=11 // pred_region
          _
        $region48: #{t5_forward.1} parent=11 // pred_fallthru
          _
        // Predicated region
        $region49: #{t5_forward.1} parent=11 // pred_check
          %p461 = pneg %p288
        $region50: #{t5_forward.1} parent=11 // pred_check_branch
          %463 = sbr.rel (%p461) target = $region52
        $region51: #{t5_forward.1} parent=11 // pred_region
          _
        $region52: #{t5_forward.1} parent=11 // pred_fallthru
          _
        // Predicated region
        $region53: #{t5_forward.1} parent=11 // pred_check
          %p464 = pneg %p309
        $region54: #{t5_forward.1} parent=11 // pred_check_branch
          %466 = sbr.rel (%p464) target = $region56
        $region55: #{t5_forward.1} parent=11 // pred_region
          _
        $region56: #{t5_forward.1} parent=11 // pred_fallthru
          _
        // Predicated region
        $region57: #{t5_forward.1} parent=11 // pred_check
          %p467 = pneg %p330
        $region58: #{t5_forward.1} parent=11 // pred_check_branch
          %469 = sbr.rel (%p467) target = $region60
        $region59: #{t5_forward.1} parent=11 // pred_region
          _
        $region60: #{t5_forward.1} parent=11 // pred_fallthru
          _
        // Predicated region
        $region61: #{t5_forward.1} parent=11 // pred_check
          %p470 = pneg %p351
        $region62: #{t5_forward.1} parent=11 // pred_check_branch
          %472 = sbr.rel (%p470) target = $region64
        $region63: #{t5_forward.1} parent=11 // pred_region
          _
        $region64: #{t5_forward.1} parent=11 // pred_fallthru
          _
        // Predicated region
        $region65: #{t5_forward.1} parent=11 // pred_check
          %p473 = pneg %p372
        $region66: #{t5_forward.1} parent=11 // pred_check_branch
          %475 = sbr.rel (%p473) target = $region68
        $region67: #{t5_forward.1} parent=11 // pred_region
          _
        $region68: #{t5_forward.1} parent=11 // pred_fallthru
          _
        // Predicated region
        $region69: #{t5_forward.1} parent=11 // pred_check
          %p476 = pneg %p393
        $region70: #{t5_forward.1} parent=11 // pred_check_branch
          %478 = sbr.rel (%p476) target = $region72
        $region71: #{t5_forward.1} parent=11 // pred_region
          _
        $region72: #{t5_forward.1} parent=11 // pred_fallthru
          _
      $region12: #{t5_forward.1} parent=5 // pred_fallthru
        _
      %p479 = scmp.lt.s32.totalorder %s26, 2
      // Predicated region
      $region73: #{t5_forward.1} parent=5 // pred_check
        %p480 = pneg %p479
      $region74: #{t5_forward.1} parent=5 // pred_check_branch
        %482 = sbr.rel (%p480) target = $region76
      $region75: #{t5_forward.1} parent=5 // pred_region
        // Predicated region
        $region77: #{t5_forward.1} parent=75 // pred_check
          %p483 = pneg %p46
        $region78: #{t5_forward.1} parent=75 // pred_check_branch
          %485 = sbr.rel (%p483) target = $region80
        $region79: #{t5_forward.1} parent=75 // pred_region
          %p486 = scmp.lt.s32.totalorder %s26, 1
          %s487 = scalar_select %p486, %s26, 1
          %s488 = smul.addr %s487, 8
          %s489 = scalar_lea.vmem %s0, %s488
        $region80: #{t5_forward.1} parent=75 // pred_fallthru
          _
        // Predicated region
        $region81: #{t5_forward.1} parent=75 // pred_check
          %p490 = pneg %p72
        $region82: #{t5_forward.1} parent=75 // pred_check_branch
          %492 = sbr.rel (%p490) target = $region84
        $region83: #{t5_forward.1} parent=75 // pred_region
          %p493 = scmp.lt.s32.totalorder %s26, 1
          %s494 = scalar_select %p493, %s26, 1
          %s495 = smul.addr %s494, 8
          %s496 = scalar_lea.vmem %s1, %s495
        $region84: #{t5_forward.1} parent=75 // pred_fallthru
          _
      $region76: #{t5_forward.1} parent=5 // pred_fallthru
        _
      %p497 = scmp.le.s32.totalorder 1, %s26
      %p498 = scmp.lt.s32.totalorder %s26, 3
      %p499 = pnand %p497, %p498
      %p500 = pneg %p499
      // Predicated region
      $region85: #{t5_forward.1} parent=5 // pred_check
        _
      $region86: #{t5_forward.1} parent=5 // pred_check_branch
        %502 = sbr.rel (%p499) target = $region88
      $region87: #{t5_forward.1} parent=5 // pred_region
        %s503 = ssub.s32 %s26, 1
        %p504 = scmp.lt.s32.totalorder %s31, 1
        %s505 = scalar_select %p504, %s31, 1
        %s506 = smul.addr %s505, 8
        %s507 = scalar_lea.vmem %s0, %s506
        %p508 = pneg %p52
        %p509 = pneg %p49
        %p510 = scmp.lt.s32.totalorder %s31, 1
        %s511 = scalar_select %p510, %s31, 1
        %s512 = smul.addr %s511, 8
        %s513 = scalar_lea.vmem %s1, %s512
        %p514 = pneg %p78
        %p515 = pneg %p75
        %p516 = pneg %p99
        %p517 = pneg %p96
        %p518 = pneg %p120
        %p519 = pneg %p117
        %p520 = pneg %p141
        %p521 = pneg %p138
        %p522 = pneg %p162
        %p523 = pneg %p159
        %p524 = pneg %p183
        %p525 = pneg %p180
        %p526 = pneg %p204
        %p527 = pneg %p201
        %p528 = pneg %p225
        %p529 = pneg %p222
        %p530 = pneg %p246
        %p531 = pneg %p243
        %p532 = pneg %p267
        %p533 = pneg %p264
        %p534 = pneg %p288
        %p535 = pneg %p285
        %p536 = pneg %p309
        %p537 = pneg %p306
        %p538 = pneg %p330
        %p539 = pneg %p327
        %p540 = pneg %p351
        %p541 = pneg %p348
        %p542 = pneg %p372
        %p543 = pneg %p369
        %p544 = pneg %p393
        %p545 = pneg %p390
        %p546 = pneg %p419
        %p547 = pneg %p416
        %s548 = sand.u32 %s406, 1
        %s549 = scalar_lea.sflag [#allocation3], %s548
        %s550 = sand.u32 %s406, 1
        %s551 = smul.addr %s550, 8
        %s552 = scalar_lea.vmem [#allocation2], %s551
        %p553 = scmp.lt.s32.totalorder %s31, 1
        %s554 = scalar_select %p553, %s31, 1
        %s555 = smul.addr %s554, 8
        %s556 = scalar_lea.vmem %s0, %s555
        %p557 = scmp.lt.s32.totalorder %s31, 1
        %s558 = scalar_select %p557, %s31, 1
        %s559 = smul.addr %s558, 8
        %s560 = scalar_lea.vmem %s1, %s559
        %v561 = vld [vmem:[%s2] sm:$0xff]
        %v562 = vld [vmem:[%s2 + $0x8] sm:$0xff]
        %v563 = vld [vmem:[%s2 + $0x10] sm:$0xff]
        %v564 = vld [vmem:[%s2 + $0x18] sm:$0xff]
        %v565 = vld [vmem:[%s2 + $0x20] sm:$0xff]
        %v566 = vld [vmem:[%s2 + $0x28] sm:$0xff]
        %v567 = vld [vmem:[%s2 + $0x30] sm:$0xff]
        %v568 = vld [vmem:[%s2 + $0x38] sm:$0xff]
        %v569 = vld [vmem:[%s556] sm:$0xff]
        %v570 = vlaneseq
        %v571 = vand.u32 %v570, 127
        %572 = vset.pattern.permute.xlu0 0
        %573 = vperm.xlu0 %572, %v569
        %v574 = vpop.permute.xlu0 %573
        %vm575 = vcmp.eq.s32.totalorder %v574, %v571
        %v576 = vsel %vm575, 1.0, 0.0
        %vm577 = vcmask 523264
        %v579 = vsel %vm577, %v576, 0
        %581 = vmatpush.msra.mxu0 0.0
        %582 = vmatpush.msra.mxu0 0.0
        %583 = vmatpush.msra.mxu0 0.0
        %584 = vmatpush.msra.mxu0 0.0
        %585 = vmatpush.msra.mxu0 0.0
        %586 = vmatpush.msra.mxu0 0.0
        %587 = vmatpush.msra.mxu0 0.0
        %588 = vmatpush.msra.mxu0 0.0
        %589 = vmatpush.msra.mxu0 %v568
        %590 = vmatpush.msra.mxu0 %v567
        %591 = vmatpush.msra.mxu0 %v566
        %592 = vmatpush.msra.mxu0 %v565
        %593 = vmatpush.msra.mxu0 %v564
        %594 = vmatpush.msra.mxu0 %v563
        %595 = vmatpush.msra.mxu0 %v562
        %596 = vmatpush.msra.mxu0 %v561
        %597 = vmatmul.f32.gmra.mxu0 %v579
        %v598 = vpop.f32.mrf.mxu0
        %v599 = vadd.f32 0.0, %v598
        %600 = vdwg.mxu0
        %v601 = vld [vmem:[%s3] sm:$0xff]
        %v602 = vld [vmem:[%s3 + $0x8] sm:$0xff]
        %v603 = vld [vmem:[%s3 + $0x10] sm:$0xff]
        %v604 = vld [vmem:[%s3 + $0x18] sm:$0xff]
        %vm605 = vcmask 261120
        %v607 = vsel %vm605, %v599, 0
        %609 = vmatpush.msra.mxu0 0.0
        %610 = vmatpush.msra.mxu0 0.0
        %611 = vmatpush.msra.mxu0 0.0
        %612 = vmatpush.msra.mxu0 0.0
        %613 = vmatpush.msra.mxu0 0.0
        %614 = vmatpush.msra.mxu0 0.0
        %615 = vmatpush.msra.mxu0 0.0
        %616 = vmatpush.msra.mxu0 0.0
        %617 = vmatpush.msra.mxu0 0.0
        %618 = vmatpush.msra.mxu0 0.0
        %619 = vmatpush.msra.mxu0 0.0
        %620 = vmatpush.msra.mxu0 0.0
        %621 = vmatpush.msra.mxu0 %v604
        %622 = vmatpush.msra.mxu0 %v603
        %623 = vmatpush.msra.mxu0 %v602
        %624 = vmatpush.msra.mxu0 %v601
        %625 = vmatmul.f32.gmra.mxu0 %v607
        %v626 = vpop.f32.mrf.mxu0
        %v627 = vadd.f32 0.0, %v626
        %628 = vdwg.mxu0
        %v629 = vmul.f32 %v627, 0.25
        %631 = vrot.lane.b32.xlu0 %v627, 96
        %v632 = vpop.permute.xlu0 %631
        %vm633 = vcmask 130048
        %v635 = vsel %vm633, %v629, 0
        %v637 = vsel %vm633, %v632, 0
        %639 = vmatpush.xpose.msra.mxu0 0.0
        %640 = vmatpush.xpose.msra.mxu0 0.0
        %641 = vmatpush.xpose.msra.mxu0 0.0
        %642 = vmatpush.xpose.msra.mxu0 0.0
        %643 = vmatpush.xpose.msra.mxu0 0.0
        %644 = vmatpush.xpose.msra.mxu0 0.0
        %645 = vmatpush.xpose.msra.mxu0 0.0
        %646 = vmatpush.xpose.msra.mxu0 0.0
        %647 = vmatpush.xpose.msra.mxu0 0.0
        %648 = vmatpush.xpose.msra.mxu0 0.0
        %649 = vmatpush.xpose.msra.mxu0 0.0
        %650 = vmatpush.xpose.msra.mxu0 0.0
        %651 = vmatpush.xpose.msra.mxu0 0.0
        %652 = vmatpush.xpose.msra.mxu0 0.0
        %653 = vmatpush.xpose.msra.mxu0 0.0
        %654 = vmatpush.xpose.msra.mxu0 %v637
        %655 = vmatmul.f32.gmra.mxu0 %v635
        %v656 = vpop.f32.mrf.mxu0
        %v657 = vadd.f32 0.0, %v656
        %658 = vdwg.mxu0
        %vm659 = vcmask 64512
        %v660 = vsel %vm659, %v657, -inf
        %661 = vmax.xlane.f32.xlu0 %v660
        %v662 = vpop.xlane.xlu0 %661
        %v663 = vsub.f32 %v657, %v662
        %v664 = vmul.f32 %v663, 1.442695
        %v665 = vpow.pop %v664
        %v666 = vsel %vm659, %v665, 0.0
        %667 = vadd.xlane.f32.xlu0 %v666
        %v668 = vpop.xlane.xlu0 %667
        %v669 = vrcp.pop %v668
        %v670 = vmul.f32 %v665, %v669
        %671 = vrot.lane.b32.xlu0 %v627, 64
        %v672 = vpop.permute.xlu0 %671
        %v675 = vsel %vm659, %v670, 0
        %677 = vmatpush.msra.mxu0 0.0
        %678 = vmatpush.msra.mxu0 0.0
        %679 = vmatpush.msra.mxu0 0.0
        %680 = vmatpush.msra.mxu0 0.0
        %681 = vmatpush.msra.mxu0 0.0
        %682 = vmatpush.msra.mxu0 0.0
        %683 = vmatpush.msra.mxu0 0.0
        %684 = vmatpush.msra.mxu0 0.0
        %685 = vmatpush.msra.mxu0 0.0
        %686 = vmatpush.msra.mxu0 0.0
        %687 = vmatpush.msra.mxu0 0.0
        %688 = vmatpush.msra.mxu0 0.0
        %689 = vmatpush.msra.mxu0 0.0
        %690 = vmatpush.msra.mxu0 0.0
        %691 = vmatpush.msra.mxu0 0.0
        %692 = vmatpush.msra.mxu0 %v672
        %693 = vmatmul.f32.gmra.mxu0 %v675
        %v694 = vpop.f32.mrf.mxu0
        %v695 = vadd.f32 0.0, %v694
        %696 = vdwg.mxu0
        %697 = vrot.lane.b32.xlu0 %v629, 112
        %v698 = vpop.permute.xlu0 %697
        %699 = vrot.lane.b32.xlu0 %v627, 80
        %v700 = vpop.permute.xlu0 %699
        %v701 = vsel %vm633, %v698, 0
        %v703 = vsel %vm633, %v700, 0
        %705 = vmatpush.xpose.msra.mxu0 0.0
        %706 = vmatpush.xpose.msra.mxu0 0.0
        %707 = vmatpush.xpose.msra.mxu0 0.0
        %708 = vmatpush.xpose.msra.mxu0 0.0
        %709 = vmatpush.xpose.msra.mxu0 0.0
        %710 = vmatpush.xpose.msra.mxu0 0.0
        %711 = vmatpush.xpose.msra.mxu0 0.0
        %712 = vmatpush.xpose.msra.mxu0 0.0
        %713 = vmatpush.xpose.msra.mxu0 0.0
        %714 = vmatpush.xpose.msra.mxu0 0.0
        %715 = vmatpush.xpose.msra.mxu0 0.0
        %716 = vmatpush.xpose.msra.mxu0 0.0
        %717 = vmatpush.xpose.msra.mxu0 0.0
        %718 = vmatpush.xpose.msra.mxu0 0.0
        %719 = vmatpush.xpose.msra.mxu0 0.0
        %720 = vmatpush.xpose.msra.mxu0 %v703
        %721 = vmatmul.f32.gmra.mxu0 %v701
        %v722 = vpop.f32.mrf.mxu0
        %v723 = vadd.f32 0.0, %v722
        %724 = vdwg.mxu0
        %v725 = vsel %vm659, %v723, -inf
        %726 = vmax.xlane.f32.xlu0 %v725
        %v727 = vpop.xlane.xlu0 %726
        %v728 = vsub.f32 %v723, %v727
        %v729 = vmul.f32 %v728, 1.442695
        %v730 = vpow.pop %v729
        %v731 = vsel %vm659, %v730, 0.0
        %732 = vadd.xlane.f32.xlu0 %v731
        %v733 = vpop.xlane.xlu0 %732
        %v734 = vrcp.pop %v733
        %v735 = vmul.f32 %v730, %v734
        %736 = vrot.lane.b32.xlu0 %v627, 48
        %v737 = vpop.permute.xlu0 %736
        %v740 = vsel %vm659, %v735, 0
        %742 = vmatpush.msra.mxu0 0.0
        %743 = vmatpush.msra.mxu0 0.0
        %744 = vmatpush.msra.mxu0 0.0
        %745 = vmatpush.msra.mxu0 0.0
        %746 = vmatpush.msra.mxu0 0.0
        %747 = vmatpush.msra.mxu0 0.0
        %748 = vmatpush.msra.mxu0 0.0
        %749 = vmatpush.msra.mxu0 0.0
        %750 = vmatpush.msra.mxu0 0.0
        %751 = vmatpush.msra.mxu0 0.0
        %752 = vmatpush.msra.mxu0 0.0
        %753 = vmatpush.msra.mxu0 0.0
        %754 = vmatpush.msra.mxu0 0.0
        %755 = vmatpush.msra.mxu0 0.0
        %756 = vmatpush.msra.mxu0 0.0
        %757 = vmatpush.msra.mxu0 %v737
        %758 = vmatmul.f32.gmra.mxu0 %v740
        %v759 = vpop.f32.mrf.mxu0
        %v760 = vadd.f32 0.0, %v759
        %761 = vdwg.mxu0
        %763 = vrot.lane.b32.xlu0 %v760, 16
        %v764 = vpop.permute.xlu0 %763
        %v766 = vsel %vm633, %v695, %v764
        %v767 = vld [vmem:[%s4] sm:$0xff]
        %v768 = vld [vmem:[%s4 + $0x8] sm:$0xff]
        %v769 = vld [vmem:[%s4 + $0x10] sm:$0xff]
        %v770 = vld [vmem:[%s4 + $0x18] sm:$0xff]
        %v772 = vsel %vm605, %v766, 0
        %774 = vmatpush.msra.mxu0 0.0
        %775 = vmatpush.msra.mxu0 0.0
        %776 = vmatpush.msra.mxu0 0.0
        %777 = vmatpush.msra.mxu0 0.0
        %778 = vmatpush.msra.mxu0 0.0
        %779 = vmatpush.msra.mxu0 0.0
        %780 = vmatpush.msra.mxu0 0.0
        %781 = vmatpush.msra.mxu0 0.0
        %782 = vmatpush.msra.mxu0 0.0
        %783 = vmatpush.msra.mxu0 0.0
        %784 = vmatpush.msra.mxu0 0.0
        %785 = vmatpush.msra.mxu0 0.0
        %786 = vmatpush.msra.mxu0 %v770
        %787 = vmatpush.msra.mxu0 %v769
        %788 = vmatpush.msra.mxu0 %v768
        %789 = vmatpush.msra.mxu0 %v767
        %790 = vmatmul.f32.gmra.mxu0 %v772
        %v791 = vpop.f32.mrf.mxu0
        %v792 = vadd.f32 %v599, %v791
        %793 = vdwg.mxu0
        %v794 = vld [vmem:[%s5] sm:$0xff]
        %v795 = vld [vmem:[%s5 + $0x8] sm:$0xff]
        %v796 = vld [vmem:[%s5 + $0x10] sm:$0xff]
        %v797 = vld [vmem:[%s5 + $0x18] sm:$0xff]
        %v799 = vsel %vm605, %v792, 0
        %801 = vmatpush.msra.mxu0 0.0
        %802 = vmatpush.msra.mxu0 0.0
        %803 = vmatpush.msra.mxu0 0.0
        %804 = vmatpush.msra.mxu0 0.0
        %805 = vmatpush.msra.mxu0 0.0
        %806 = vmatpush.msra.mxu0 0.0
        %807 = vmatpush.msra.mxu0 0.0
        %808 = vmatpush.msra.mxu0 0.0
        %809 = vmatpush.msra.mxu0 0.0
        %810 = vmatpush.msra.mxu0 0.0
        %811 = vmatpush.msra.mxu0 0.0
        %812 = vmatpush.msra.mxu0 0.0
        %813 = vmatpush.msra.mxu0 %v797
        %814 = vmatpush.msra.mxu0 %v796
        %815 = vmatpush.msra.mxu0 %v795
        %816 = vmatpush.msra.mxu0 %v794
        %817 = vmatmul.f32.gmra.mxu0 %v799
        %v818 = vpop.f32.mrf.mxu0
        %v819 = vadd.f32 0.0, %v818
        %820 = vdwg.mxu0
        %v821 = vmax.f32 %v819, 0.0
        %v822 = vld [vmem:[%s6] sm:$0xff]
        %v823 = vld [vmem:[%s6 + $0x8] sm:$0xff]
        %v824 = vld [vmem:[%s6 + $0x10] sm:$0xff]
        %v825 = vld [vmem:[%s6 + $0x18] sm:$0xff]
        %v826 = vld [vmem:[%s6 + $0x20] sm:$0xff]
        %v827 = vld [vmem:[%s6 + $0x28] sm:$0xff]
        %v828 = vld [vmem:[%s6 + $0x30] sm:$0xff]
        %v829 = vld [vmem:[%s6 + $0x38] sm:$0xff]
        %v830 = vld [vmem:[%s6 + $0x40] sm:$0xff]
        %v831 = vld [vmem:[%s6 + $0x48] sm:$0xff]
        %v832 = vld [vmem:[%s6 + $0x50] sm:$0xff]
        %v833 = vld [vmem:[%s6 + $0x58] sm:$0xff]
        %v834 = vld [vmem:[%s6 + $0x60] sm:$0xff]
        %v835 = vld [vmem:[%s6 + $0x68] sm:$0xff]
        %v836 = vld [vmem:[%s6 + $0x70] sm:$0xff]
        %v837 = vld [vmem:[%s6 + $0x78] sm:$0xff]
        %838 = vmatpush.msra.mxu0 %v837
        %839 = vmatpush.msra.mxu0 %v836
        %840 = vmatpush.msra.mxu0 %v835
        %841 = vmatpush.msra.mxu0 %v834
        %842 = vmatpush.msra.mxu0 %v833
        %843 = vmatpush.msra.mxu0 %v832
        %844 = vmatpush.msra.mxu0 %v831
        %845 = vmatpush.msra.mxu0 %v830
        %846 = vmatpush.msra.mxu0 %v829
        %847 = vmatpush.msra.mxu0 %v828
        %848 = vmatpush.msra.mxu0 %v827
        %849 = vmatpush.msra.mxu0 %v826
        %850 = vmatpush.msra.mxu0 %v825
        %851 = vmatpush.msra.mxu0 %v824
        %852 = vmatpush.msra.mxu0 %v823
        %853 = vmatpush.msra.mxu0 %v822
        %854 = vmatmul.f32.gmra.mxu0 %v821
        %v855 = vpop.f32.mrf.mxu0
        %v856 = vadd.f32 %v792, %v855
        %857 = vdwg.mxu0
        %s858 = scalar_lea.vmem %s3, 32
        %v859 = vld [vmem:[%s858] sm:$0xff]
        %v860 = vld [vmem:[%s858 + $0x8] sm:$0xff]
        %v861 = vld [vmem:[%s858 + $0x10] sm:$0xff]
        %v862 = vld [vmem:[%s858 + $0x18] sm:$0xff]
        %v864 = vsel %vm605, %v856, 0
        %866 = vmatpush.msra.mxu0 0.0
        %867 = vmatpush.msra.mxu0 0.0
        %868 = vmatpush.msra.mxu0 0.0
        %869 = vmatpush.msra.mxu0 0.0
        %870 = vmatpush.msra.mxu0 0.0
        %871 = vmatpush.msra.mxu0 0.0
        %872 = vmatpush.msra.mxu0 0.0
        %873 = vmatpush.msra.mxu0 0.0
        %874 = vmatpush.msra.mxu0 0.0
        %875 = vmatpush.msra.mxu0 0.0
        %876 = vmatpush.msra.mxu0 0.0
        %877 = vmatpush.msra.mxu0 0.0
        %878 = vmatpush.msra.mxu0 %v862
        %879 = vmatpush.msra.mxu0 %v861
        %880 = vmatpush.msra.mxu0 %v860
        %881 = vmatpush.msra.mxu0 %v859
        %882 = vmatmul.f32.gmra.mxu0 %v864
        %v883 = vpop.f32.mrf.mxu0
        %v884 = vadd.f32 0.0, %v883
        %885 = vdwg.mxu0
        %v886 = vmul.f32 %v884, 0.25
        %888 = vrot.lane.b32.xlu0 %v884, 96
        %v889 = vpop.permute.xlu0 %888
        %v891 = vsel %vm633, %v886, 0
        %v893 = vsel %vm633, %v889, 0
        %895 = vmatpush.xpose.msra.mxu0 0.0
        %896 = vmatpush.xpose.msra.mxu0 0.0
        %897 = vmatpush.xpose.msra.mxu0 0.0
        %898 = vmatpush.xpose.msra.mxu0 0.0
        %899 = vmatpush.xpose.msra.mxu0 0.0
        %900 = vmatpush.xpose.msra.mxu0 0.0
        %901 = vmatpush.xpose.msra.mxu0 0.0
        %902 = vmatpush.xpose.msra.mxu0 0.0
        %903 = vmatpush.xpose.msra.mxu0 0.0
        %904 = vmatpush.xpose.msra.mxu0 0.0
        %905 = vmatpush.xpose.msra.mxu0 0.0
        %906 = vmatpush.xpose.msra.mxu0 0.0
        %907 = vmatpush.xpose.msra.mxu0 0.0
        %908 = vmatpush.xpose.msra.mxu0 0.0
        %909 = vmatpush.xpose.msra.mxu0 0.0
        %910 = vmatpush.xpose.msra.mxu0 %v893
        %911 = vmatmul.f32.gmra.mxu0 %v891
        %v912 = vpop.f32.mrf.mxu0
        %v913 = vadd.f32 0.0, %v912
        %914 = vdwg.mxu0
        %v915 = vsel %vm659, %v913, -inf
        %916 = vmax.xlane.f32.xlu0 %v915
        %v917 = vpop.xlane.xlu0 %916
        %v918 = vsub.f32 %v913, %v917
        %v919 = vmul.f32 %v918, 1.442695
        %v920 = vpow.pop %v919
        %v921 = vsel %vm659, %v920, 0.0
        %922 = vadd.xlane.f32.xlu0 %v921
        %v923 = vpop.xlane.xlu0 %922
        %v924 = vrcp.pop %v923
        %v925 = vmul.f32 %v920, %v924
        %926 = vrot.lane.b32.xlu0 %v884, 64
        %v927 = vpop.permute.xlu0 %926
        %v930 = vsel %vm659, %v925, 0
        %932 = vmatpush.msra.mxu0 0.0
        %933 = vmatpush.msra.mxu0 0.0
        %934 = vmatpush.msra.mxu0 0.0
        %935 = vmatpush.msra.mxu0 0.0
        %936 = vmatpush.msra.mxu0 0.0
        %937 = vmatpush.msra.mxu0 0.0
        %938 = vmatpush.msra.mxu0 0.0
        %939 = vmatpush.msra.mxu0 0.0
        %940 = vmatpush.msra.mxu0 0.0
        %941 = vmatpush.msra.mxu0 0.0
        %942 = vmatpush.msra.mxu0 0.0
        %943 = vmatpush.msra.mxu0 0.0
        %944 = vmatpush.msra.mxu0 0.0
        %945 = vmatpush.msra.mxu0 0.0
        %946 = vmatpush.msra.mxu0 0.0
        %947 = vmatpush.msra.mxu0 %v927
        %948 = vmatmul.f32.gmra.mxu0 %v930
        %v949 = vpop.f32.mrf.mxu0
        %v950 = vadd.f32 0.0, %v949
        %951 = vdwg.mxu0
        %952 = vrot.lane.b32.xlu0 %v886, 112
        %v953 = vpop.permute.xlu0 %952
        %954 = vrot.lane.b32.xlu0 %v884, 80
        %v955 = vpop.permute.xlu0 %954
        %v956 = vsel %vm633, %v953, 0
        %v958 = vsel %vm633, %v955, 0
        %960 = vmatpush.xpose.msra.mxu0 0.0
        %961 = vmatpush.xpose.msra.mxu0 0.0
        %962 = vmatpush.xpose.msra.mxu0 0.0
        %963 = vmatpush.xpose.msra.mxu0 0.0
        %964 = vmatpush.xpose.msra.mxu0 0.0
        %965 = vmatpush.xpose.msra.mxu0 0.0
        %966 = vmatpush.xpose.msra.mxu0 0.0
        %967 = vmatpush.xpose.msra.mxu0 0.0
        %968 = vmatpush.xpose.msra.mxu0 0.0
        %969 = vmatpush.xpose.msra.mxu0 0.0
        %970 = vmatpush.xpose.msra.mxu0 0.0
        %971 = vmatpush.xpose.msra.mxu0 0.0
        %972 = vmatpush.xpose.msra.mxu0 0.0
        %973 = vmatpush.xpose.msra.mxu0 0.0
        %974 = vmatpush.xpose.msra.mxu0 0.0
        %975 = vmatpush.xpose.msra.mxu0 %v958
        %976 = vmatmul.f32.gmra.mxu0 %v956
        %v977 = vpop.f32.mrf.mxu0
        %v978 = vadd.f32 0.0, %v977
        %979 = vdwg.mxu0
        %v980 = vsel %vm659, %v978, -inf
        %981 = vmax.xlane.f32.xlu0 %v980
        %v982 = vpop.xlane.xlu0 %981
        %v983 = vsub.f32 %v978, %v982
        %v984 = vmul.f32 %v983, 1.442695
        %v985 = vpow.pop %v984
        %v986 = vsel %vm659, %v985, 0.0
        %987 = vadd.xlane.f32.xlu0 %v986
        %v988 = vpop.xlane.xlu0 %987
        %v989 = vrcp.pop %v988
        %v990 = vmul.f32 %v985, %v989
        %991 = vrot.lane.b32.xlu0 %v884, 48
        %v992 = vpop.permute.xlu0 %991
        %v995 = vsel %vm659, %v990, 0
        %997 = vmatpush.msra.mxu0 0.0
        %998 = vmatpush.msra.mxu0 0.0
        %999 = vmatpush.msra.mxu0 0.0
        %1000 = vmatpush.msra.mxu0 0.0
        %1001 = vmatpush.msra.mxu0 0.0
        %1002 = vmatpush.msra.mxu0 0.0
        %1003 = vmatpush.msra.mxu0 0.0
        %1004 = vmatpush.msra.mxu0 0.0
        %1005 = vmatpush.msra.mxu0 0.0
        %1006 = vmatpush.msra.mxu0 0.0
        %1007 = vmatpush.msra.mxu0 0.0
        %1008 = vmatpush.msra.mxu0 0.0
        %1009 = vmatpush.msra.mxu0 0.0
        %1010 = vmatpush.msra.mxu0 0.0
        %1011 = vmatpush.msra.mxu0 0.0
        %1012 = vmatpush.msra.mxu0 %v992
        %1013 = vmatmul.f32.gmra.mxu0 %v995
        %v1014 = vpop.f32.mrf.mxu0
        %v1015 = vadd.f32 0.0, %v1014
        %1016 = vdwg.mxu0
        %1018 = vrot.lane.b32.xlu0 %v1015, 16
        %v1019 = vpop.permute.xlu0 %1018
        %v1021 = vsel %vm633, %v950, %v1019
        %s1022 = scalar_lea.vmem %s4, 32
        %v1023 = vld [vmem:[%s1022] sm:$0xff]
        %v1024 = vld [vmem:[%s1022 + $0x8] sm:$0xff]
        %v1025 = vld [vmem:[%s1022 + $0x10] sm:$0xff]
        %v1026 = vld [vmem:[%s1022 + $0x18] sm:$0xff]
        %v1028 = vsel %vm605, %v1021, 0
        %1030 = vmatpush.msra.mxu0 0.0
        %1031 = vmatpush.msra.mxu0 0.0
        %1032 = vmatpush.msra.mxu0 0.0
        %1033 = vmatpush.msra.mxu0 0.0
        %1034 = vmatpush.msra.mxu0 0.0
        %1035 = vmatpush.msra.mxu0 0.0
        %1036 = vmatpush.msra.mxu0 0.0
        %1037 = vmatpush.msra.mxu0 0.0
        %1038 = vmatpush.msra.mxu0 0.0
        %1039 = vmatpush.msra.mxu0 0.0
        %1040 = vmatpush.msra.mxu0 0.0
        %1041 = vmatpush.msra.mxu0 0.0
        %1042 = vmatpush.msra.mxu0 %v1026
        %1043 = vmatpush.msra.mxu0 %v1025
        %1044 = vmatpush.msra.mxu0 %v1024
        %1045 = vmatpush.msra.mxu0 %v1023
        %1046 = vmatmul.f32.gmra.mxu0 %v1028
        %v1047 = vpop.f32.mrf.mxu0
        %v1048 = vadd.f32 %v856, %v1047
        %1049 = vdwg.mxu0
        %s1050 = scalar_lea.vmem %s5, 32
        %v1051 = vld [vmem:[%s1050] sm:$0xff]
        %v1052 = vld [vmem:[%s1050 + $0x8] sm:$0xff]
        %v1053 = vld [vmem:[%s1050 + $0x10] sm:$0xff]
        %v1054 = vld [vmem:[%s1050 + $0x18] sm:$0xff]
        %v1056 = vsel %vm605, %v1048, 0
        %1058 = vmatpush.msra.mxu0 0.0
        %1059 = vmatpush.msra.mxu0 0.0
        %1060 = vmatpush.msra.mxu0 0.0
        %1061 = vmatpush.msra.mxu0 0.0
        %1062 = vmatpush.msra.mxu0 0.0
        %1063 = vmatpush.msra.mxu0 0.0
        %1064 = vmatpush.msra.mxu0 0.0
        %1065 = vmatpush.msra.mxu0 0.0
        %1066 = vmatpush.msra.mxu0 0.0
        %1067 = vmatpush.msra.mxu0 0.0
        %1068 = vmatpush.msra.mxu0 0.0
        %1069 = vmatpush.msra.mxu0 0.0
        %1070 = vmatpush.msra.mxu0 %v1054
        %1071 = vmatpush.msra.mxu0 %v1053
        %1072 = vmatpush.msra.mxu0 %v1052
        %1073 = vmatpush.msra.mxu0 %v1051
        %1074 = vmatmul.f32.gmra.mxu0 %v1056
        %v1075 = vpop.f32.mrf.mxu0
        %v1076 = vadd.f32 0.0, %v1075
        %1077 = vdwg.mxu0
        %v1078 = vmax.f32 %v1076, 0.0
        %s1079 = scalar_lea.vmem %s6, 128
        %v1080 = vld [vmem:[%s1079] sm:$0xff]
        %v1081 = vld [vmem:[%s1079 + $0x8] sm:$0xff]
        %v1082 = vld [vmem:[%s1079 + $0x10] sm:$0xff]
        %v1083 = vld [vmem:[%s1079 + $0x18] sm:$0xff]
        %v1084 = vld [vmem:[%s1079 + $0x20] sm:$0xff]
        %v1085 = vld [vmem:[%s1079 + $0x28] sm:$0xff]
        %v1086 = vld [vmem:[%s1079 + $0x30] sm:$0xff]
        %v1087 = vld [vmem:[%s1079 + $0x38] sm:$0xff]
        %v1088 = vld [vmem:[%s1079 + $0x40] sm:$0xff]
        %v1089 = vld [vmem:[%s1079 + $0x48] sm:$0xff]
        %v1090 = vld [vmem:[%s1079 + $0x50] sm:$0xff]
        %v1091 = vld [vmem:[%s1079 + $0x58] sm:$0xff]
        %v1092 = vld [vmem:[%s1079 + $0x60] sm:$0xff]
        %v1093 = vld [vmem:[%s1079 + $0x68] sm:$0xff]
        %v1094 = vld [vmem:[%s1079 + $0x70] sm:$0xff]
        %v1095 = vld [vmem:[%s1079 + $0x78] sm:$0xff]
        %1096 = vmatpush.msra.mxu0 %v1095
        %1097 = vmatpush.msra.mxu0 %v1094
        %1098 = vmatpush.msra.mxu0 %v1093
        %1099 = vmatpush.msra.mxu0 %v1092
        %1100 = vmatpush.msra.mxu0 %v1091
        %1101 = vmatpush.msra.mxu0 %v1090
        %1102 = vmatpush.msra.mxu0 %v1089
        %1103 = vmatpush.msra.mxu0 %v1088
        %1104 = vmatpush.msra.mxu0 %v1087
        %1105 = vmatpush.msra.mxu0 %v1086
        %1106 = vmatpush.msra.mxu0 %v1085
        %1107 = vmatpush.msra.mxu0 %v1084
        %1108 = vmatpush.msra.mxu0 %v1083
        %1109 = vmatpush.msra.mxu0 %v1082
        %1110 = vmatpush.msra.mxu0 %v1081
        %1111 = vmatpush.msra.mxu0 %v1080
        %1112 = vmatmul.f32.gmra.mxu0 %v1078
        %v1113 = vpop.f32.mrf.mxu0
        %v1114 = vadd.f32 %v1048, %v1113
        %1115 = vdwg.mxu0
        %v1116 = vld [vmem:[%s7] sm:$0x1]
        %v1117 = vmul.f32 %v1114, %v1114
        %v1118 = vsel %vm605, %v1117, 0.0
        %1119 = vadd.xlane.f32.xlu0 %v1118
        %v1120 = vpop.xlane.xlu0 %1119
        %v1121 = vrcp.pop 32.0
        %v1122 = vmul.f32 32.0, %v1121
        %v1123 = vsub.f32 1.0, %v1122
        %v1124 = vmul.f32 %v1121, %v1123
        %v1125 = vadd.f32 %v1121, %v1124
        %vm1126 = vweird.f32 %v1121
        %v1127 = vsel %vm1126, %v1121, %v1125
        %v1128 = vmul.f32 %v1120, %v1127
        %v1129 = vadd.f32 %v1128, 1e-06
        %v1130 = vrsqrt.pop %v1129
        %v1131 = vmul.f32 %v1130, %v1129
        %v1132 = vmul.f32 %v1131, %v1130
        %v1133 = vmul.f32 0.5, %v1132
        %v1134 = vsub.f32 1.5, %v1133
        %v1135 = vmul.f32 %v1130, %v1134
        %vm1136 = vweird.f32 %v1129
        %vm1137 = vweird.f32 %v1130
        %vm1138 = vmor %vm1136, %vm1137
        %v1139 = vsel %vm1138, %v1130, %v1135
        %v1140 = vmul.f32 %v1114, %v1139
        %v1142 = vperm.slane %v1116, 0
        %v1144 = vmul.f32 %v1142, %v1140
        %v1145 = vld [vmem:[%s560] sm:$0xff]
        %1146 = vset.pattern.permute.xlu0 0
        %1147 = vperm.xlu0 %1146, %v1145
        %v1148 = vpop.permute.xlu0 %1147
        %vm1149 = vcmp.eq.s32.totalorder %v1148, %v571
        %v1150 = vsel %vm1149, 1.0, 0.0
        %v1152 = vsel %vm577, %v1150, 0
        %1154 = vmatpush.msra.mxu0 0.0
        %1155 = vmatpush.msra.mxu0 0.0
        %1156 = vmatpush.msra.mxu0 0.0
        %1157 = vmatpush.msra.mxu0 0.0
        %1158 = vmatpush.msra.mxu0 0.0
        %1159 = vmatpush.msra.mxu0 0.0
        %1160 = vmatpush.msra.mxu0 0.0
        %1161 = vmatpush.msra.mxu0 0.0
        %1162 = vmatpush.msra.mxu0 %v568
        %1163 = vmatpush.msra.mxu0 %v567
        %1164 = vmatpush.msra.mxu0 %v566
        %1165 = vmatpush.msra.mxu0 %v565
        %1166 = vmatpush.msra.mxu0 %v564
        %1167 = vmatpush.msra.mxu0 %v563
        %1168 = vmatpush.msra.mxu0 %v562
        %1169 = vmatpush.msra.mxu0 %v561
        %1170 = vmatmul.f32.gmra.mxu0 %v1152
        %v1171 = vpop.f32.mrf.mxu0
        %v1172 = vadd.f32 0.0, %v1171
        %1173 = vdwg.mxu0
        %v1174 = vld [vmem:[%s8] sm:$0xff]
        %v1175 = vld [vmem:[%s8 + $0x8] sm:$0xff]
        %v1176 = vld [vmem:[%s8 + $0x10] sm:$0xff]
        %v1177 = vld [vmem:[%s8 + $0x18] sm:$0xff]
        %v1179 = vsel %vm605, %v1172, 0
        %1181 = vmatpush.msra.mxu0 0.0
        %1182 = vmatpush.msra.mxu0 0.0
        %1183 = vmatpush.msra.mxu0 0.0
        %1184 = vmatpush.msra.mxu0 0.0
        %1185 = vmatpush.msra.mxu0 0.0
        %1186 = vmatpush.msra.mxu0 0.0
        %1187 = vmatpush.msra.mxu0 0.0
        %1188 = vmatpush.msra.mxu0 0.0
        %1189 = vmatpush.msra.mxu0 0.0
        %1190 = vmatpush.msra.mxu0 0.0
        %1191 = vmatpush.msra.mxu0 0.0
        %1192 = vmatpush.msra.mxu0 0.0
        %1193 = vmatpush.msra.mxu0 %v1177
        %1194 = vmatpush.msra.mxu0 %v1176
        %1195 = vmatpush.msra.mxu0 %v1175
        %1196 = vmatpush.msra.mxu0 %v1174
        %1197 = vmatmul.f32.gmra.mxu0 %v1179
        %v1198 = vpop.f32.mrf.mxu0
        %v1199 = vadd.f32 0.0, %v1198
        %1200 = vdwg.mxu0
        %v1201 = vmul.f32 %v1199, 0.25
        %1203 = vrot.lane.b32.xlu0 %v1199, 96
        %v1204 = vpop.permute.xlu0 %1203
        %v1206 = vsel %vm633, %v1201, 0
        %v1208 = vsel %vm633, %v1204, 0
        %1210 = vmatpush.xpose.msra.mxu0 0.0
        %1211 = vmatpush.xpose.msra.mxu0 0.0
        %1212 = vmatpush.xpose.msra.mxu0 0.0
        %1213 = vmatpush.xpose.msra.mxu0 0.0
        %1214 = vmatpush.xpose.msra.mxu0 0.0
        %1215 = vmatpush.xpose.msra.mxu0 0.0
        %1216 = vmatpush.xpose.msra.mxu0 0.0
        %1217 = vmatpush.xpose.msra.mxu0 0.0
        %1218 = vmatpush.xpose.msra.mxu0 0.0
        %1219 = vmatpush.xpose.msra.mxu0 0.0
        %1220 = vmatpush.xpose.msra.mxu0 0.0
        %1221 = vmatpush.xpose.msra.mxu0 0.0
        %1222 = vmatpush.xpose.msra.mxu0 0.0
        %1223 = vmatpush.xpose.msra.mxu0 0.0
        %1224 = vmatpush.xpose.msra.mxu0 0.0
        %1225 = vmatpush.xpose.msra.mxu0 %v1208
        %1226 = vmatmul.f32.gmra.mxu0 %v1206
        %v1227 = vpop.f32.mrf.mxu0
        %v1228 = vadd.f32 0.0, %v1227
        %1229 = vdwg.mxu0
        %v1230 = vlaneseq
        %v1231 = vshrl.u32 %v1230, 7
        %vm1232 = vcmp.gt.s32.totalorder %v571, %v1231
        %v1233 = vsel %vm1232, -3.4028235e+38, %v1228
        %v1234 = vsel %vm659, %v1233, -inf
        %1235 = vmax.xlane.f32.xlu0 %v1234
        %v1236 = vpop.xlane.xlu0 %1235
        %v1237 = vsub.f32 %v1233, %v1236
        %v1238 = vmul.f32 %v1237, 1.442695
        %v1239 = vpow.pop %v1238
        %v1240 = vsel %vm659, %v1239, 0.0
        %1241 = vadd.xlane.f32.xlu0 %v1240
        %v1242 = vpop.xlane.xlu0 %1241
        %v1243 = vrcp.pop %v1242
        %v1244 = vmul.f32 %v1239, %v1243
        %1245 = vrot.lane.b32.xlu0 %v1199, 64
        %v1246 = vpop.permute.xlu0 %1245
        %v1249 = vsel %vm659, %v1244, 0
        %1251 = vmatpush.msra.mxu0 0.0
        %1252 = vmatpush.msra.mxu0 0.0
        %1253 = vmatpush.msra.mxu0 0.0
        %1254 = vmatpush.msra.mxu0 0.0
        %1255 = vmatpush.msra.mxu0 0.0
        %1256 = vmatpush.msra.mxu0 0.0
        %1257 = vmatpush.msra.mxu0 0.0
        %1258 = vmatpush.msra.mxu0 0.0
        %1259 = vmatpush.msra.mxu0 0.0
        %1260 = vmatpush.msra.mxu0 0.0
        %1261 = vmatpush.msra.mxu0 0.0
        %1262 = vmatpush.msra.mxu0 0.0
        %1263 = vmatpush.msra.mxu0 0.0
        %1264 = vmatpush.msra.mxu0 0.0
        %1265 = vmatpush.msra.mxu0 0.0
        %1266 = vmatpush.msra.mxu0 %v1246
        %1267 = vmatmul.f32.gmra.mxu0 %v1249
        %v1268 = vpop.f32.mrf.mxu0
        %v1269 = vadd.f32 0.0, %v1268
        %1270 = vdwg.mxu0
        %1271 = vrot.lane.b32.xlu0 %v1201, 112
        %v1272 = vpop.permute.xlu0 %1271
        %1273 = vrot.lane.b32.xlu0 %v1199, 80
        %v1274 = vpop.permute.xlu0 %1273
        %v1275 = vsel %vm633, %v1272, 0
        %v1277 = vsel %vm633, %v1274, 0
        %1279 = vmatpush.xpose.msra.mxu0 0.0
        %1280 = vmatpush.xpose.msra.mxu0 0.0
        %1281 = vmatpush.xpose.msra.mxu0 0.0
        %1282 = vmatpush.xpose.msra.mxu0 0.0
        %1283 = vmatpush.xpose.msra.mxu0 0.0
        %1284 = vmatpush.xpose.msra.mxu0 0.0
        %1285 = vmatpush.xpose.msra.mxu0 0.0
        %1286 = vmatpush.xpose.msra.mxu0 0.0
        %1287 = vmatpush.xpose.msra.mxu0 0.0
        %1288 = vmatpush.xpose.msra.mxu0 0.0
        %1289 = vmatpush.xpose.msra.mxu0 0.0
        %1290 = vmatpush.xpose.msra.mxu0 0.0
        %1291 = vmatpush.xpose.msra.mxu0 0.0
        %1292 = vmatpush.xpose.msra.mxu0 0.0
        %1293 = vmatpush.xpose.msra.mxu0 0.0
        %1294 = vmatpush.xpose.msra.mxu0 %v1277
        %1295 = vmatmul.f32.gmra.mxu0 %v1275
        %v1296 = vpop.f32.mrf.mxu0
        %v1297 = vadd.f32 0.0, %v1296
        %1298 = vdwg.mxu0
        %v1299 = vsel %vm1232, -3.4028235e+38, %v1297
        %v1300 = vsel %vm659, %v1299, -inf
        %1301 = vmax.xlane.f32.xlu0 %v1300
        %v1302 = vpop.xlane.xlu0 %1301
        %v1303 = vsub.f32 %v1299, %v1302
        %v1304 = vmul.f32 %v1303, 1.442695
        %v1305 = vpow.pop %v1304
        %v1306 = vsel %vm659, %v1305, 0.0
        %1307 = vadd.xlane.f32.xlu0 %v1306
        %v1308 = vpop.xlane.xlu0 %1307
        %v1309 = vrcp.pop %v1308
        %v1310 = vmul.f32 %v1305, %v1309
        %1311 = vrot.lane.b32.xlu0 %v1199, 48
        %v1312 = vpop.permute.xlu0 %1311
        %v1315 = vsel %vm659, %v1310, 0
        %1317 = vmatpush.msra.mxu0 0.0
        %1318 = vmatpush.msra.mxu0 0.0
        %1319 = vmatpush.msra.mxu0 0.0
        %1320 = vmatpush.msra.mxu0 0.0
        %1321 = vmatpush.msra.mxu0 0.0
        %1322 = vmatpush.msra.mxu0 0.0
        %1323 = vmatpush.msra.mxu0 0.0
        %1324 = vmatpush.msra.mxu0 0.0
        %1325 = vmatpush.msra.mxu0 0.0
        %1326 = vmatpush.msra.mxu0 0.0
        %1327 = vmatpush.msra.mxu0 0.0
        %1328 = vmatpush.msra.mxu0 0.0
        %1329 = vmatpush.msra.mxu0 0.0
        %1330 = vmatpush.msra.mxu0 0.0
        %1331 = vmatpush.msra.mxu0 0.0
        %1332 = vmatpush.msra.mxu0 %v1312
        %1333 = vmatmul.f32.gmra.mxu0 %v1315
        %v1334 = vpop.f32.mrf.mxu0
        %v1335 = vadd.f32 0.0, %v1334
        %1336 = vdwg.mxu0
        %1338 = vrot.lane.b32.xlu0 %v1335, 16
        %v1339 = vpop.permute.xlu0 %1338
        %v1341 = vsel %vm633, %v1269, %v1339
        %v1342 = vld [vmem:[%s9] sm:$0xff]
        %v1343 = vld [vmem:[%s9 + $0x8] sm:$0xff]
        %v1344 = vld [vmem:[%s9 + $0x10] sm:$0xff]
        %v1345 = vld [vmem:[%s9 + $0x18] sm:$0xff]
        %v1347 = vsel %vm605, %v1341, 0
        %1349 = vmatpush.msra.mxu0 0.0
        %1350 = vmatpush.msra.mxu0 0.0
        %1351 = vmatpush.msra.mxu0 0.0
        %1352 = vmatpush.msra.mxu0 0.0
        %1353 = vmatpush.msra.mxu0 0.0
        %1354 = vmatpush.msra.mxu0 0.0
        %1355 = vmatpush.msra.mxu0 0.0
        %1356 = vmatpush.msra.mxu0 0.0
        %1357 = vmatpush.msra.mxu0 0.0
        %1358 = vmatpush.msra.mxu0 0.0
        %1359 = vmatpush.msra.mxu0 0.0
        %1360 = vmatpush.msra.mxu0 0.0
        %1361 = vmatpush.msra.mxu0 %v1345
        %1362 = vmatpush.msra.mxu0 %v1344
        %1363 = vmatpush.msra.mxu0 %v1343
        %1364 = vmatpush.msra.mxu0 %v1342
        %1365 = vmatmul.f32.gmra.mxu0 %v1347
        %v1366 = vpop.f32.mrf.mxu0
        %v1367 = vadd.f32 %v1172, %v1366
        %1368 = vdwg.mxu0
        %v1369 = vld [vmem:[%s10] sm:$0xff]
        %v1370 = vld [vmem:[%s10 + $0x8] sm:$0xff]
        %v1371 = vld [vmem:[%s10 + $0x10] sm:$0xff]
        %v1372 = vld [vmem:[%s10 + $0x18] sm:$0xff]
        %v1374 = vsel %vm605, %v1367, 0
        %1376 = vmatpush.msra.mxu0 0.0
        %1377 = vmatpush.msra.mxu0 0.0
        %1378 = vmatpush.msra.mxu0 0.0
        %1379 = vmatpush.msra.mxu0 0.0
        %1380 = vmatpush.msra.mxu0 0.0
        %1381 = vmatpush.msra.mxu0 0.0
        %1382 = vmatpush.msra.mxu0 0.0
        %1383 = vmatpush.msra.mxu0 0.0
        %1384 = vmatpush.msra.mxu0 0.0
        %1385 = vmatpush.msra.mxu0 0.0
        %1386 = vmatpush.msra.mxu0 0.0
        %1387 = vmatpush.msra.mxu0 0.0
        %1388 = vmatpush.msra.mxu0 %v1372
        %1389 = vmatpush.msra.mxu0 %v1371
        %1390 = vmatpush.msra.mxu0 %v1370
        %1391 = vmatpush.msra.mxu0 %v1369
        %1392 = vmatmul.f32.gmra.mxu0 %v1374
        %v1393 = vpop.f32.mrf.mxu0
        %v1394 = vadd.f32 0.0, %v1393
        %1395 = vdwg.mxu0
        %v1396 = vld [vmem:[%s11] sm:$0xff]
        %v1397 = vld [vmem:[%s11 + $0x8] sm:$0xff]
        %v1398 = vld [vmem:[%s11 + $0x10] sm:$0xff]
        %v1399 = vld [vmem:[%s11 + $0x18] sm:$0xff]
        %v1401 = vsel %vm605, %v1144, 0
        %1403 = vmatpush.msra.mxu0 0.0
        %1404 = vmatpush.msra.mxu0 0.0
        %1405 = vmatpush.msra.mxu0 0.0
        %1406 = vmatpush.msra.mxu0 0.0
        %1407 = vmatpush.msra.mxu0 0.0
        %1408 = vmatpush.msra.mxu0 0.0
        %1409 = vmatpush.msra.mxu0 0.0
        %1410 = vmatpush.msra.mxu0 0.0
        %1411 = vmatpush.msra.mxu0 0.0
        %1412 = vmatpush.msra.mxu0 0.0
        %1413 = vmatpush.msra.mxu0 0.0
        %1414 = vmatpush.msra.mxu0 0.0
        %1415 = vmatpush.msra.mxu0 %v1399
        %1416 = vmatpush.msra.mxu0 %v1398
        %1417 = vmatpush.msra.mxu0 %v1397
        %1418 = vmatpush.msra.mxu0 %v1396
        %1419 = vmatmul.f32.gmra.mxu0 %v1401
        %v1420 = vpop.f32.mrf.mxu0
        %v1421 = vadd.f32 0.0, %v1420
        %1422 = vdwg.mxu0
        %v1423 = vmul.f32 %v1394, 0.25
        %v1425 = vsel %vm633, %v1423, 0
        %v1428 = vsel %vm633, %v1421, 0
        %1430 = vmatpush.xpose.msra.mxu0 0.0
        %1431 = vmatpush.xpose.msra.mxu0 0.0
        %1432 = vmatpush.xpose.msra.mxu0 0.0
        %1433 = vmatpush.xpose.msra.mxu0 0.0
        %1434 = vmatpush.xpose.msra.mxu0 0.0
        %1435 = vmatpush.xpose.msra.mxu0 0.0
        %1436 = vmatpush.xpose.msra.mxu0 0.0
        %1437 = vmatpush.xpose.msra.mxu0 0.0
        %1438 = vmatpush.xpose.msra.mxu0 0.0
        %1439 = vmatpush.xpose.msra.mxu0 0.0
        %1440 = vmatpush.xpose.msra.mxu0 0.0
        %1441 = vmatpush.xpose.msra.mxu0 0.0
        %1442 = vmatpush.xpose.msra.mxu0 0.0
        %1443 = vmatpush.xpose.msra.mxu0 0.0
        %1444 = vmatpush.xpose.msra.mxu0 0.0
        %1445 = vmatpush.xpose.msra.mxu0 %v1428
        %1446 = vmatmul.f32.gmra.mxu0 %v1425
        %v1447 = vpop.f32.mrf.mxu0
        %v1448 = vadd.f32 0.0, %v1447
        %1449 = vdwg.mxu0
        %v1450 = vsel %vm659, %v1448, -inf
        %1451 = vmax.xlane.f32.xlu0 %v1450
        %v1452 = vpop.xlane.xlu0 %1451
        %v1453 = vsub.f32 %v1448, %v1452
        %v1454 = vmul.f32 %v1453, 1.442695
        %v1455 = vpow.pop %v1454
        %v1456 = vsel %vm659, %v1455, 0.0
        %1457 = vadd.xlane.f32.xlu0 %v1456
        %v1458 = vpop.xlane.xlu0 %1457
        %v1459 = vrcp.pop %v1458
        %v1460 = vmul.f32 %v1455, %v1459
        %1461 = vrot.lane.b32.xlu0 %v1421, 96
        %v1462 = vpop.permute.xlu0 %1461
        %v1465 = vsel %vm659, %v1460, 0
        %1467 = vmatpush.msra.mxu0 0.0
        %1468 = vmatpush.msra.mxu0 0.0
        %1469 = vmatpush.msra.mxu0 0.0
        %1470 = vmatpush.msra.mxu0 0.0
        %1471 = vmatpush.msra.mxu0 0.0
        %1472 = vmatpush.msra.mxu0 0.0
        %1473 = vmatpush.msra.mxu0 0.0
        %1474 = vmatpush.msra.mxu0 0.0
        %1475 = vmatpush.msra.mxu0 0.0
        %1476 = vmatpush.msra.mxu0 0.0
        %1477 = vmatpush.msra.mxu0 0.0
        %1478 = vmatpush.msra.mxu0 0.0
        %1479 = vmatpush.msra.mxu0 0.0
        %1480 = vmatpush.msra.mxu0 0.0
        %1481 = vmatpush.msra.mxu0 0.0
        %1482 = vmatpush.msra.mxu0 %v1462
        %1483 = vmatmul.f32.gmra.mxu0 %v1465
        %v1484 = vpop.f32.mrf.mxu0
        %v1485 = vadd.f32 0.0, %v1484
        %1486 = vdwg.mxu0
        %1487 = vrot.lane.b32.xlu0 %v1423, 112
        %v1488 = vpop.permute.xlu0 %1487
        %1489 = vrot.lane.b32.xlu0 %v1421, 112
        %v1490 = vpop.permute.xlu0 %1489
        %v1491 = vsel %vm633, %v1488, 0
        %v1493 = vsel %vm633, %v1490, 0
        %1495 = vmatpush.xpose.msra.mxu0 0.0
        %1496 = vmatpush.xpose.msra.mxu0 0.0
        %1497 = vmatpush.xpose.msra.mxu0 0.0
        %1498 = vmatpush.xpose.msra.mxu0 0.0
        %1499 = vmatpush.xpose.msra.mxu0 0.0
        %1500 = vmatpush.xpose.msra.mxu0 0.0
        %1501 = vmatpush.xpose.msra.mxu0 0.0
        %1502 = vmatpush.xpose.msra.mxu0 0.0
        %1503 = vmatpush.xpose.msra.mxu0 0.0
        %1504 = vmatpush.xpose.msra.mxu0 0.0
        %1505 = vmatpush.xpose.msra.mxu0 0.0
        %1506 = vmatpush.xpose.msra.mxu0 0.0
        %1507 = vmatpush.xpose.msra.mxu0 0.0
        %1508 = vmatpush.xpose.msra.mxu0 0.0
        %1509 = vmatpush.xpose.msra.mxu0 0.0
        %1510 = vmatpush.xpose.msra.mxu0 %v1493
        %1511 = vmatmul.f32.gmra.mxu0 %v1491
        %v1512 = vpop.f32.mrf.mxu0
        %v1513 = vadd.f32 0.0, %v1512
        %1514 = vdwg.mxu0
        %v1515 = vsel %vm659, %v1513, -inf
        %1516 = vmax.xlane.f32.xlu0 %v1515
        %v1517 = vpop.xlane.xlu0 %1516
        %v1518 = vsub.f32 %v1513, %v1517
        %v1519 = vmul.f32 %v1518, 1.442695
        %v1520 = vpow.pop %v1519
        %v1521 = vsel %vm659, %v1520, 0.0
        %1522 = vadd.xlane.f32.xlu0 %v1521
        %v1523 = vpop.xlane.xlu0 %1522
        %v1524 = vrcp.pop %v1523
        %v1525 = vmul.f32 %v1520, %v1524
        %1526 = vrot.lane.b32.xlu0 %v1421, 80
        %v1527 = vpop.permute.xlu0 %1526
        %v1530 = vsel %vm659, %v1525, 0
        %1532 = vmatpush.msra.mxu0 0.0
        %1533 = vmatpush.msra.mxu0 0.0
        %1534 = vmatpush.msra.mxu0 0.0
        %1535 = vmatpush.msra.mxu0 0.0
        %1536 = vmatpush.msra.mxu0 0.0
        %1537 = vmatpush.msra.mxu0 0.0
        %1538 = vmatpush.msra.mxu0 0.0
        %1539 = vmatpush.msra.mxu0 0.0
        %1540 = vmatpush.msra.mxu0 0.0
        %1541 = vmatpush.msra.mxu0 0.0
        %1542 = vmatpush.msra.mxu0 0.0
        %1543 = vmatpush.msra.mxu0 0.0
        %1544 = vmatpush.msra.mxu0 0.0
        %1545 = vmatpush.msra.mxu0 0.0
        %1546 = vmatpush.msra.mxu0 0.0
        %1547 = vmatpush.msra.mxu0 %v1527
        %1548 = vmatmul.f32.gmra.mxu0 %v1530
        %v1549 = vpop.f32.mrf.mxu0
        %v1550 = vadd.f32 0.0, %v1549
        %1551 = vdwg.mxu0
        %1553 = vrot.lane.b32.xlu0 %v1550, 16
        %v1554 = vpop.permute.xlu0 %1553
        %v1556 = vsel %vm633, %v1485, %v1554
        %v1557 = vld [vmem:[%s12] sm:$0xff]
        %v1558 = vld [vmem:[%s12 + $0x8] sm:$0xff]
        %v1559 = vld [vmem:[%s12 + $0x10] sm:$0xff]
        %v1560 = vld [vmem:[%s12 + $0x18] sm:$0xff]
        %v1562 = vsel %vm605, %v1556, 0
        %1564 = vmatpush.msra.mxu0 0.0
        %1565 = vmatpush.msra.mxu0 0.0
        %1566 = vmatpush.msra.mxu0 0.0
        %1567 = vmatpush.msra.mxu0 0.0
        %1568 = vmatpush.msra.mxu0 0.0
        %1569 = vmatpush.msra.mxu0 0.0
        %1570 = vmatpush.msra.mxu0 0.0
        %1571 = vmatpush.msra.mxu0 0.0
        %1572 = vmatpush.msra.mxu0 0.0
        %1573 = vmatpush.msra.mxu0 0.0
        %1574 = vmatpush.msra.mxu0 0.0
        %1575 = vmatpush.msra.mxu0 0.0
        %1576 = vmatpush.msra.mxu0 %v1560
        %1577 = vmatpush.msra.mxu0 %v1559
        %1578 = vmatpush.msra.mxu0 %v1558
        %1579 = vmatpush.msra.mxu0 %v1557
        %1580 = vmatmul.f32.gmra.mxu0 %v1562
        %v1581 = vpop.f32.mrf.mxu0
        %v1582 = vadd.f32 %v1367, %v1581
        %1583 = vdwg.mxu0
        %v1584 = vld [vmem:[%s13] sm:$0xff]
        %v1585 = vld [vmem:[%s13 + $0x8] sm:$0xff]
        %v1586 = vld [vmem:[%s13 + $0x10] sm:$0xff]
        %v1587 = vld [vmem:[%s13 + $0x18] sm:$0xff]
        %v1589 = vsel %vm605, %v1582, 0
        %1591 = vmatpush.msra.mxu0 0.0
        %1592 = vmatpush.msra.mxu0 0.0
        %1593 = vmatpush.msra.mxu0 0.0
        %1594 = vmatpush.msra.mxu0 0.0
        %1595 = vmatpush.msra.mxu0 0.0
        %1596 = vmatpush.msra.mxu0 0.0
        %1597 = vmatpush.msra.mxu0 0.0
        %1598 = vmatpush.msra.mxu0 0.0
        %1599 = vmatpush.msra.mxu0 0.0
        %1600 = vmatpush.msra.mxu0 0.0
        %1601 = vmatpush.msra.mxu0 0.0
        %1602 = vmatpush.msra.mxu0 0.0
        %1603 = vmatpush.msra.mxu0 %v1587
        %1604 = vmatpush.msra.mxu0 %v1586
        %1605 = vmatpush.msra.mxu0 %v1585
        %1606 = vmatpush.msra.mxu0 %v1584
        %1607 = vmatmul.f32.gmra.mxu0 %v1589
        %v1608 = vpop.f32.mrf.mxu0
        %v1609 = vadd.f32 0.0, %v1608
        %1610 = vdwg.mxu0
        %v1611 = vmax.f32 %v1609, 0.0
        %v1612 = vld [vmem:[%s14] sm:$0xff]
        %v1613 = vld [vmem:[%s14 + $0x8] sm:$0xff]
        %v1614 = vld [vmem:[%s14 + $0x10] sm:$0xff]
        %v1615 = vld [vmem:[%s14 + $0x18] sm:$0xff]
        %v1616 = vld [vmem:[%s14 + $0x20] sm:$0xff]
        %v1617 = vld [vmem:[%s14 + $0x28] sm:$0xff]
        %v1618 = vld [vmem:[%s14 + $0x30] sm:$0xff]
        %v1619 = vld [vmem:[%s14 + $0x38] sm:$0xff]
        %v1620 = vld [vmem:[%s14 + $0x40] sm:$0xff]
        %v1621 = vld [vmem:[%s14 + $0x48] sm:$0xff]
        %v1622 = vld [vmem:[%s14 + $0x50] sm:$0xff]
        %v1623 = vld [vmem:[%s14 + $0x58] sm:$0xff]
        %v1624 = vld [vmem:[%s14 + $0x60] sm:$0xff]
        %v1625 = vld [vmem:[%s14 + $0x68] sm:$0xff]
        %v1626 = vld [vmem:[%s14 + $0x70] sm:$0xff]
        %v1627 = vld [vmem:[%s14 + $0x78] sm:$0xff]
        %1628 = vmatpush.msra.mxu0 %v1627
        %1629 = vmatpush.msra.mxu0 %v1626
        %1630 = vmatpush.msra.mxu0 %v1625
        %1631 = vmatpush.msra.mxu0 %v1624
        %1632 = vmatpush.msra.mxu0 %v1623
        %1633 = vmatpush.msra.mxu0 %v1622
        %1634 = vmatpush.msra.mxu0 %v1621
        %1635 = vmatpush.msra.mxu0 %v1620
        %1636 = vmatpush.msra.mxu0 %v1619
        %1637 = vmatpush.msra.mxu0 %v1618
        %1638 = vmatpush.msra.mxu0 %v1617
        %1639 = vmatpush.msra.mxu0 %v1616
        %1640 = vmatpush.msra.mxu0 %v1615
        %1641 = vmatpush.msra.mxu0 %v1614
        %1642 = vmatpush.msra.mxu0 %v1613
        %1643 = vmatpush.msra.mxu0 %v1612
        %1644 = vmatmul.f32.gmra.mxu0 %v1611
        %v1645 = vpop.f32.mrf.mxu0
        %v1646 = vadd.f32 %v1582, %v1645
        %1647 = vdwg.mxu0
        %s1648 = scalar_lea.vmem %s8, 32
        %v1649 = vld [vmem:[%s1648] sm:$0xff]
        %v1650 = vld [vmem:[%s1648 + $0x8] sm:$0xff]
        %v1651 = vld [vmem:[%s1648 + $0x10] sm:$0xff]
        %v1652 = vld [vmem:[%s1648 + $0x18] sm:$0xff]
        %v1654 = vsel %vm605, %v1646, 0
        %1656 = vmatpush.msra.mxu0 0.0
        %1657 = vmatpush.msra.mxu0 0.0
        %1658 = vmatpush.msra.mxu0 0.0
        %1659 = vmatpush.msra.mxu0 0.0
        %1660 = vmatpush.msra.mxu0 0.0
        %1661 = vmatpush.msra.mxu0 0.0
        %1662 = vmatpush.msra.mxu0 0.0
        %1663 = vmatpush.msra.mxu0 0.0
        %1664 = vmatpush.msra.mxu0 0.0
        %1665 = vmatpush.msra.mxu0 0.0
        %1666 = vmatpush.msra.mxu0 0.0
        %1667 = vmatpush.msra.mxu0 0.0
        %1668 = vmatpush.msra.mxu0 %v1652
        %1669 = vmatpush.msra.mxu0 %v1651
        %1670 = vmatpush.msra.mxu0 %v1650
        %1671 = vmatpush.msra.mxu0 %v1649
        %1672 = vmatmul.f32.gmra.mxu0 %v1654
        %v1673 = vpop.f32.mrf.mxu0
        %v1674 = vadd.f32 0.0, %v1673
        %1675 = vdwg.mxu0
        %v1676 = vmul.f32 %v1674, 0.25
        %1678 = vrot.lane.b32.xlu0 %v1674, 96
        %v1679 = vpop.permute.xlu0 %1678
        %v1681 = vsel %vm633, %v1676, 0
        %v1683 = vsel %vm633, %v1679, 0
        %1685 = vmatpush.xpose.msra.mxu0 0.0
        %1686 = vmatpush.xpose.msra.mxu0 0.0
        %1687 = vmatpush.xpose.msra.mxu0 0.0
        %1688 = vmatpush.xpose.msra.mxu0 0.0
        %1689 = vmatpush.xpose.msra.mxu0 0.0
        %1690 = vmatpush.xpose.msra.mxu0 0.0
        %1691 = vmatpush.xpose.msra.mxu0 0.0
        %1692 = vmatpush.xpose.msra.mxu0 0.0
        %1693 = vmatpush.xpose.msra.mxu0 0.0
        %1694 = vmatpush.xpose.msra.mxu0 0.0
        %1695 = vmatpush.xpose.msra.mxu0 0.0
        %1696 = vmatpush.xpose.msra.mxu0 0.0
        %1697 = vmatpush.xpose.msra.mxu0 0.0
        %1698 = vmatpush.xpose.msra.mxu0 0.0
        %1699 = vmatpush.xpose.msra.mxu0 0.0
        %1700 = vmatpush.xpose.msra.mxu0 %v1683
        %1701 = vmatmul.f32.gmra.mxu0 %v1681
        %v1702 = vpop.f32.mrf.mxu0
        %v1703 = vadd.f32 0.0, %v1702
        %1704 = vdwg.mxu0
        %v1705 = vsel %vm1232, -3.4028235e+38, %v1703
        %v1706 = vsel %vm659, %v1705, -inf
        %1707 = vmax.xlane.f32.xlu0 %v1706
        %v1708 = vpop.xlane.xlu0 %1707
        %v1709 = vsub.f32 %v1705, %v1708
        %v1710 = vmul.f32 %v1709, 1.442695
        %v1711 = vpow.pop %v1710
        %v1712 = vsel %vm659, %v1711, 0.0
        %1713 = vadd.xlane.f32.xlu0 %v1712
        %v1714 = vpop.xlane.xlu0 %1713
        %v1715 = vrcp.pop %v1714
        %v1716 = vmul.f32 %v1711, %v1715
        %1717 = vrot.lane.b32.xlu0 %v1674, 64
        %v1718 = vpop.permute.xlu0 %1717
        %v1721 = vsel %vm659, %v1716, 0
        %1723 = vmatpush.msra.mxu0 0.0
        %1724 = vmatpush.msra.mxu0 0.0
        %1725 = vmatpush.msra.mxu0 0.0
        %1726 = vmatpush.msra.mxu0 0.0
        %1727 = vmatpush.msra.mxu0 0.0
        %1728 = vmatpush.msra.mxu0 0.0
        %1729 = vmatpush.msra.mxu0 0.0
        %1730 = vmatpush.msra.mxu0 0.0
        %1731 = vmatpush.msra.mxu0 0.0
        %1732 = vmatpush.msra.mxu0 0.0
        %1733 = vmatpush.msra.mxu0 0.0
        %1734 = vmatpush.msra.mxu0 0.0
        %1735 = vmatpush.msra.mxu0 0.0
        %1736 = vmatpush.msra.mxu0 0.0
        %1737 = vmatpush.msra.mxu0 0.0
        %1738 = vmatpush.msra.mxu0 %v1718
        %1739 = vmatmul.f32.gmra.mxu0 %v1721
        %v1740 = vpop.f32.mrf.mxu0
        %v1741 = vadd.f32 0.0, %v1740
        %1742 = vdwg.mxu0
        %1743 = vrot.lane.b32.xlu0 %v1676, 112
        %v1744 = vpop.permute.xlu0 %1743
        %1745 = vrot.lane.b32.xlu0 %v1674, 80
        %v1746 = vpop.permute.xlu0 %1745
        %v1747 = vsel %vm633, %v1744, 0
        %v1749 = vsel %vm633, %v1746, 0
        %1751 = vmatpush.xpose.msra.mxu0 0.0
        %1752 = vmatpush.xpose.msra.mxu0 0.0
        %1753 = vmatpush.xpose.msra.mxu0 0.0
        %1754 = vmatpush.xpose.msra.mxu0 0.0
        %1755 = vmatpush.xpose.msra.mxu0 0.0
        %1756 = vmatpush.xpose.msra.mxu0 0.0
        %1757 = vmatpush.xpose.msra.mxu0 0.0
        %1758 = vmatpush.xpose.msra.mxu0 0.0
        %1759 = vmatpush.xpose.msra.mxu0 0.0
        %1760 = vmatpush.xpose.msra.mxu0 0.0
        %1761 = vmatpush.xpose.msra.mxu0 0.0
        %1762 = vmatpush.xpose.msra.mxu0 0.0
        %1763 = vmatpush.xpose.msra.mxu0 0.0
        %1764 = vmatpush.xpose.msra.mxu0 0.0
        %1765 = vmatpush.xpose.msra.mxu0 0.0
        %1766 = vmatpush.xpose.msra.mxu0 %v1749
        %1767 = vmatmul.f32.gmra.mxu0 %v1747
        %v1768 = vpop.f32.mrf.mxu0
        %v1769 = vadd.f32 0.0, %v1768
        %1770 = vdwg.mxu0
        %v1771 = vsel %vm1232, -3.4028235e+38, %v1769
        %v1772 = vsel %vm659, %v1771, -inf
        %1773 = vmax.xlane.f32.xlu0 %v1772
        %v1774 = vpop.xlane.xlu0 %1773
        %v1775 = vsub.f32 %v1771, %v1774
        %v1776 = vmul.f32 %v1775, 1.442695
        %v1777 = vpow.pop %v1776
        %v1778 = vsel %vm659, %v1777, 0.0
        %1779 = vadd.xlane.f32.xlu0 %v1778
        %v1780 = vpop.xlane.xlu0 %1779
        %v1781 = vrcp.pop %v1780
        %v1782 = vmul.f32 %v1777, %v1781
        %1783 = vrot.lane.b32.xlu0 %v1674, 48
        %v1784 = vpop.permute.xlu0 %1783
        %v1787 = vsel %vm659, %v1782, 0
        %1789 = vmatpush.msra.mxu0 0.0
        %1790 = vmatpush.msra.mxu0 0.0
        %1791 = vmatpush.msra.mxu0 0.0
        %1792 = vmatpush.msra.mxu0 0.0
        %1793 = vmatpush.msra.mxu0 0.0
        %1794 = vmatpush.msra.mxu0 0.0
        %1795 = vmatpush.msra.mxu0 0.0
        %1796 = vmatpush.msra.mxu0 0.0
        %1797 = vmatpush.msra.mxu0 0.0
        %1798 = vmatpush.msra.mxu0 0.0
        %1799 = vmatpush.msra.mxu0 0.0
        %1800 = vmatpush.msra.mxu0 0.0
        %1801 = vmatpush.msra.mxu0 0.0
        %1802 = vmatpush.msra.mxu0 0.0
        %1803 = vmatpush.msra.mxu0 0.0
        %1804 = vmatpush.msra.mxu0 %v1784
        %1805 = vmatmul.f32.gmra.mxu0 %v1787
        %v1806 = vpop.f32.mrf.mxu0
        %v1807 = vadd.f32 0.0, %v1806
        %1808 = vdwg.mxu0
        %1810 = vrot.lane.b32.xlu0 %v1807, 16
        %v1811 = vpop.permute.xlu0 %1810
        %v1813 = vsel %vm633, %v1741, %v1811
        %s1814 = scalar_lea.vmem %s9, 32
        %v1815 = vld [vmem:[%s1814] sm:$0xff]
        %v1816 = vld [vmem:[%s1814 + $0x8] sm:$0xff]
        %v1817 = vld [vmem:[%s1814 + $0x10] sm:$0xff]
        %v1818 = vld [vmem:[%s1814 + $0x18] sm:$0xff]
        %v1820 = vsel %vm605, %v1813, 0
        %1822 = vmatpush.msra.mxu0 0.0
        %1823 = vmatpush.msra.mxu0 0.0
        %1824 = vmatpush.msra.mxu0 0.0
        %1825 = vmatpush.msra.mxu0 0.0
        %1826 = vmatpush.msra.mxu0 0.0
        %1827 = vmatpush.msra.mxu0 0.0
        %1828 = vmatpush.msra.mxu0 0.0
        %1829 = vmatpush.msra.mxu0 0.0
        %1830 = vmatpush.msra.mxu0 0.0
        %1831 = vmatpush.msra.mxu0 0.0
        %1832 = vmatpush.msra.mxu0 0.0
        %1833 = vmatpush.msra.mxu0 0.0
        %1834 = vmatpush.msra.mxu0 %v1818
        %1835 = vmatpush.msra.mxu0 %v1817
        %1836 = vmatpush.msra.mxu0 %v1816
        %1837 = vmatpush.msra.mxu0 %v1815
        %1838 = vmatmul.f32.gmra.mxu0 %v1820
        %v1839 = vpop.f32.mrf.mxu0
        %v1840 = vadd.f32 %v1646, %v1839
        %1841 = vdwg.mxu0
        %s1842 = scalar_lea.vmem %s10, 32
        %v1843 = vld [vmem:[%s1842] sm:$0xff]
        %v1844 = vld [vmem:[%s1842 + $0x8] sm:$0xff]
        %v1845 = vld [vmem:[%s1842 + $0x10] sm:$0xff]
        %v1846 = vld [vmem:[%s1842 + $0x18] sm:$0xff]
        %v1848 = vsel %vm605, %v1840, 0
        %1850 = vmatpush.msra.mxu0 0.0
        %1851 = vmatpush.msra.mxu0 0.0
        %1852 = vmatpush.msra.mxu0 0.0
        %1853 = vmatpush.msra.mxu0 0.0
        %1854 = vmatpush.msra.mxu0 0.0
        %1855 = vmatpush.msra.mxu0 0.0
        %1856 = vmatpush.msra.mxu0 0.0
        %1857 = vmatpush.msra.mxu0 0.0
        %1858 = vmatpush.msra.mxu0 0.0
        %1859 = vmatpush.msra.mxu0 0.0
        %1860 = vmatpush.msra.mxu0 0.0
        %1861 = vmatpush.msra.mxu0 0.0
        %1862 = vmatpush.msra.mxu0 %v1846
        %1863 = vmatpush.msra.mxu0 %v1845
        %1864 = vmatpush.msra.mxu0 %v1844
        %1865 = vmatpush.msra.mxu0 %v1843
        %1866 = vmatmul.f32.gmra.mxu0 %v1848
        %v1867 = vpop.f32.mrf.mxu0
        %v1868 = vadd.f32 0.0, %v1867
        %1869 = vdwg.mxu0
        %s1870 = scalar_lea.vmem %s11, 32
        %v1871 = vld [vmem:[%s1870] sm:$0xff]
        %v1872 = vld [vmem:[%s1870 + $0x8] sm:$0xff]
        %v1873 = vld [vmem:[%s1870 + $0x10] sm:$0xff]
        %v1874 = vld [vmem:[%s1870 + $0x18] sm:$0xff]
        %1875 = vmatpush.msra.mxu0 0.0
        %1876 = vmatpush.msra.mxu0 0.0
        %1877 = vmatpush.msra.mxu0 0.0
        %1878 = vmatpush.msra.mxu0 0.0
        %1879 = vmatpush.msra.mxu0 0.0
        %1880 = vmatpush.msra.mxu0 0.0
        %1881 = vmatpush.msra.mxu0 0.0
        %1882 = vmatpush.msra.mxu0 0.0
        %1883 = vmatpush.msra.mxu0 0.0
        %1884 = vmatpush.msra.mxu0 0.0
        %1885 = vmatpush.msra.mxu0 0.0
        %1886 = vmatpush.msra.mxu0 0.0
        %1887 = vmatpush.msra.mxu0 %v1874
        %1888 = vmatpush.msra.mxu0 %v1873
        %1889 = vmatpush.msra.mxu0 %v1872
        %1890 = vmatpush.msra.mxu0 %v1871
        %1891 = vmatmul.f32.gmra.mxu0 %v1401
        %v1892 = vpop.f32.mrf.mxu0
        %v1893 = vadd.f32 0.0, %v1892
        %1894 = vdwg.mxu0
        %v1895 = vmul.f32 %v1868, 0.25
        %v1897 = vsel %vm633, %v1895, 0
        %v1900 = vsel %vm633, %v1893, 0
        %1902 = vmatpush.xpose.msra.mxu0 0.0
        %1903 = vmatpush.xpose.msra.mxu0 0.0
        %1904 = vmatpush.xpose.msra.mxu0 0.0
        %1905 = vmatpush.xpose.msra.mxu0 0.0
        %1906 = vmatpush.xpose.msra.mxu0 0.0
        %1907 = vmatpush.xpose.msra.mxu0 0.0
        %1908 = vmatpush.xpose.msra.mxu0 0.0
        %1909 = vmatpush.xpose.msra.mxu0 0.0
        %1910 = vmatpush.xpose.msra.mxu0 0.0
        %1911 = vmatpush.xpose.msra.mxu0 0.0
        %1912 = vmatpush.xpose.msra.mxu0 0.0
        %1913 = vmatpush.xpose.msra.mxu0 0.0
        %1914 = vmatpush.xpose.msra.mxu0 0.0
        %1915 = vmatpush.xpose.msra.mxu0 0.0
        %1916 = vmatpush.xpose.msra.mxu0 0.0
        %1917 = vmatpush.xpose.msra.mxu0 %v1900
        %1918 = vmatmul.f32.gmra.mxu0 %v1897
        %v1919 = vpop.f32.mrf.mxu0
        %v1920 = vadd.f32 0.0, %v1919
        %1921 = vdwg.mxu0
        %v1922 = vsel %vm659, %v1920, -inf
        %1923 = vmax.xlane.f32.xlu0 %v1922
        %v1924 = vpop.xlane.xlu0 %1923
        %v1925 = vsub.f32 %v1920, %v1924
        %v1926 = vmul.f32 %v1925, 1.442695
        %v1927 = vpow.pop %v1926
        %v1928 = vsel %vm659, %v1927, 0.0
        %1929 = vadd.xlane.f32.xlu0 %v1928
        %v1930 = vpop.xlane.xlu0 %1929
        %v1931 = vrcp.pop %v1930
        %v1932 = vmul.f32 %v1927, %v1931
        %1933 = vrot.lane.b32.xlu0 %v1893, 96
        %v1934 = vpop.permute.xlu0 %1933
        %v1937 = vsel %vm659, %v1932, 0
        %1939 = vmatpush.msra.mxu0 0.0
        %1940 = vmatpush.msra.mxu0 0.0
        %1941 = vmatpush.msra.mxu0 0.0
        %1942 = vmatpush.msra.mxu0 0.0
        %1943 = vmatpush.msra.mxu0 0.0
        %1944 = vmatpush.msra.mxu0 0.0
        %1945 = vmatpush.msra.mxu0 0.0
        %1946 = vmatpush.msra.mxu0 0.0
        %1947 = vmatpush.msra.mxu0 0.0
        %1948 = vmatpush.msra.mxu0 0.0
        %1949 = vmatpush.msra.mxu0 0.0
        %1950 = vmatpush.msra.mxu0 0.0
        %1951 = vmatpush.msra.mxu0 0.0
        %1952 = vmatpush.msra.mxu0 0.0
        %1953 = vmatpush.msra.mxu0 0.0
        %1954 = vmatpush.msra.mxu0 %v1934
        %1955 = vmatmul.f32.gmra.mxu0 %v1937
        %v1956 = vpop.f32.mrf.mxu0
        %v1957 = vadd.f32 0.0, %v1956
        %1958 = vdwg.mxu0
        %1959 = vrot.lane.b32.xlu0 %v1895, 112
        %v1960 = vpop.permute.xlu0 %1959
        %1961 = vrot.lane.b32.xlu0 %v1893, 112
        %v1962 = vpop.permute.xlu0 %1961
        %v1963 = vsel %vm633, %v1960, 0
        %v1965 = vsel %vm633, %v1962, 0
        %1967 = vmatpush.xpose.msra.mxu0 0.0
        %1968 = vmatpush.xpose.msra.mxu0 0.0
        %1969 = vmatpush.xpose.msra.mxu0 0.0
        %1970 = vmatpush.xpose.msra.mxu0 0.0
        %1971 = vmatpush.xpose.msra.mxu0 0.0
        %1972 = vmatpush.xpose.msra.mxu0 0.0
        %1973 = vmatpush.xpose.msra.mxu0 0.0
        %1974 = vmatpush.xpose.msra.mxu0 0.0
        %1975 = vmatpush.xpose.msra.mxu0 0.0
        %1976 = vmatpush.xpose.msra.mxu0 0.0
        %1977 = vmatpush.xpose.msra.mxu0 0.0
        %1978 = vmatpush.xpose.msra.mxu0 0.0
        %1979 = vmatpush.xpose.msra.mxu0 0.0
        %1980 = vmatpush.xpose.msra.mxu0 0.0
        %1981 = vmatpush.xpose.msra.mxu0 0.0
        %1982 = vmatpush.xpose.msra.mxu0 %v1965
        %1983 = vmatmul.f32.gmra.mxu0 %v1963
        %v1984 = vpop.f32.mrf.mxu0
        %v1985 = vadd.f32 0.0, %v1984
        %1986 = vdwg.mxu0
        %v1987 = vsel %vm659, %v1985, -inf
        %1988 = vmax.xlane.f32.xlu0 %v1987
        %v1989 = vpop.xlane.xlu0 %1988
        %v1990 = vsub.f32 %v1985, %v1989
        %v1991 = vmul.f32 %v1990, 1.442695
        %v1992 = vpow.pop %v1991
        %v1993 = vsel %vm659, %v1992, 0.0
        %1994 = vadd.xlane.f32.xlu0 %v1993
        %v1995 = vpop.xlane.xlu0 %1994
        %v1996 = vrcp.pop %v1995
        %v1997 = vmul.f32 %v1992, %v1996
        %1998 = vrot.lane.b32.xlu0 %v1893, 80
        %v1999 = vpop.permute.xlu0 %1998
        %v2002 = vsel %vm659, %v1997, 0
        %2004 = vmatpush.msra.mxu0 0.0
        %2005 = vmatpush.msra.mxu0 0.0
        %2006 = vmatpush.msra.mxu0 0.0
        %2007 = vmatpush.msra.mxu0 0.0
        %2008 = vmatpush.msra.mxu0 0.0
        %2009 = vmatpush.msra.mxu0 0.0
        %2010 = vmatpush.msra.mxu0 0.0
        %2011 = vmatpush.msra.mxu0 0.0
        %2012 = vmatpush.msra.mxu0 0.0
        %2013 = vmatpush.msra.mxu0 0.0
        %2014 = vmatpush.msra.mxu0 0.0
        %2015 = vmatpush.msra.mxu0 0.0
        %2016 = vmatpush.msra.mxu0 0.0
        %2017 = vmatpush.msra.mxu0 0.0
        %2018 = vmatpush.msra.mxu0 0.0
        %2019 = vmatpush.msra.mxu0 %v1999
        %2020 = vmatmul.f32.gmra.mxu0 %v2002
        %v2021 = vpop.f32.mrf.mxu0
        %v2022 = vadd.f32 0.0, %v2021
        %2023 = vdwg.mxu0
        %2025 = vrot.lane.b32.xlu0 %v2022, 16
        %v2026 = vpop.permute.xlu0 %2025
        %v2028 = vsel %vm633, %v1957, %v2026
        %s2029 = scalar_lea.vmem %s12, 32
        %v2030 = vld [vmem:[%s2029] sm:$0xff]
        %v2031 = vld [vmem:[%s2029 + $0x8] sm:$0xff]
        %v2032 = vld [vmem:[%s2029 + $0x10] sm:$0xff]
        %v2033 = vld [vmem:[%s2029 + $0x18] sm:$0xff]
        %v2035 = vsel %vm605, %v2028, 0
        %2037 = vmatpush.msra.mxu0 0.0
        %2038 = vmatpush.msra.mxu0 0.0
        %2039 = vmatpush.msra.mxu0 0.0
        %2040 = vmatpush.msra.mxu0 0.0
        %2041 = vmatpush.msra.mxu0 0.0
        %2042 = vmatpush.msra.mxu0 0.0
        %2043 = vmatpush.msra.mxu0 0.0
        %2044 = vmatpush.msra.mxu0 0.0
        %2045 = vmatpush.msra.mxu0 0.0
        %2046 = vmatpush.msra.mxu0 0.0
        %2047 = vmatpush.msra.mxu0 0.0
        %2048 = vmatpush.msra.mxu0 0.0
        %2049 = vmatpush.msra.mxu0 %v2033
        %2050 = vmatpush.msra.mxu0 %v2032
        %2051 = vmatpush.msra.mxu0 %v2031
        %2052 = vmatpush.msra.mxu0 %v2030
        %2053 = vmatmul.f32.gmra.mxu0 %v2035
        %v2054 = vpop.f32.mrf.mxu0
        %v2055 = vadd.f32 %v1840, %v2054
        %2056 = vdwg.mxu0
        %s2057 = scalar_lea.vmem %s13, 32
        %v2058 = vld [vmem:[%s2057] sm:$0xff]
        %v2059 = vld [vmem:[%s2057 + $0x8] sm:$0xff]
        %v2060 = vld [vmem:[%s2057 + $0x10] sm:$0xff]
        %v2061 = vld [vmem:[%s2057 + $0x18] sm:$0xff]
        %v2063 = vsel %vm605, %v2055, 0
        %2065 = vmatpush.msra.mxu0 0.0
        %2066 = vmatpush.msra.mxu0 0.0
        %2067 = vmatpush.msra.mxu0 0.0
        %2068 = vmatpush.msra.mxu0 0.0
        %2069 = vmatpush.msra.mxu0 0.0
        %2070 = vmatpush.msra.mxu0 0.0
        %2071 = vmatpush.msra.mxu0 0.0
        %2072 = vmatpush.msra.mxu0 0.0
        %2073 = vmatpush.msra.mxu0 0.0
        %2074 = vmatpush.msra.mxu0 0.0
        %2075 = vmatpush.msra.mxu0 0.0
        %2076 = vmatpush.msra.mxu0 0.0
        %2077 = vmatpush.msra.mxu0 %v2061
        %2078 = vmatpush.msra.mxu0 %v2060
        %2079 = vmatpush.msra.mxu0 %v2059
        %2080 = vmatpush.msra.mxu0 %v2058
        %2081 = vmatmul.f32.gmra.mxu0 %v2063
        %v2082 = vpop.f32.mrf.mxu0
        %v2083 = vadd.f32 0.0, %v2082
        %2084 = vdwg.mxu0
        %v2085 = vmax.f32 %v2083, 0.0
        %s2086 = scalar_lea.vmem %s14, 128
        %v2087 = vld [vmem:[%s2086] sm:$0xff]
        %v2088 = vld [vmem:[%s2086 + $0x8] sm:$0xff]
        %v2089 = vld [vmem:[%s2086 + $0x10] sm:$0xff]
        %v2090 = vld [vmem:[%s2086 + $0x18] sm:$0xff]
        %v2091 = vld [vmem:[%s2086 + $0x20] sm:$0xff]
        %v2092 = vld [vmem:[%s2086 + $0x28] sm:$0xff]
        %v2093 = vld [vmem:[%s2086 + $0x30] sm:$0xff]
        %v2094 = vld [vmem:[%s2086 + $0x38] sm:$0xff]
        %v2095 = vld [vmem:[%s2086 + $0x40] sm:$0xff]
        %v2096 = vld [vmem:[%s2086 + $0x48] sm:$0xff]
        %v2097 = vld [vmem:[%s2086 + $0x50] sm:$0xff]
        %v2098 = vld [vmem:[%s2086 + $0x58] sm:$0xff]
        %v2099 = vld [vmem:[%s2086 + $0x60] sm:$0xff]
        %v2100 = vld [vmem:[%s2086 + $0x68] sm:$0xff]
        %v2101 = vld [vmem:[%s2086 + $0x70] sm:$0xff]
        %v2102 = vld [vmem:[%s2086 + $0x78] sm:$0xff]
        %2103 = vmatpush.msra.mxu0 %v2102
        %2104 = vmatpush.msra.mxu0 %v2101
        %2105 = vmatpush.msra.mxu0 %v2100
        %2106 = vmatpush.msra.mxu0 %v2099
        %2107 = vmatpush.msra.mxu0 %v2098
        %2108 = vmatpush.msra.mxu0 %v2097
        %2109 = vmatpush.msra.mxu0 %v2096
        %2110 = vmatpush.msra.mxu0 %v2095
        %2111 = vmatpush.msra.mxu0 %v2094
        %2112 = vmatpush.msra.mxu0 %v2093
        %2113 = vmatpush.msra.mxu0 %v2092
        %2114 = vmatpush.msra.mxu0 %v2091
        %2115 = vmatpush.msra.mxu0 %v2090
        %2116 = vmatpush.msra.mxu0 %v2089
        %2117 = vmatpush.msra.mxu0 %v2088
        %2118 = vmatpush.msra.mxu0 %v2087
        %2119 = vmatmul.f32.gmra.mxu0 %v2085
        %v2120 = vpop.f32.mrf.mxu0
        %v2121 = vadd.f32 %v2055, %v2120
        %2122 = vdwg.mxu0
        %v2123 = vld [vmem:[%s15] sm:$0x1]
        %v2124 = vmul.f32 %v2121, %v2121
        %v2125 = vsel %vm605, %v2124, 0.0
        %2126 = vadd.xlane.f32.xlu0 %v2125
        %v2127 = vpop.xlane.xlu0 %2126
        %v2128 = vmul.f32 %v2127, %v1127
        %v2129 = vadd.f32 %v2128, 1e-06
        %v2130 = vrsqrt.pop %v2129
        %v2131 = vmul.f32 %v2130, %v2129
        %v2132 = vmul.f32 %v2131, %v2130
        %v2133 = vmul.f32 0.5, %v2132
        %v2134 = vsub.f32 1.5, %v2133
        %v2135 = vmul.f32 %v2130, %v2134
        %vm2136 = vweird.f32 %v2129
        %vm2137 = vweird.f32 %v2130
        %vm2138 = vmor %vm2136, %vm2137
        %v2139 = vsel %vm2138, %v2130, %v2135
        %v2140 = vmul.f32 %v2121, %v2139
        %v2142 = vperm.slane %v2123, 0
        %v2144 = vmul.f32 %v2142, %v2140
        %v2145 = vld [vmem:[%s16] sm:$0xff]
        %v2146 = vld [vmem:[%s16 + $0x8] sm:$0xff]
        %v2147 = vld [vmem:[%s16 + $0x10] sm:$0xff]
        %v2148 = vld [vmem:[%s16 + $0x18] sm:$0xff]
        %v2150 = vsel %vm605, %v2144, 0
        %2152 = vmatpush.msra.mxu0 0.0
        %2153 = vmatpush.msra.mxu0 0.0
        %2154 = vmatpush.msra.mxu0 0.0
        %2155 = vmatpush.msra.mxu0 0.0
        %2156 = vmatpush.msra.mxu0 0.0
        %2157 = vmatpush.msra.mxu0 0.0
        %2158 = vmatpush.msra.mxu0 0.0
        %2159 = vmatpush.msra.mxu0 0.0
        %2160 = vmatpush.msra.mxu0 0.0
        %2161 = vmatpush.msra.mxu0 0.0
        %2162 = vmatpush.msra.mxu0 0.0
        %2163 = vmatpush.msra.mxu0 0.0
        %2164 = vmatpush.msra.mxu0 %v2148
        %2165 = vmatpush.msra.mxu0 %v2147
        %2166 = vmatpush.msra.mxu0 %v2146
        %2167 = vmatpush.msra.mxu0 %v2145
        %2168 = vmatmul.f32.gmra.mxu0 %v2150
        %v2169 = vpop.f32.mrf.mxu0
        %v2170 = vadd.f32 0.0, %v2169
        %2171 = vdwg.mxu0
        %2172 = vst.msk [vmem:[%s552] sm:$0xff] %vm577, %v2170
        %s2173 = sand.u32 %s406, 1
        %s2174 = scalar_lea.sflag [#allocation3], %s2173
        %s2175 = sand.u32 %s406, 1
        %s2176 = smul.addr %s2175, 8
        %s2177 = scalar_lea.vmem [#allocation2], %s2176
        // Predicated region
        $region89: #{t5_forward.1} parent=87 // pred_check
          %p2178 = pneg %p416
        $region90: #{t5_forward.1} parent=87 // pred_check_branch
          %2180 = sbr.rel (%p2178) target = $region92
        $region91: #{t5_forward.1} parent=87 // pred_region
          %2182 = vsyncadd %s2174, 0
          %s2183 = smul.addr %s31, 8
          %s2184 = scalar_lea.hbm %s17, %s2183
          %s2186 = sshll.u32 %s2177, 4
          %s2187 = int_to_ptr.vmem [resolvable:$true] %s2186
          %s2188 = sshll.u32 %s2184, 4
          %s2189 = int_to_ptr.hbm [resolvable:$true] %s2188
          %2191 = dma.vmem_to_hbm [thread:$0]  %s2187, 128, %s2189, %s2174
        $region92: #{t5_forward.1} parent=87 // pred_fallthru
          _
      $region88: #{t5_forward.1} parent=5 // pred_fallthru
        _
      %p2192 = scmp.le.s32.totalorder 2, %s26
      // Predicated region
      $region93: #{t5_forward.1} parent=5 // pred_check
        %p2193 = pneg %p2192
      $region94: #{t5_forward.1} parent=5 // pred_check_branch
        %2195 = sbr.rel (%p2193) target = $region96
      $region95: #{t5_forward.1} parent=5 // pred_region
        %s2196 = ssub.s32 %s26, 2
        // Predicated region
        $region97: #{t5_forward.1} parent=95 // pred_check
          %p2197 = pneg %p422
        $region98: #{t5_forward.1} parent=95 // pred_check_branch
          %2199 = sbr.rel (%p2197) target = $region100
        $region99: #{t5_forward.1} parent=95 // pred_region
          %s2200 = sand.u32 %s407, 1
          %s2201 = scalar_lea.sflag [#allocation3], %s2200
          %s2202 = sand.u32 %s407, 1
          %s2203 = smul.addr %s2202, 8
          %s2204 = scalar_lea.vmem [#allocation2], %s2203
          %2206 = dma.done %s2201, 128
        $region100: #{t5_forward.1} parent=95 // pred_fallthru
          _
      $region96: #{t5_forward.1} parent=5 // pred_fallthru
        _
    $region6: #{t5_forward.1} parent=1 // loop_footer
      %s30 = sadd.s32 1, %s26
    $region7: #{t5_forward.1} parent=1 // loop_footer_branch
      %25 = sbr.rel target = $region3
    $region8: #{t5_forward.1} parent=1 // loop_exit
      _
    %2207 = vsyncpa [#allocation3], 1
    %s2208 = scalar_lea.sflag [#allocation3], 1
    %2209 = vsyncpa %s2208, 1

</llo_original>
